<compile_context>
chip_gen: v7x
topology: tpu7x:2x2x1
jax: 0.10.0
libtpu: 0.0.40
codegen_flags: <defaults>
</compile_context>

<pallas_src>
import math

import jax
import jax.numpy as jnp
from jax.experimental import pallas as pl
from jax.experimental.pallas import tpu as pltpu

# ---- model hyper-params (small, consistent with the module) -----------------
NUM_TOPICS = 16
HIDDEN = 32
NUM_LAYERS = 2
NUM_HEADS = 4
HEAD_DIM = HIDDEN // NUM_HEADS
STUDENT_FEATS = 10
INPUT_SIZE = 2 * HIDDEN + NUM_TOPICS   # lstm input = [student_enc, mastery_enc, topic_t]

BATCH = 2
SEQ = 8

# ---- packed parameter slab layout (rows x 128 lanes, f32, zero padded) -------
SLAB_W = 128
R_W_IH0_ENC = 0      # [64, 128]  w_ih0[:2H]   (acts on [student_enc | mastery_enc])
R_W_IH0_X   = 64     # [16, 128]  w_ih0[2H:]   (acts on the topic vector)
R_W_HH0     = 80     # [32, 128]
R_W_IH1     = 112    # [32, 128]
R_W_HH1     = 144    # [32, 128]
R_W_SM      = 176    # [32, 64]   block-diag(student_encoder, mastery_encoder)
R_W_QKV     = 208    # [32, 96]   per-head [q|k|v] column blocks of 24
R_W_O       = 240    # [32, 32]
R_W_PG1     = 272    # [32, 64]
R_W_PG2     = 304    # [64, 16]
R_W_DT      = 368    # [32, 4]    [difficulty(3) | time(1)]
RB_B0, RB_B1, RB_SM, RB_QKV, RB_O, RB_PG1, RB_PG2, RB_DT = (
    400, 408, 416, 424, 432, 440, 448, 456)          # one (8-aligned) row per bias
SLAB_ROWS = 464

# ---- fused lane-dense output slab column layout ([B*S, 128]) ------------------
C_PROBS = 0
C_DIFF = NUM_TOPICS            # 16
C_TIME = NUM_TOPICS + 3        # 19
C_ATTN = NUM_TOPICS + 4        # 20
C_END = C_ATTN + SEQ           # 28
OUT_W = 128


def adaptive_path_kernel(sm_ref, ts_ref, slab_ref, main_ref, hidden_ref):
    B = sm_ref.shape[0]
    SB, T = ts_ref.shape
    S = SB // B
    H = HIDDEN
    f32, bf16 = jnp.float32, jnp.bfloat16

    def w(row, nrows, ncols=SLAB_W):          # bf16 weight tile from the slab
        return slab_ref[row:row + nrows, 0:ncols].astype(bf16)

    def bias(row, ncols=SLAB_W):              # f32 [1, ncols] bias row
        return slab_ref[row:row + 1, 0:ncols]

    # ---- fused encoders + time-invariant part of the layer-0 gates -----------
    # TODO(synk): with real PyTorch weights, Linear / in_proj weights must be
    # transposed (x @ W^T) and LSTM biases combined (b_ih + b_hh) when packing.
    enc = jnp.dot(sm_ref[...].astype(bf16), w(R_W_SM, 32, 2 * H),
                  preferred_element_type=f32) + bias(RB_SM, 2 * H)     # [B, 2H]
    fixed0 = jnp.dot(enc.astype(bf16), w(R_W_IH0_ENC, 2 * H),
                     preferred_element_type=f32) + bias(RB_B0)         # [B, 4H]

    # ---- layer-0 topic projection, hoisted out of the recurrence -------------
    x_proj = jnp.dot(ts_ref[...].astype(bf16), w(R_W_IH0_X, T),
                     preferred_element_type=f32)                       # [S*B, 4H] (s-major)
    xf = x_proj + jnp.concatenate([fixed0] * S, axis=0)                # [S*B, 4H]

    w_hh0 = w(R_W_HH0, H)
    w_hh1 = w(R_W_HH1, H)

    def lstm_cell(g, c):                      # PyTorch gate order i, f, g, o
        i = jax.nn.sigmoid(g[:, 0 * H:1 * H])
        f = jax.nn.sigmoid(g[:, 1 * H:2 * H])
        gg = jnp.tanh(g[:, 2 * H:3 * H])
        o = jax.nn.sigmoid(g[:, 3 * H:4 * H])
        c_new = f * c + i * gg
        return o * jnp.tanh(c_new), c_new

    # ---- layer 0 recurrence: one [B,H]@[H,4H] matmul per step -----------------
    h0 = jnp.zeros((B, H), f32)
    c0 = jnp.zeros((B, H), f32)
    h0_steps = []
    for t in range(S):                                    # static unroll, S small
        g0 = xf[t * B:(t + 1) * B, :] + jnp.dot(
            h0.astype(bf16), w_hh0, preferred_element_type=f32)
        h0, c0 = lstm_cell(g0, c0)
        h0_steps.append(h0)

    # ---- layer-1 input projection over all steps at once ----------------------
    h0_all = jnp.concatenate(h0_steps, axis=0)                         # [S*B, H]
    h0_proj = jnp.dot(h0_all.astype(bf16), w(R_W_IH1, H),
                      preferred_element_type=f32) + bias(RB_B1)        # [S*B, 4H]

    # ---- layer 1 recurrence ----------------------------------------------------
    h1 = jnp.zeros((B, H), f32)
    c1 = jnp.zeros((B, H), f32)
    h1_steps = []
    for t in range(S):
        g1 = h0_proj[t * B:(t + 1) * B, :] + jnp.dot(
            h1.astype(bf16), w_hh1, preferred_element_type=f32)
        h1, c1 = lstm_cell(g1, c1)
        h1_steps.append(h1)

    lstm3 = jnp.stack(h1_steps, axis=1)                                # [B, S, H]
    lstm_flat = lstm3.reshape(B * S, H)
    # TODO(synk): nn.Dropout layers are train-time stochastic; eval-mode identity here.

    # ---- multi-head self-attention, all heads batched on the leading axis -----
    qkv = jnp.dot(lstm_flat.astype(bf16), w(R_W_QKV, H, 3 * H),
                  preferred_element_type=f32) + bias(RB_QKV, 3 * H)    # [B*S, 96]
    qkv3 = qkv.reshape(B, S, 3 * H)
    hd3 = 3 * HEAD_DIM
    qkv_h = jnp.concatenate(
        [qkv3[:, :, h * hd3:(h + 1) * hd3] for h in range(NUM_HEADS)],
        axis=0)                                                        # [NH*B, S, 24]
    qh = qkv_h[:, :, 0:HEAD_DIM].astype(bf16)
    kh = qkv_h[:, :, HEAD_DIM:2 * HEAD_DIM].astype(bf16)
    vh = qkv_h[:, :, 2 * HEAD_DIM:3 * HEAD_DIM].astype(bf16)

    scale = 1.0 / math.sqrt(HEAD_DIM)
    sc = jnp.einsum('nqd,nkd->nqk', qh, kh, preferred_element_type=f32) * scale
    sc = sc - jnp.max(sc, axis=-1, keepdims=True)
    e = jnp.exp(sc)
    attn_w = e * pl.reciprocal(jnp.sum(e, axis=-1, keepdims=True), approx=True)
    ctx = jnp.einsum('nqk,nkd->nqd', attn_w.astype(bf16), vh,
                     preferred_element_type=f32)                       # [NH*B, S, HD]

    # head-averaged attention weights (nn.MultiheadAttention default)
    attn_avg = (attn_w[0:B] + attn_w[B:2 * B] + attn_w[2 * B:3 * B]
                + attn_w[3 * B:4 * B]) * (1.0 / NUM_HEADS)             # [B, S, S]

    ctx_b = jnp.concatenate([ctx[h * B:(h + 1) * B] for h in range(NUM_HEADS)],
                            axis=-1)                                   # [B, S, H]
    attended = jnp.dot(ctx_b.reshape(B * S, H).astype(bf16), w(R_W_O, H, H),
                       preferred_element_type=f32) + bias(RB_O, H)     # [B*S, H]

    # ---- path generator: Linear -> ReLU -> Linear -> Softmax -------------------
    hid = jnp.dot(attended.astype(bf16), w(R_W_PG1, H, 2 * H),
                  preferred_element_type=f32) + bias(RB_PG1, 2 * H)
    hid = jnp.maximum(hid, 0.0)
    logits = jnp.dot(hid.astype(bf16), w(R_W_PG2, 2 * H, T),
                     preferred_element_type=f32) + bias(RB_PG2, T)
    logits = logits - jnp.max(logits, axis=-1, keepdims=True)
    pe = jnp.exp(logits)
    probs = pe * pl.reciprocal(jnp.sum(pe, axis=-1, keepdims=True), approx=True)

    # ---- fused difficulty / time heads -----------------------------------------
    dt = jnp.dot(attended.astype(bf16), w(R_W_DT, H, 4),
                 preferred_element_type=f32) + bias(RB_DT, 4)          # [B*S, 4]

    # ---- single lane-dense output slab + hidden state --------------------------
    pad = jnp.zeros((B * S, OUT_W - C_END), f32)
    main_ref[...] = jnp.concatenate(
        [probs, dt, attn_avg.reshape(B * S, S), pad], axis=-1)         # [B*S, 128]
    hidden_ref[0, :, :] = h0
    hidden_ref[1, :, :] = h1


# ---- parameter generation & host-side packing ---------------------------------
def init_params(key):
    """Deterministic synthetic parameters (shapes follow the module __init__).
    b0 / b1 model PyTorch's (b_ih + b_hh) per LSTM layer."""
    H, T = HIDDEN, NUM_TOPICS
    names_shapes = [
        ("w_s", (STUDENT_FEATS, H)), ("b_s", (H,)),
        ("w_m", (T, H)), ("b_m", (H,)),
        ("w_ih0", (INPUT_SIZE, 4 * H)), ("w_hh0", (H, 4 * H)), ("b0", (4 * H,)),
        ("w_ih1", (H, 4 * H)), ("w_hh1", (H, 4 * H)), ("b1", (4 * H,)),
        ("w_q", (H, H)), ("b_q", (H,)),
        ("w_k", (H, H)), ("b_k", (H,)),
        ("w_v", (H, H)), ("b_v", (H,)),
        ("w_o", (H, H)), ("b_o", (H,)),
        ("w_pg1", (H, 2 * H)), ("b_pg1", (2 * H,)),
        ("w_pg2", (2 * H, T)), ("b_pg2", (T,)),
        ("w_d", (H, 3)), ("b_d", (3,)),
        ("w_t", (H, 1)), ("b_t", (1,)),
    ]
    keys = jax.random.split(key, len(names_shapes))
    params = {}
    for (name, shape), k in zip(names_shapes, keys):
        scale = 0.02 if name.startswith("b") else 0.1
        params[name] = jax.random.normal(k, shape, jnp.float32) * scale
    return params


def pack_params(p):
    """Pack all parameters into one zero-padded [SLAB_ROWS, 128] f32 slab (1 DMA)."""
    H, T, HD = HIDDEN, NUM_TOPICS, HEAD_DIM
    slab = jnp.zeros((SLAB_ROWS, SLAB_W), jnp.float32)

    def put(s, row, mat):
        mat = jnp.asarray(mat, jnp.float32)
        return s.at[row:row + mat.shape[0], :mat.shape[1]].set(mat)

    # block-diagonal fused student/mastery encoder; kernel input is [sf | ms | 0-pad]
    w_sm = jnp.zeros((32, 2 * H), jnp.float32)
    w_sm = w_sm.at[:STUDENT_FEATS, :H].set(p["w_s"])
    w_sm = w_sm.at[STUDENT_FEATS:STUDENT_FEATS + T, H:2 * H].set(p["w_m"])
    b_sm = jnp.concatenate([p["b_s"], p["b_m"]])

    # per-head [q|k|v] column blocks so heads batch on the leading axis in-kernel
    w_qkv = jnp.concatenate(
        [jnp.concatenate([p["w_q"][:, h * HD:(h + 1) * HD],
                          p["w_k"][:, h * HD:(h + 1) * HD],
                          p["w_v"][:, h * HD:(h + 1) * HD]], axis=1)
         for h in range(NUM_HEADS)], axis=1)
    b_qkv = jnp.concatenate(
        [jnp.concatenate([p["b_q"][h * HD:(h + 1) * HD],
                          p["b_k"][h * HD:(h + 1) * HD],
                          p["b_v"][h * HD:(h + 1) * HD]])
         for h in range(NUM_HEADS)])

    w_dt = jnp.concatenate([p["w_d"], p["w_t"]], axis=1)
    b_dt = jnp.concatenate([p["b_d"], p["b_t"]])

    slab = put(slab, R_W_IH0_ENC, p["w_ih0"][:2 * H])
    slab = put(slab, R_W_IH0_X, p["w_ih0"][2 * H:])
    slab = put(slab, R_W_HH0, p["w_hh0"])
    slab = put(slab, R_W_IH1, p["w_ih1"])
    slab = put(slab, R_W_HH1, p["w_hh1"])
    slab = put(slab, R_W_SM, w_sm)
    slab = put(slab, R_W_QKV, w_qkv)
    slab = put(slab, R_W_O, p["w_o"])
    slab = put(slab, R_W_PG1, p["w_pg1"])
    slab = put(slab, R_W_PG2, p["w_pg2"])
    slab = put(slab, R_W_DT, w_dt)
    for row, vec in ((RB_B0, p["b0"]), (RB_B1, p["b1"]), (RB_SM, b_sm),
                     (RB_QKV, b_qkv), (RB_O, p["b_o"]), (RB_PG1, p["b_pg1"]),
                     (RB_PG2, p["b_pg2"]), (RB_DT, b_dt)):
        slab = put(slab, row, vec[None, :])
    return slab


def adaptive_path_forward(slab, student_features, mastery_scores, topic_sequence):
    B, S, T = topic_sequence.shape
    H = HIDDEN

    # host-side input packing: [sf | ms | 0-pad] and time-major topic rows
    sm = jnp.zeros((B, 32), jnp.float32)
    sm = sm.at[:, :STUDENT_FEATS].set(student_features)
    sm = sm.at[:, STUDENT_FEATS:STUDENT_FEATS + T].set(mastery_scores)
    ts_sb = jnp.transpose(topic_sequence, (1, 0, 2)).reshape(S * B, T)

    vmem = lambda: pl.BlockSpec(memory_space=pltpu.MemorySpace.VMEM)
    main, hidden = pl.pallas_call(
        adaptive_path_kernel,
        out_shape=(jax.ShapeDtypeStruct((B * S, OUT_W), jnp.float32),
                   jax.ShapeDtypeStruct((NUM_LAYERS, B, H), jnp.float32)),
        in_specs=[vmem(), vmem(), vmem()],
        out_specs=(vmem(), vmem()),
    )(sm, ts_sb, slab)
    # TODO(synk): for B >= 8 on v7x, add grid=(2,) over the batch with
    # dimension_semantics=("parallel",) so both TensorCores are used.

    return {
        "next_topic_probs": main[:, C_PROBS:C_PROBS + T].reshape(B, S, T),
        "difficulty_preds": main[:, C_DIFF:C_DIFF + 3].reshape(B, S, 3),
        "time_estimates": main[:, C_TIME:C_TIME + 1].reshape(B, S, 1),
        "attention_weights": main[:, C_ATTN:C_ATTN + S].reshape(B, S, S),
        "hidden_state": hidden,
    }


if __name__ == "__main__":
    key = jax.random.PRNGKey(0)
    k_param, k_sf, k_ms, k_ts = jax.random.split(key, 4)

    params = init_params(k_param)
    slab = pack_params(params)

    student_features = jax.random.normal(k_sf, (BATCH, STUDENT_FEATS), jnp.float32)
    mastery_scores = jax.random.uniform(k_ms, (BATCH, NUM_TOPICS), jnp.float32)
    topic_sequence = jax.random.uniform(k_ts, (BATCH, SEQ, NUM_TOPICS), jnp.float32)

    fwd = jax.jit(adaptive_path_forward)
    out = jax.block_until_ready(
        fwd(slab, student_features, mastery_scores, topic_sequence))

    # light sanity checks
    assert out["next_topic_probs"].shape == (BATCH, SEQ, NUM_TOPICS)
    assert out["difficulty_preds"].shape == (BATCH, SEQ, 3)
    assert out["time_estimates"].shape == (BATCH, SEQ, 1)
    assert out["attention_weights"].shape == (BATCH, SEQ, SEQ)
    assert out["hidden_state"].shape == (NUM_LAYERS, BATCH, HIDDEN)
    # softmax sums: tolerance covers the approx-reciprocal (EUP) normalization
    assert bool(jnp.allclose(out["next_topic_probs"].sum(-1), 1.0, atol=1e-2))
    assert bool(jnp.allclose(out["attention_weights"].sum(-1), 1.0, atol=1e-2))

    print("KERNEL_OK")
</pallas_src>

<mosaic_0001>
module attributes {stable_mosaic.version = 11 : i64} {
  func.func @adaptive_path_kernel(%arg0: memref<2x32xf32, #tpu.memory_space<vmem>>, %arg1: memref<16x16xf32, #tpu.memory_space<vmem>>, %arg2: memref<464x128xf32, #tpu.memory_space<vmem>>, %arg3: memref<16x128xf32, #tpu.memory_space<vmem>>, %arg4: memref<2x2x32xf32, #tpu.memory_space<vmem>>) attributes {dimension_semantics = [], scalar_prefetch = 0 : i64, scratch_operands = 0 : i64, tpu.core_type = #tpu.core_type<tc>} {
    %c0 = arith.constant 0 : index
    %c0_0 = arith.constant 0 : index
    %0 = vector.load %arg0[%c0, %c0_0] : memref<2x32xf32, #tpu.memory_space<vmem>>, vector<2x32xf32>
    %1 = arith.truncf %0 : vector<2x32xf32> to vector<2x32xbf16>
    %c176 = arith.constant 176 : index
    %c0_1 = arith.constant 0 : index
    %2 = vector.load %arg2[%c176, %c0_1] : memref<464x128xf32, #tpu.memory_space<vmem>>, vector<32x64xf32>
    %3 = arith.truncf %2 : vector<32x64xf32> to vector<32x64xbf16>
    %cst = arith.constant dense<0.000000e+00> : vector<2x64xf32>
    %4 = tpu.matmul %1, %3, %cst {dimension_numbers = #tpu.dot_dimension_numbers<[1], [0], [0], [1], [0, 0, 1, 1], [], []>} : vector<2x32xbf16>, vector<32x64xbf16>, vector<2x64xf32> -> vector<2x64xf32>
    %c416 = arith.constant 416 : index
    %c0_2 = arith.constant 0 : index
    %5 = vector.load %arg2[%c416, %c0_2] : memref<464x128xf32, #tpu.memory_space<vmem>>, vector<1x64xf32>
    %6 = vector.broadcast %5 : vector<1x64xf32> to vector<2x64xf32>
    %7 = arith.addf %4, %6 : vector<2x64xf32>
    %8 = arith.truncf %7 : vector<2x64xf32> to vector<2x64xbf16>
    %c0_3 = arith.constant 0 : index
    %c0_4 = arith.constant 0 : index
    %9 = vector.load %arg2[%c0_3, %c0_4] : memref<464x128xf32, #tpu.memory_space<vmem>>, vector<64x128xf32>
    %10 = arith.truncf %9 : vector<64x128xf32> to vector<64x128xbf16>
    %cst_5 = arith.constant dense<0.000000e+00> : vector<2x128xf32>
    %11 = tpu.matmul %8, %10, %cst_5 {dimension_numbers = #tpu.dot_dimension_numbers<[1], [0], [0], [1], [0, 0, 1, 1], [], []>} : vector<2x64xbf16>, vector<64x128xbf16>, vector<2x128xf32> -> vector<2x128xf32>
    %c400 = arith.constant 400 : index
    %c0_6 = arith.constant 0 : index
    %12 = vector.load %arg2[%c400, %c0_6] : memref<464x128xf32, #tpu.memory_space<vmem>>, vector<1x128xf32>
    %13 = vector.broadcast %12 : vector<1x128xf32> to vector<2x128xf32>
    %14 = arith.addf %11, %13 : vector<2x128xf32>
    %c0_7 = arith.constant 0 : index
    %c0_8 = arith.constant 0 : index
    %15 = vector.load %arg1[%c0_7, %c0_8] : memref<16x16xf32, #tpu.memory_space<vmem>>, vector<16x16xf32>
    %16 = arith.truncf %15 : vector<16x16xf32> to vector<16x16xbf16>
    %c64 = arith.constant 64 : index
    %c0_9 = arith.constant 0 : index
    %17 = vector.load %arg2[%c64, %c0_9] : memref<464x128xf32, #tpu.memory_space<vmem>>, vector<16x128xf32>
    %18 = arith.truncf %17 : vector<16x128xf32> to vector<16x128xbf16>
    %cst_10 = arith.constant dense<0.000000e+00> : vector<16x128xf32>
    %19 = tpu.matmul %16, %18, %cst_10 {dimension_numbers = #tpu.dot_dimension_numbers<[1], [0], [0], [1], [0, 0, 1, 1], [], []>} : vector<16x16xbf16>, vector<16x128xbf16>, vector<16x128xf32> -> vector<16x128xf32>
    %20 = tpu.concatenate %14, %14, %14, %14, %14, %14, %14, %14 in 0 : vector<2x128xf32>, vector<2x128xf32>, vector<2x128xf32>, vector<2x128xf32>, vector<2x128xf32>, vector<2x128xf32>, vector<2x128xf32>, vector<2x128xf32> -> vector<16x128xf32>
    %21 = arith.addf %19, %20 : vector<16x128xf32>
    %c80 = arith.constant 80 : index
    %c0_11 = arith.constant 0 : index
    %22 = vector.load %arg2[%c80, %c0_11] : memref<464x128xf32, #tpu.memory_space<vmem>>, vector<32x128xf32>
    %23 = arith.truncf %22 : vector<32x128xf32> to vector<32x128xbf16>
    %c144 = arith.constant 144 : index
    %c0_12 = arith.constant 0 : index
    %24 = vector.load %arg2[%c144, %c0_12] : memref<464x128xf32, #tpu.memory_space<vmem>>, vector<32x128xf32>
    %25 = arith.truncf %24 : vector<32x128xf32> to vector<32x128xbf16>
    %cst_13 = arith.constant 0.000000e+00 : f32
    %26 = vector.broadcast %cst_13 : f32 to vector<2x32xf32>
    %cst_14 = arith.constant 0.000000e+00 : f32
    %27 = vector.broadcast %cst_14 : f32 to vector<2x32xf32>
    %28 = vector.extract_strided_slice %21 {offsets = [0, 0], sizes = [2, 128], strides = [1, 1]} : vector<16x128xf32> to vector<2x128xf32>
    %29 = arith.truncf %26 : vector<2x32xf32> to vector<2x32xbf16>
    %cst_15 = arith.constant dense<0.000000e+00> : vector<2x128xf32>
    %30 = tpu.matmul %29, %23, %cst_15 {dimension_numbers = #tpu.dot_dimension_numbers<[1], [0], [0], [1], [0, 0, 1, 1], [], []>} : vector<2x32xbf16>, vector<32x128xbf16>, vector<2x128xf32> -> vector<2x128xf32>
    %31 = arith.addf %28, %30 : vector<2x128xf32>
    %32 = vector.extract_strided_slice %31 {offsets = [0, 0], sizes = [2, 32], strides = [1, 1]} : vector<2x128xf32> to vector<2x32xf32>
    %33 = arith.negf %32 : vector<2x32xf32>
    %34 = math.exp %33 : vector<2x32xf32>
    %cst_16 = arith.constant 1.000000e+00 : f32
    %35 = vector.broadcast %cst_16 : f32 to vector<2x32xf32>
    %36 = arith.addf %35, %34 : vector<2x32xf32>
    %37 = arith.divf %35, %36 : vector<2x32xf32>
    %38 = vector.extract_strided_slice %31 {offsets = [0, 32], sizes = [2, 32], strides = [1, 1]} : vector<2x128xf32> to vector<2x32xf32>
    %39 = arith.negf %38 : vector<2x32xf32>
    %40 = math.exp %39 : vector<2x32xf32>
    %cst_17 = arith.constant 1.000000e+00 : f32
    %41 = vector.broadcast %cst_17 : f32 to vector<2x32xf32>
    %42 = arith.addf %41, %40 : vector<2x32xf32>
    %43 = arith.divf %41, %42 : vector<2x32xf32>
    %44 = vector.extract_strided_slice %31 {offsets = [0, 64], sizes = [2, 32], strides = [1, 1]} : vector<2x128xf32> to vector<2x32xf32>
    %45 = math.tanh %44 : vector<2x32xf32>
    %46 = vector.extract_strided_slice %31 {offsets = [0, 96], sizes = [2, 32], strides = [1, 1]} : vector<2x128xf32> to vector<2x32xf32>
    %47 = arith.negf %46 : vector<2x32xf32>
    %48 = math.exp %47 : vector<2x32xf32>
    %cst_18 = arith.constant 1.000000e+00 : f32
    %49 = vector.broadcast %cst_18 : f32 to vector<2x32xf32>
    %50 = arith.addf %49, %48 : vector<2x32xf32>
    %51 = arith.divf %49, %50 : vector<2x32xf32>
    %52 = arith.mulf %43, %27 : vector<2x32xf32>
    %53 = arith.mulf %37, %45 : vector<2x32xf32>
    %54 = arith.addf %52, %53 : vector<2x32xf32>
    %55 = math.tanh %54 : vector<2x32xf32>
    %56 = arith.mulf %51, %55 : vector<2x32xf32>
    %57 = vector.extract_strided_slice %21 {offsets = [2, 0], sizes = [2, 128], strides = [1, 1]} : vector<16x128xf32> to vector<2x128xf32>
    %58 = arith.truncf %56 : vector<2x32xf32> to vector<2x32xbf16>
    %cst_19 = arith.constant dense<0.000000e+00> : vector<2x128xf32>
    %59 = tpu.matmul %58, %23, %cst_19 {dimension_numbers = #tpu.dot_dimension_numbers<[1], [0], [0], [1], [0, 0, 1, 1], [], []>} : vector<2x32xbf16>, vector<32x128xbf16>, vector<2x128xf32> -> vector<2x128xf32>
    %60 = arith.addf %57, %59 : vector<2x128xf32>
    %61 = vector.extract_strided_slice %60 {offsets = [0, 0], sizes = [2, 32], strides = [1, 1]} : vector<2x128xf32> to vector<2x32xf32>
    %62 = arith.negf %61 : vector<2x32xf32>
    %63 = math.exp %62 : vector<2x32xf32>
    %cst_20 = arith.constant 1.000000e+00 : f32
    %64 = vector.broadcast %cst_20 : f32 to vector<2x32xf32>
    %65 = arith.addf %64, %63 : vector<2x32xf32>
    %66 = arith.divf %64, %65 : vector<2x32xf32>
    %67 = vector.extract_strided_slice %60 {offsets = [0, 32], sizes = [2, 32], strides = [1, 1]} : vector<2x128xf32> to vector<2x32xf32>
    %68 = arith.negf %67 : vector<2x32xf32>
    %69 = math.exp %68 : vector<2x32xf32>
    %cst_21 = arith.constant 1.000000e+00 : f32
    %70 = vector.broadcast %cst_21 : f32 to vector<2x32xf32>
    %71 = arith.addf %70, %69 : vector<2x32xf32>
    %72 = arith.divf %70, %71 : vector<2x32xf32>
    %73 = vector.extract_strided_slice %60 {offsets = [0, 64], sizes = [2, 32], strides = [1, 1]} : vector<2x128xf32> to vector<2x32xf32>
    %74 = math.tanh %73 : vector<2x32xf32>
    %75 = vector.extract_strided_slice %60 {offsets = [0, 96], sizes = [2, 32], strides = [1, 1]} : vector<2x128xf32> to vector<2x32xf32>
    %76 = arith.negf %75 : vector<2x32xf32>
    %77 = math.exp %76 : vector<2x32xf32>
    %cst_22 = arith.constant 1.000000e+00 : f32
    %78 = vector.broadcast %cst_22 : f32 to vector<2x32xf32>
    %79 = arith.addf %78, %77 : vector<2x32xf32>
    %80 = arith.divf %78, %79 : vector<2x32xf32>
    %81 = arith.mulf %72, %54 : vector<2x32xf32>
    %82 = arith.mulf %66, %74 : vector<2x32xf32>
    %83 = arith.addf %81, %82 : vector<2x32xf32>
    %84 = math.tanh %83 : vector<2x32xf32>
    %85 = arith.mulf %80, %84 : vector<2x32xf32>
    %86 = vector.extract_strided_slice %21 {offsets = [4, 0], sizes = [2, 128], strides = [1, 1]} : vector<16x128xf32> to vector<2x128xf32>
    %87 = arith.truncf %85 : vector<2x32xf32> to vector<2x32xbf16>
    %cst_23 = arith.constant dense<0.000000e+00> : vector<2x128xf32>
    %88 = tpu.matmul %87, %23, %cst_23 {dimension_numbers = #tpu.dot_dimension_numbers<[1], [0], [0], [1], [0, 0, 1, 1], [], []>} : vector<2x32xbf16>, vector<32x128xbf16>, vector<2x128xf32> -> vector<2x128xf32>
    %89 = arith.addf %86, %88 : vector<2x128xf32>
    %90 = vector.extract_strided_slice %89 {offsets = [0, 0], sizes = [2, 32], strides = [1, 1]} : vector<2x128xf32> to vector<2x32xf32>
    %91 = arith.negf %90 : vector<2x32xf32>
    %92 = math.exp %91 : vector<2x32xf32>
    %cst_24 = arith.constant 1.000000e+00 : f32
    %93 = vector.broadcast %cst_24 : f32 to vector<2x32xf32>
    %94 = arith.addf %93, %92 : vector<2x32xf32>
    %95 = arith.divf %93, %94 : vector<2x32xf32>
    %96 = vector.extract_strided_slice %89 {offsets = [0, 32], sizes = [2, 32], strides = [1, 1]} : vector<2x128xf32> to vector<2x32xf32>
    %97 = arith.negf %96 : vector<2x32xf32>
    %98 = math.exp %97 : vector<2x32xf32>
    %cst_25 = arith.constant 1.000000e+00 : f32
    %99 = vector.broadcast %cst_25 : f32 to vector<2x32xf32>
    %100 = arith.addf %99, %98 : vector<2x32xf32>
    %101 = arith.divf %99, %100 : vector<2x32xf32>
    %102 = vector.extract_strided_slice %89 {offsets = [0, 64], sizes = [2, 32], strides = [1, 1]} : vector<2x128xf32> to vector<2x32xf32>
    %103 = math.tanh %102 : vector<2x32xf32>
    %104 = vector.extract_strided_slice %89 {offsets = [0, 96], sizes = [2, 32], strides = [1, 1]} : vector<2x128xf32> to vector<2x32xf32>
    %105 = arith.negf %104 : vector<2x32xf32>
    %106 = math.exp %105 : vector<2x32xf32>
    %cst_26 = arith.constant 1.000000e+00 : f32
    %107 = vector.broadcast %cst_26 : f32 to vector<2x32xf32>
    %108 = arith.addf %107, %106 : vector<2x32xf32>
    %109 = arith.divf %107, %108 : vector<2x32xf32>
    %110 = arith.mulf %101, %83 : vector<2x32xf32>
    %111 = arith.mulf %95, %103 : vector<2x32xf32>
    %112 = arith.addf %110, %111 : vector<2x32xf32>
    %113 = math.tanh %112 : vector<2x32xf32>
    %114 = arith.mulf %109, %113 : vector<2x32xf32>
    %115 = vector.extract_strided_slice %21 {offsets = [6, 0], sizes = [2, 128], strides = [1, 1]} : vector<16x128xf32> to vector<2x128xf32>
    %116 = arith.truncf %114 : vector<2x32xf32> to vector<2x32xbf16>
    %cst_27 = arith.constant dense<0.000000e+00> : vector<2x128xf32>
    %117 = tpu.matmul %116, %23, %cst_27 {dimension_numbers = #tpu.dot_dimension_numbers<[1], [0], [0], [1], [0, 0, 1, 1], [], []>} : vector<2x32xbf16>, vector<32x128xbf16>, vector<2x128xf32> -> vector<2x128xf32>
    %118 = arith.addf %115, %117 : vector<2x128xf32>
    %119 = vector.extract_strided_slice %118 {offsets = [0, 0], sizes = [2, 32], strides = [1, 1]} : vector<2x128xf32> to vector<2x32xf32>
    %120 = arith.negf %119 : vector<2x32xf32>
    %121 = math.exp %120 : vector<2x32xf32>
    %cst_28 = arith.constant 1.000000e+00 : f32
    %122 = vector.broadcast %cst_28 : f32 to vector<2x32xf32>
    %123 = arith.addf %122, %121 : vector<2x32xf32>
    %124 = arith.divf %122, %123 : vector<2x32xf32>
    %125 = vector.extract_strided_slice %118 {offsets = [0, 32], sizes = [2, 32], strides = [1, 1]} : vector<2x128xf32> to vector<2x32xf32>
    %126 = arith.negf %125 : vector<2x32xf32>
    %127 = math.exp %126 : vector<2x32xf32>
    %cst_29 = arith.constant 1.000000e+00 : f32
    %128 = vector.broadcast %cst_29 : f32 to vector<2x32xf32>
    %129 = arith.addf %128, %127 : vector<2x32xf32>
    %130 = arith.divf %128, %129 : vector<2x32xf32>
    %131 = vector.extract_strided_slice %118 {offsets = [0, 64], sizes = [2, 32], strides = [1, 1]} : vector<2x128xf32> to vector<2x32xf32>
    %132 = math.tanh %131 : vector<2x32xf32>
    %133 = vector.extract_strided_slice %118 {offsets = [0, 96], sizes = [2, 32], strides = [1, 1]} : vector<2x128xf32> to vector<2x32xf32>
    %134 = arith.negf %133 : vector<2x32xf32>
    %135 = math.exp %134 : vector<2x32xf32>
    %cst_30 = arith.constant 1.000000e+00 : f32
    %136 = vector.broadcast %cst_30 : f32 to vector<2x32xf32>
    %137 = arith.addf %136, %135 : vector<2x32xf32>
    %138 = arith.divf %136, %137 : vector<2x32xf32>
    %139 = arith.mulf %130, %112 : vector<2x32xf32>
    %140 = arith.mulf %124, %132 : vector<2x32xf32>
    %141 = arith.addf %139, %140 : vector<2x32xf32>
    %142 = math.tanh %141 : vector<2x32xf32>
    %143 = arith.mulf %138, %142 : vector<2x32xf32>
    %144 = vector.extract_strided_slice %21 {offsets = [8, 0], sizes = [2, 128], strides = [1, 1]} : vector<16x128xf32> to vector<2x128xf32>
    %145 = arith.truncf %143 : vector<2x32xf32> to vector<2x32xbf16>
    %cst_31 = arith.constant dense<0.000000e+00> : vector<2x128xf32>
    %146 = tpu.matmul %145, %23, %cst_31 {dimension_numbers = #tpu.dot_dimension_numbers<[1], [0], [0], [1], [0, 0, 1, 1], [], []>} : vector<2x32xbf16>, vector<32x128xbf16>, vector<2x128xf32> -> vector<2x128xf32>
    %147 = arith.addf %144, %146 : vector<2x128xf32>
    %148 = vector.extract_strided_slice %147 {offsets = [0, 0], sizes = [2, 32], strides = [1, 1]} : vector<2x128xf32> to vector<2x32xf32>
    %149 = arith.negf %148 : vector<2x32xf32>
    %150 = math.exp %149 : vector<2x32xf32>
    %cst_32 = arith.constant 1.000000e+00 : f32
    %151 = vector.broadcast %cst_32 : f32 to vector<2x32xf32>
    %152 = arith.addf %151, %150 : vector<2x32xf32>
    %153 = arith.divf %151, %152 : vector<2x32xf32>
    %154 = vector.extract_strided_slice %147 {offsets = [0, 32], sizes = [2, 32], strides = [1, 1]} : vector<2x128xf32> to vector<2x32xf32>
    %155 = arith.negf %154 : vector<2x32xf32>
    %156 = math.exp %155 : vector<2x32xf32>
    %cst_33 = arith.constant 1.000000e+00 : f32
    %157 = vector.broadcast %cst_33 : f32 to vector<2x32xf32>
    %158 = arith.addf %157, %156 : vector<2x32xf32>
    %159 = arith.divf %157, %158 : vector<2x32xf32>
    %160 = vector.extract_strided_slice %147 {offsets = [0, 64], sizes = [2, 32], strides = [1, 1]} : vector<2x128xf32> to vector<2x32xf32>
    %161 = math.tanh %160 : vector<2x32xf32>
    %162 = vector.extract_strided_slice %147 {offsets = [0, 96], sizes = [2, 32], strides = [1, 1]} : vector<2x128xf32> to vector<2x32xf32>
    %163 = arith.negf %162 : vector<2x32xf32>
    %164 = math.exp %163 : vector<2x32xf32>
    %cst_34 = arith.constant 1.000000e+00 : f32
    %165 = vector.broadcast %cst_34 : f32 to vector<2x32xf32>
    %166 = arith.addf %165, %164 : vector<2x32xf32>
    %167 = arith.divf %165, %166 : vector<2x32xf32>
    %168 = arith.mulf %159, %141 : vector<2x32xf32>
    %169 = arith.mulf %153, %161 : vector<2x32xf32>
    %170 = arith.addf %168, %169 : vector<2x32xf32>
    %171 = math.tanh %170 : vector<2x32xf32>
    %172 = arith.mulf %167, %171 : vector<2x32xf32>
    %173 = vector.extract_strided_slice %21 {offsets = [10, 0], sizes = [2, 128], strides = [1, 1]} : vector<16x128xf32> to vector<2x128xf32>
    %174 = arith.truncf %172 : vector<2x32xf32> to vector<2x32xbf16>
    %cst_35 = arith.constant dense<0.000000e+00> : vector<2x128xf32>
    %175 = tpu.matmul %174, %23, %cst_35 {dimension_numbers = #tpu.dot_dimension_numbers<[1], [0], [0], [1], [0, 0, 1, 1], [], []>} : vector<2x32xbf16>, vector<32x128xbf16>, vector<2x128xf32> -> vector<2x128xf32>
    %176 = arith.addf %173, %175 : vector<2x128xf32>
    %177 = vector.extract_strided_slice %176 {offsets = [0, 0], sizes = [2, 32], strides = [1, 1]} : vector<2x128xf32> to vector<2x32xf32>
    %178 = arith.negf %177 : vector<2x32xf32>
    %179 = math.exp %178 : vector<2x32xf32>
    %cst_36 = arith.constant 1.000000e+00 : f32
    %180 = vector.broadcast %cst_36 : f32 to vector<2x32xf32>
    %181 = arith.addf %180, %179 : vector<2x32xf32>
    %182 = arith.divf %180, %181 : vector<2x32xf32>
    %183 = vector.extract_strided_slice %176 {offsets = [0, 32], sizes = [2, 32], strides = [1, 1]} : vector<2x128xf32> to vector<2x32xf32>
    %184 = arith.negf %183 : vector<2x32xf32>
    %185 = math.exp %184 : vector<2x32xf32>
    %cst_37 = arith.constant 1.000000e+00 : f32
    %186 = vector.broadcast %cst_37 : f32 to vector<2x32xf32>
    %187 = arith.addf %186, %185 : vector<2x32xf32>
    %188 = arith.divf %186, %187 : vector<2x32xf32>
    %189 = vector.extract_strided_slice %176 {offsets = [0, 64], sizes = [2, 32], strides = [1, 1]} : vector<2x128xf32> to vector<2x32xf32>
    %190 = math.tanh %189 : vector<2x32xf32>
    %191 = vector.extract_strided_slice %176 {offsets = [0, 96], sizes = [2, 32], strides = [1, 1]} : vector<2x128xf32> to vector<2x32xf32>
    %192 = arith.negf %191 : vector<2x32xf32>
    %193 = math.exp %192 : vector<2x32xf32>
    %cst_38 = arith.constant 1.000000e+00 : f32
    %194 = vector.broadcast %cst_38 : f32 to vector<2x32xf32>
    %195 = arith.addf %194, %193 : vector<2x32xf32>
    %196 = arith.divf %194, %195 : vector<2x32xf32>
    %197 = arith.mulf %188, %170 : vector<2x32xf32>
    %198 = arith.mulf %182, %190 : vector<2x32xf32>
    %199 = arith.addf %197, %198 : vector<2x32xf32>
    %200 = math.tanh %199 : vector<2x32xf32>
    %201 = arith.mulf %196, %200 : vector<2x32xf32>
    %202 = vector.extract_strided_slice %21 {offsets = [12, 0], sizes = [2, 128], strides = [1, 1]} : vector<16x128xf32> to vector<2x128xf32>
    %203 = arith.truncf %201 : vector<2x32xf32> to vector<2x32xbf16>
    %cst_39 = arith.constant dense<0.000000e+00> : vector<2x128xf32>
    %204 = tpu.matmul %203, %23, %cst_39 {dimension_numbers = #tpu.dot_dimension_numbers<[1], [0], [0], [1], [0, 0, 1, 1], [], []>} : vector<2x32xbf16>, vector<32x128xbf16>, vector<2x128xf32> -> vector<2x128xf32>
    %205 = arith.addf %202, %204 : vector<2x128xf32>
    %206 = vector.extract_strided_slice %205 {offsets = [0, 0], sizes = [2, 32], strides = [1, 1]} : vector<2x128xf32> to vector<2x32xf32>
    %207 = arith.negf %206 : vector<2x32xf32>
    %208 = math.exp %207 : vector<2x32xf32>
    %cst_40 = arith.constant 1.000000e+00 : f32
    %209 = vector.broadcast %cst_40 : f32 to vector<2x32xf32>
    %210 = arith.addf %209, %208 : vector<2x32xf32>
    %211 = arith.divf %209, %210 : vector<2x32xf32>
    %212 = vector.extract_strided_slice %205 {offsets = [0, 32], sizes = [2, 32], strides = [1, 1]} : vector<2x128xf32> to vector<2x32xf32>
    %213 = arith.negf %212 : vector<2x32xf32>
    %214 = math.exp %213 : vector<2x32xf32>
    %cst_41 = arith.constant 1.000000e+00 : f32
    %215 = vector.broadcast %cst_41 : f32 to vector<2x32xf32>
    %216 = arith.addf %215, %214 : vector<2x32xf32>
    %217 = arith.divf %215, %216 : vector<2x32xf32>
    %218 = vector.extract_strided_slice %205 {offsets = [0, 64], sizes = [2, 32], strides = [1, 1]} : vector<2x128xf32> to vector<2x32xf32>
    %219 = math.tanh %218 : vector<2x32xf32>
    %220 = vector.extract_strided_slice %205 {offsets = [0, 96], sizes = [2, 32], strides = [1, 1]} : vector<2x128xf32> to vector<2x32xf32>
    %221 = arith.negf %220 : vector<2x32xf32>
    %222 = math.exp %221 : vector<2x32xf32>
    %cst_42 = arith.constant 1.000000e+00 : f32
    %223 = vector.broadcast %cst_42 : f32 to vector<2x32xf32>
    %224 = arith.addf %223, %222 : vector<2x32xf32>
    %225 = arith.divf %223, %224 : vector<2x32xf32>
    %226 = arith.mulf %217, %199 : vector<2x32xf32>
    %227 = arith.mulf %211, %219 : vector<2x32xf32>
    %228 = arith.addf %226, %227 : vector<2x32xf32>
    %229 = math.tanh %228 : vector<2x32xf32>
    %230 = arith.mulf %225, %229 : vector<2x32xf32>
    %231 = vector.extract_strided_slice %21 {offsets = [14, 0], sizes = [2, 128], strides = [1, 1]} : vector<16x128xf32> to vector<2x128xf32>
    %232 = arith.truncf %230 : vector<2x32xf32> to vector<2x32xbf16>
    %cst_43 = arith.constant dense<0.000000e+00> : vector<2x128xf32>
    %233 = tpu.matmul %232, %23, %cst_43 {dimension_numbers = #tpu.dot_dimension_numbers<[1], [0], [0], [1], [0, 0, 1, 1], [], []>} : vector<2x32xbf16>, vector<32x128xbf16>, vector<2x128xf32> -> vector<2x128xf32>
    %234 = arith.addf %231, %233 : vector<2x128xf32>
    %235 = vector.extract_strided_slice %234 {offsets = [0, 0], sizes = [2, 32], strides = [1, 1]} : vector<2x128xf32> to vector<2x32xf32>
    %236 = arith.negf %235 : vector<2x32xf32>
    %237 = math.exp %236 : vector<2x32xf32>
    %cst_44 = arith.constant 1.000000e+00 : f32
    %238 = vector.broadcast %cst_44 : f32 to vector<2x32xf32>
    %239 = arith.addf %238, %237 : vector<2x32xf32>
    %240 = arith.divf %238, %239 : vector<2x32xf32>
    %241 = vector.extract_strided_slice %234 {offsets = [0, 32], sizes = [2, 32], strides = [1, 1]} : vector<2x128xf32> to vector<2x32xf32>
    %242 = arith.negf %241 : vector<2x32xf32>
    %243 = math.exp %242 : vector<2x32xf32>
    %cst_45 = arith.constant 1.000000e+00 : f32
    %244 = vector.broadcast %cst_45 : f32 to vector<2x32xf32>
    %245 = arith.addf %244, %243 : vector<2x32xf32>
    %246 = arith.divf %244, %245 : vector<2x32xf32>
    %247 = vector.extract_strided_slice %234 {offsets = [0, 64], sizes = [2, 32], strides = [1, 1]} : vector<2x128xf32> to vector<2x32xf32>
    %248 = math.tanh %247 : vector<2x32xf32>
    %249 = vector.extract_strided_slice %234 {offsets = [0, 96], sizes = [2, 32], strides = [1, 1]} : vector<2x128xf32> to vector<2x32xf32>
    %250 = arith.negf %249 : vector<2x32xf32>
    %251 = math.exp %250 : vector<2x32xf32>
    %cst_46 = arith.constant 1.000000e+00 : f32
    %252 = vector.broadcast %cst_46 : f32 to vector<2x32xf32>
    %253 = arith.addf %252, %251 : vector<2x32xf32>
    %254 = arith.divf %252, %253 : vector<2x32xf32>
    %255 = arith.mulf %246, %228 : vector<2x32xf32>
    %256 = arith.mulf %240, %248 : vector<2x32xf32>
    %257 = arith.addf %255, %256 : vector<2x32xf32>
    %258 = math.tanh %257 : vector<2x32xf32>
    %259 = arith.mulf %254, %258 : vector<2x32xf32>
    %260 = tpu.concatenate %56, %85, %114, %143, %172, %201, %230, %259 in 0 : vector<2x32xf32>, vector<2x32xf32>, vector<2x32xf32>, vector<2x32xf32>, vector<2x32xf32>, vector<2x32xf32>, vector<2x32xf32>, vector<2x32xf32> -> vector<16x32xf32>
    %261 = arith.truncf %260 : vector<16x32xf32> to vector<16x32xbf16>
    %c112 = arith.constant 112 : index
    %c0_47 = arith.constant 0 : index
    %262 = vector.load %arg2[%c112, %c0_47] : memref<464x128xf32, #tpu.memory_space<vmem>>, vector<32x128xf32>
    %263 = arith.truncf %262 : vector<32x128xf32> to vector<32x128xbf16>
    %cst_48 = arith.constant dense<0.000000e+00> : vector<16x128xf32>
    %264 = tpu.matmul %261, %263, %cst_48 {dimension_numbers = #tpu.dot_dimension_numbers<[1], [0], [0], [1], [0, 0, 1, 1], [], []>} : vector<16x32xbf16>, vector<32x128xbf16>, vector<16x128xf32> -> vector<16x128xf32>
    %c408 = arith.constant 408 : index
    %c0_49 = arith.constant 0 : index
    %265 = vector.load %arg2[%c408, %c0_49] : memref<464x128xf32, #tpu.memory_space<vmem>>, vector<1x128xf32>
    %266 = vector.broadcast %265 : vector<1x128xf32> to vector<16x128xf32>
    %267 = arith.addf %264, %266 : vector<16x128xf32>
    %cst_50 = arith.constant 0.000000e+00 : f32
    %268 = vector.broadcast %cst_50 : f32 to vector<2x32xf32>
    %cst_51 = arith.constant 0.000000e+00 : f32
    %269 = vector.broadcast %cst_51 : f32 to vector<2x32xf32>
    %270 = vector.extract_strided_slice %267 {offsets = [0, 0], sizes = [2, 128], strides = [1, 1]} : vector<16x128xf32> to vector<2x128xf32>
    %271 = arith.truncf %268 : vector<2x32xf32> to vector<2x32xbf16>
    %cst_52 = arith.constant dense<0.000000e+00> : vector<2x128xf32>
    %272 = tpu.matmul %271, %25, %cst_52 {dimension_numbers = #tpu.dot_dimension_numbers<[1], [0], [0], [1], [0, 0, 1, 1], [], []>} : vector<2x32xbf16>, vector<32x128xbf16>, vector<2x128xf32> -> vector<2x128xf32>
    %273 = arith.addf %270, %272 : vector<2x128xf32>
    %274 = vector.extract_strided_slice %273 {offsets = [0, 0], sizes = [2, 32], strides = [1, 1]} : vector<2x128xf32> to vector<2x32xf32>
    %275 = arith.negf %274 : vector<2x32xf32>
    %276 = math.exp %275 : vector<2x32xf32>
    %cst_53 = arith.constant 1.000000e+00 : f32
    %277 = vector.broadcast %cst_53 : f32 to vector<2x32xf32>
    %278 = arith.addf %277, %276 : vector<2x32xf32>
    %279 = arith.divf %277, %278 : vector<2x32xf32>
    %280 = vector.extract_strided_slice %273 {offsets = [0, 32], sizes = [2, 32], strides = [1, 1]} : vector<2x128xf32> to vector<2x32xf32>
    %281 = arith.negf %280 : vector<2x32xf32>
    %282 = math.exp %281 : vector<2x32xf32>
    %cst_54 = arith.constant 1.000000e+00 : f32
    %283 = vector.broadcast %cst_54 : f32 to vector<2x32xf32>
    %284 = arith.addf %283, %282 : vector<2x32xf32>
    %285 = arith.divf %283, %284 : vector<2x32xf32>
    %286 = vector.extract_strided_slice %273 {offsets = [0, 64], sizes = [2, 32], strides = [1, 1]} : vector<2x128xf32> to vector<2x32xf32>
    %287 = math.tanh %286 : vector<2x32xf32>
    %288 = vector.extract_strided_slice %273 {offsets = [0, 96], sizes = [2, 32], strides = [1, 1]} : vector<2x128xf32> to vector<2x32xf32>
    %289 = arith.negf %288 : vector<2x32xf32>
    %290 = math.exp %289 : vector<2x32xf32>
    %cst_55 = arith.constant 1.000000e+00 : f32
    %291 = vector.broadcast %cst_55 : f32 to vector<2x32xf32>
    %292 = arith.addf %291, %290 : vector<2x32xf32>
    %293 = arith.divf %291, %292 : vector<2x32xf32>
    %294 = arith.mulf %285, %269 : vector<2x32xf32>
    %295 = arith.mulf %279, %287 : vector<2x32xf32>
    %296 = arith.addf %294, %295 : vector<2x32xf32>
    %297 = math.tanh %296 : vector<2x32xf32>
    %298 = arith.mulf %293, %297 : vector<2x32xf32>
    %299 = vector.extract_strided_slice %267 {offsets = [2, 0], sizes = [2, 128], strides = [1, 1]} : vector<16x128xf32> to vector<2x128xf32>
    %300 = arith.truncf %298 : vector<2x32xf32> to vector<2x32xbf16>
    %cst_56 = arith.constant dense<0.000000e+00> : vector<2x128xf32>
    %301 = tpu.matmul %300, %25, %cst_56 {dimension_numbers = #tpu.dot_dimension_numbers<[1], [0], [0], [1], [0, 0, 1, 1], [], []>} : vector<2x32xbf16>, vector<32x128xbf16>, vector<2x128xf32> -> vector<2x128xf32>
    %302 = arith.addf %299, %301 : vector<2x128xf32>
    %303 = vector.extract_strided_slice %302 {offsets = [0, 0], sizes = [2, 32], strides = [1, 1]} : vector<2x128xf32> to vector<2x32xf32>
    %304 = arith.negf %303 : vector<2x32xf32>
    %305 = math.exp %304 : vector<2x32xf32>
    %cst_57 = arith.constant 1.000000e+00 : f32
    %306 = vector.broadcast %cst_57 : f32 to vector<2x32xf32>
    %307 = arith.addf %306, %305 : vector<2x32xf32>
    %308 = arith.divf %306, %307 : vector<2x32xf32>
    %309 = vector.extract_strided_slice %302 {offsets = [0, 32], sizes = [2, 32], strides = [1, 1]} : vector<2x128xf32> to vector<2x32xf32>
    %310 = arith.negf %309 : vector<2x32xf32>
    %311 = math.exp %310 : vector<2x32xf32>
    %cst_58 = arith.constant 1.000000e+00 : f32
    %312 = vector.broadcast %cst_58 : f32 to vector<2x32xf32>
    %313 = arith.addf %312, %311 : vector<2x32xf32>
    %314 = arith.divf %312, %313 : vector<2x32xf32>
    %315 = vector.extract_strided_slice %302 {offsets = [0, 64], sizes = [2, 32], strides = [1, 1]} : vector<2x128xf32> to vector<2x32xf32>
    %316 = math.tanh %315 : vector<2x32xf32>
    %317 = vector.extract_strided_slice %302 {offsets = [0, 96], sizes = [2, 32], strides = [1, 1]} : vector<2x128xf32> to vector<2x32xf32>
    %318 = arith.negf %317 : vector<2x32xf32>
    %319 = math.exp %318 : vector<2x32xf32>
    %cst_59 = arith.constant 1.000000e+00 : f32
    %320 = vector.broadcast %cst_59 : f32 to vector<2x32xf32>
    %321 = arith.addf %320, %319 : vector<2x32xf32>
    %322 = arith.divf %320, %321 : vector<2x32xf32>
    %323 = arith.mulf %314, %296 : vector<2x32xf32>
    %324 = arith.mulf %308, %316 : vector<2x32xf32>
    %325 = arith.addf %323, %324 : vector<2x32xf32>
    %326 = math.tanh %325 : vector<2x32xf32>
    %327 = arith.mulf %322, %326 : vector<2x32xf32>
    %328 = vector.extract_strided_slice %267 {offsets = [4, 0], sizes = [2, 128], strides = [1, 1]} : vector<16x128xf32> to vector<2x128xf32>
    %329 = arith.truncf %327 : vector<2x32xf32> to vector<2x32xbf16>
    %cst_60 = arith.constant dense<0.000000e+00> : vector<2x128xf32>
    %330 = tpu.matmul %329, %25, %cst_60 {dimension_numbers = #tpu.dot_dimension_numbers<[1], [0], [0], [1], [0, 0, 1, 1], [], []>} : vector<2x32xbf16>, vector<32x128xbf16>, vector<2x128xf32> -> vector<2x128xf32>
    %331 = arith.addf %328, %330 : vector<2x128xf32>
    %332 = vector.extract_strided_slice %331 {offsets = [0, 0], sizes = [2, 32], strides = [1, 1]} : vector<2x128xf32> to vector<2x32xf32>
    %333 = arith.negf %332 : vector<2x32xf32>
    %334 = math.exp %333 : vector<2x32xf32>
    %cst_61 = arith.constant 1.000000e+00 : f32
    %335 = vector.broadcast %cst_61 : f32 to vector<2x32xf32>
    %336 = arith.addf %335, %334 : vector<2x32xf32>
    %337 = arith.divf %335, %336 : vector<2x32xf32>
    %338 = vector.extract_strided_slice %331 {offsets = [0, 32], sizes = [2, 32], strides = [1, 1]} : vector<2x128xf32> to vector<2x32xf32>
    %339 = arith.negf %338 : vector<2x32xf32>
    %340 = math.exp %339 : vector<2x32xf32>
    %cst_62 = arith.constant 1.000000e+00 : f32
    %341 = vector.broadcast %cst_62 : f32 to vector<2x32xf32>
    %342 = arith.addf %341, %340 : vector<2x32xf32>
    %343 = arith.divf %341, %342 : vector<2x32xf32>
    %344 = vector.extract_strided_slice %331 {offsets = [0, 64], sizes = [2, 32], strides = [1, 1]} : vector<2x128xf32> to vector<2x32xf32>
    %345 = math.tanh %344 : vector<2x32xf32>
    %346 = vector.extract_strided_slice %331 {offsets = [0, 96], sizes = [2, 32], strides = [1, 1]} : vector<2x128xf32> to vector<2x32xf32>
    %347 = arith.negf %346 : vector<2x32xf32>
    %348 = math.exp %347 : vector<2x32xf32>
    %cst_63 = arith.constant 1.000000e+00 : f32
    %349 = vector.broadcast %cst_63 : f32 to vector<2x32xf32>
    %350 = arith.addf %349, %348 : vector<2x32xf32>
    %351 = arith.divf %349, %350 : vector<2x32xf32>
    %352 = arith.mulf %343, %325 : vector<2x32xf32>
    %353 = arith.mulf %337, %345 : vector<2x32xf32>
    %354 = arith.addf %352, %353 : vector<2x32xf32>
    %355 = math.tanh %354 : vector<2x32xf32>
    %356 = arith.mulf %351, %355 : vector<2x32xf32>
    %357 = vector.extract_strided_slice %267 {offsets = [6, 0], sizes = [2, 128], strides = [1, 1]} : vector<16x128xf32> to vector<2x128xf32>
    %358 = arith.truncf %356 : vector<2x32xf32> to vector<2x32xbf16>
    %cst_64 = arith.constant dense<0.000000e+00> : vector<2x128xf32>
    %359 = tpu.matmul %358, %25, %cst_64 {dimension_numbers = #tpu.dot_dimension_numbers<[1], [0], [0], [1], [0, 0, 1, 1], [], []>} : vector<2x32xbf16>, vector<32x128xbf16>, vector<2x128xf32> -> vector<2x128xf32>
    %360 = arith.addf %357, %359 : vector<2x128xf32>
    %361 = vector.extract_strided_slice %360 {offsets = [0, 0], sizes = [2, 32], strides = [1, 1]} : vector<2x128xf32> to vector<2x32xf32>
    %362 = arith.negf %361 : vector<2x32xf32>
    %363 = math.exp %362 : vector<2x32xf32>
    %cst_65 = arith.constant 1.000000e+00 : f32
    %364 = vector.broadcast %cst_65 : f32 to vector<2x32xf32>
    %365 = arith.addf %364, %363 : vector<2x32xf32>
    %366 = arith.divf %364, %365 : vector<2x32xf32>
    %367 = vector.extract_strided_slice %360 {offsets = [0, 32], sizes = [2, 32], strides = [1, 1]} : vector<2x128xf32> to vector<2x32xf32>
    %368 = arith.negf %367 : vector<2x32xf32>
    %369 = math.exp %368 : vector<2x32xf32>
    %cst_66 = arith.constant 1.000000e+00 : f32
    %370 = vector.broadcast %cst_66 : f32 to vector<2x32xf32>
    %371 = arith.addf %370, %369 : vector<2x32xf32>
    %372 = arith.divf %370, %371 : vector<2x32xf32>
    %373 = vector.extract_strided_slice %360 {offsets = [0, 64], sizes = [2, 32], strides = [1, 1]} : vector<2x128xf32> to vector<2x32xf32>
    %374 = math.tanh %373 : vector<2x32xf32>
    %375 = vector.extract_strided_slice %360 {offsets = [0, 96], sizes = [2, 32], strides = [1, 1]} : vector<2x128xf32> to vector<2x32xf32>
    %376 = arith.negf %375 : vector<2x32xf32>
    %377 = math.exp %376 : vector<2x32xf32>
    %cst_67 = arith.constant 1.000000e+00 : f32
    %378 = vector.broadcast %cst_67 : f32 to vector<2x32xf32>
    %379 = arith.addf %378, %377 : vector<2x32xf32>
    %380 = arith.divf %378, %379 : vector<2x32xf32>
    %381 = arith.mulf %372, %354 : vector<2x32xf32>
    %382 = arith.mulf %366, %374 : vector<2x32xf32>
    %383 = arith.addf %381, %382 : vector<2x32xf32>
    %384 = math.tanh %383 : vector<2x32xf32>
    %385 = arith.mulf %380, %384 : vector<2x32xf32>
    %386 = vector.extract_strided_slice %267 {offsets = [8, 0], sizes = [2, 128], strides = [1, 1]} : vector<16x128xf32> to vector<2x128xf32>
    %387 = arith.truncf %385 : vector<2x32xf32> to vector<2x32xbf16>
    %cst_68 = arith.constant dense<0.000000e+00> : vector<2x128xf32>
    %388 = tpu.matmul %387, %25, %cst_68 {dimension_numbers = #tpu.dot_dimension_numbers<[1], [0], [0], [1], [0, 0, 1, 1], [], []>} : vector<2x32xbf16>, vector<32x128xbf16>, vector<2x128xf32> -> vector<2x128xf32>
    %389 = arith.addf %386, %388 : vector<2x128xf32>
    %390 = vector.extract_strided_slice %389 {offsets = [0, 0], sizes = [2, 32], strides = [1, 1]} : vector<2x128xf32> to vector<2x32xf32>
    %391 = arith.negf %390 : vector<2x32xf32>
    %392 = math.exp %391 : vector<2x32xf32>
    %cst_69 = arith.constant 1.000000e+00 : f32
    %393 = vector.broadcast %cst_69 : f32 to vector<2x32xf32>
    %394 = arith.addf %393, %392 : vector<2x32xf32>
    %395 = arith.divf %393, %394 : vector<2x32xf32>
    %396 = vector.extract_strided_slice %389 {offsets = [0, 32], sizes = [2, 32], strides = [1, 1]} : vector<2x128xf32> to vector<2x32xf32>
    %397 = arith.negf %396 : vector<2x32xf32>
    %398 = math.exp %397 : vector<2x32xf32>
    %cst_70 = arith.constant 1.000000e+00 : f32
    %399 = vector.broadcast %cst_70 : f32 to vector<2x32xf32>
    %400 = arith.addf %399, %398 : vector<2x32xf32>
    %401 = arith.divf %399, %400 : vector<2x32xf32>
    %402 = vector.extract_strided_slice %389 {offsets = [0, 64], sizes = [2, 32], strides = [1, 1]} : vector<2x128xf32> to vector<2x32xf32>
    %403 = math.tanh %402 : vector<2x32xf32>
    %404 = vector.extract_strided_slice %389 {offsets = [0, 96], sizes = [2, 32], strides = [1, 1]} : vector<2x128xf32> to vector<2x32xf32>
    %405 = arith.negf %404 : vector<2x32xf32>
    %406 = math.exp %405 : vector<2x32xf32>
    %cst_71 = arith.constant 1.000000e+00 : f32
    %407 = vector.broadcast %cst_71 : f32 to vector<2x32xf32>
    %408 = arith.addf %407, %406 : vector<2x32xf32>
    %409 = arith.divf %407, %408 : vector<2x32xf32>
    %410 = arith.mulf %401, %383 : vector<2x32xf32>
    %411 = arith.mulf %395, %403 : vector<2x32xf32>
    %412 = arith.addf %410, %411 : vector<2x32xf32>
    %413 = math.tanh %412 : vector<2x32xf32>
    %414 = arith.mulf %409, %413 : vector<2x32xf32>
    %415 = vector.extract_strided_slice %267 {offsets = [10, 0], sizes = [2, 128], strides = [1, 1]} : vector<16x128xf32> to vector<2x128xf32>
    %416 = arith.truncf %414 : vector<2x32xf32> to vector<2x32xbf16>
    %cst_72 = arith.constant dense<0.000000e+00> : vector<2x128xf32>
    %417 = tpu.matmul %416, %25, %cst_72 {dimension_numbers = #tpu.dot_dimension_numbers<[1], [0], [0], [1], [0, 0, 1, 1], [], []>} : vector<2x32xbf16>, vector<32x128xbf16>, vector<2x128xf32> -> vector<2x128xf32>
    %418 = arith.addf %415, %417 : vector<2x128xf32>
    %419 = vector.extract_strided_slice %418 {offsets = [0, 0], sizes = [2, 32], strides = [1, 1]} : vector<2x128xf32> to vector<2x32xf32>
    %420 = arith.negf %419 : vector<2x32xf32>
    %421 = math.exp %420 : vector<2x32xf32>
    %cst_73 = arith.constant 1.000000e+00 : f32
    %422 = vector.broadcast %cst_73 : f32 to vector<2x32xf32>
    %423 = arith.addf %422, %421 : vector<2x32xf32>
    %424 = arith.divf %422, %423 : vector<2x32xf32>
    %425 = vector.extract_strided_slice %418 {offsets = [0, 32], sizes = [2, 32], strides = [1, 1]} : vector<2x128xf32> to vector<2x32xf32>
    %426 = arith.negf %425 : vector<2x32xf32>
    %427 = math.exp %426 : vector<2x32xf32>
    %cst_74 = arith.constant 1.000000e+00 : f32
    %428 = vector.broadcast %cst_74 : f32 to vector<2x32xf32>
    %429 = arith.addf %428, %427 : vector<2x32xf32>
    %430 = arith.divf %428, %429 : vector<2x32xf32>
    %431 = vector.extract_strided_slice %418 {offsets = [0, 64], sizes = [2, 32], strides = [1, 1]} : vector<2x128xf32> to vector<2x32xf32>
    %432 = math.tanh %431 : vector<2x32xf32>
    %433 = vector.extract_strided_slice %418 {offsets = [0, 96], sizes = [2, 32], strides = [1, 1]} : vector<2x128xf32> to vector<2x32xf32>
    %434 = arith.negf %433 : vector<2x32xf32>
    %435 = math.exp %434 : vector<2x32xf32>
    %cst_75 = arith.constant 1.000000e+00 : f32
    %436 = vector.broadcast %cst_75 : f32 to vector<2x32xf32>
    %437 = arith.addf %436, %435 : vector<2x32xf32>
    %438 = arith.divf %436, %437 : vector<2x32xf32>
    %439 = arith.mulf %430, %412 : vector<2x32xf32>
    %440 = arith.mulf %424, %432 : vector<2x32xf32>
    %441 = arith.addf %439, %440 : vector<2x32xf32>
    %442 = math.tanh %441 : vector<2x32xf32>
    %443 = arith.mulf %438, %442 : vector<2x32xf32>
    %444 = vector.extract_strided_slice %267 {offsets = [12, 0], sizes = [2, 128], strides = [1, 1]} : vector<16x128xf32> to vector<2x128xf32>
    %445 = arith.truncf %443 : vector<2x32xf32> to vector<2x32xbf16>
    %cst_76 = arith.constant dense<0.000000e+00> : vector<2x128xf32>
    %446 = tpu.matmul %445, %25, %cst_76 {dimension_numbers = #tpu.dot_dimension_numbers<[1], [0], [0], [1], [0, 0, 1, 1], [], []>} : vector<2x32xbf16>, vector<32x128xbf16>, vector<2x128xf32> -> vector<2x128xf32>
    %447 = arith.addf %444, %446 : vector<2x128xf32>
    %448 = vector.extract_strided_slice %447 {offsets = [0, 0], sizes = [2, 32], strides = [1, 1]} : vector<2x128xf32> to vector<2x32xf32>
    %449 = arith.negf %448 : vector<2x32xf32>
    %450 = math.exp %449 : vector<2x32xf32>
    %cst_77 = arith.constant 1.000000e+00 : f32
    %451 = vector.broadcast %cst_77 : f32 to vector<2x32xf32>
    %452 = arith.addf %451, %450 : vector<2x32xf32>
    %453 = arith.divf %451, %452 : vector<2x32xf32>
    %454 = vector.extract_strided_slice %447 {offsets = [0, 32], sizes = [2, 32], strides = [1, 1]} : vector<2x128xf32> to vector<2x32xf32>
    %455 = arith.negf %454 : vector<2x32xf32>
    %456 = math.exp %455 : vector<2x32xf32>
    %cst_78 = arith.constant 1.000000e+00 : f32
    %457 = vector.broadcast %cst_78 : f32 to vector<2x32xf32>
    %458 = arith.addf %457, %456 : vector<2x32xf32>
    %459 = arith.divf %457, %458 : vector<2x32xf32>
    %460 = vector.extract_strided_slice %447 {offsets = [0, 64], sizes = [2, 32], strides = [1, 1]} : vector<2x128xf32> to vector<2x32xf32>
    %461 = math.tanh %460 : vector<2x32xf32>
    %462 = vector.extract_strided_slice %447 {offsets = [0, 96], sizes = [2, 32], strides = [1, 1]} : vector<2x128xf32> to vector<2x32xf32>
    %463 = arith.negf %462 : vector<2x32xf32>
    %464 = math.exp %463 : vector<2x32xf32>
    %cst_79 = arith.constant 1.000000e+00 : f32
    %465 = vector.broadcast %cst_79 : f32 to vector<2x32xf32>
    %466 = arith.addf %465, %464 : vector<2x32xf32>
    %467 = arith.divf %465, %466 : vector<2x32xf32>
    %468 = arith.mulf %459, %441 : vector<2x32xf32>
    %469 = arith.mulf %453, %461 : vector<2x32xf32>
    %470 = arith.addf %468, %469 : vector<2x32xf32>
    %471 = math.tanh %470 : vector<2x32xf32>
    %472 = arith.mulf %467, %471 : vector<2x32xf32>
    %473 = vector.extract_strided_slice %267 {offsets = [14, 0], sizes = [2, 128], strides = [1, 1]} : vector<16x128xf32> to vector<2x128xf32>
    %474 = arith.truncf %472 : vector<2x32xf32> to vector<2x32xbf16>
    %cst_80 = arith.constant dense<0.000000e+00> : vector<2x128xf32>
    %475 = tpu.matmul %474, %25, %cst_80 {dimension_numbers = #tpu.dot_dimension_numbers<[1], [0], [0], [1], [0, 0, 1, 1], [], []>} : vector<2x32xbf16>, vector<32x128xbf16>, vector<2x128xf32> -> vector<2x128xf32>
    %476 = arith.addf %473, %475 : vector<2x128xf32>
    %477 = vector.extract_strided_slice %476 {offsets = [0, 0], sizes = [2, 32], strides = [1, 1]} : vector<2x128xf32> to vector<2x32xf32>
    %478 = arith.negf %477 : vector<2x32xf32>
    %479 = math.exp %478 : vector<2x32xf32>
    %cst_81 = arith.constant 1.000000e+00 : f32
    %480 = vector.broadcast %cst_81 : f32 to vector<2x32xf32>
    %481 = arith.addf %480, %479 : vector<2x32xf32>
    %482 = arith.divf %480, %481 : vector<2x32xf32>
    %483 = vector.extract_strided_slice %476 {offsets = [0, 32], sizes = [2, 32], strides = [1, 1]} : vector<2x128xf32> to vector<2x32xf32>
    %484 = arith.negf %483 : vector<2x32xf32>
    %485 = math.exp %484 : vector<2x32xf32>
    %cst_82 = arith.constant 1.000000e+00 : f32
    %486 = vector.broadcast %cst_82 : f32 to vector<2x32xf32>
    %487 = arith.addf %486, %485 : vector<2x32xf32>
    %488 = arith.divf %486, %487 : vector<2x32xf32>
    %489 = vector.extract_strided_slice %476 {offsets = [0, 64], sizes = [2, 32], strides = [1, 1]} : vector<2x128xf32> to vector<2x32xf32>
    %490 = math.tanh %489 : vector<2x32xf32>
    %491 = vector.extract_strided_slice %476 {offsets = [0, 96], sizes = [2, 32], strides = [1, 1]} : vector<2x128xf32> to vector<2x32xf32>
    %492 = arith.negf %491 : vector<2x32xf32>
    %493 = math.exp %492 : vector<2x32xf32>
    %cst_83 = arith.constant 1.000000e+00 : f32
    %494 = vector.broadcast %cst_83 : f32 to vector<2x32xf32>
    %495 = arith.addf %494, %493 : vector<2x32xf32>
    %496 = arith.divf %494, %495 : vector<2x32xf32>
    %497 = arith.mulf %488, %470 : vector<2x32xf32>
    %498 = arith.mulf %482, %490 : vector<2x32xf32>
    %499 = arith.addf %497, %498 : vector<2x32xf32>
    %500 = math.tanh %499 : vector<2x32xf32>
    %501 = arith.mulf %496, %500 : vector<2x32xf32>
    %502 = vector.shape_cast %298 : vector<2x32xf32> to vector<2x1x32xf32>
    %503 = vector.shape_cast %327 : vector<2x32xf32> to vector<2x1x32xf32>
    %504 = vector.shape_cast %356 : vector<2x32xf32> to vector<2x1x32xf32>
    %505 = vector.shape_cast %385 : vector<2x32xf32> to vector<2x1x32xf32>
    %506 = vector.shape_cast %414 : vector<2x32xf32> to vector<2x1x32xf32>
    %507 = vector.shape_cast %443 : vector<2x32xf32> to vector<2x1x32xf32>
    %508 = vector.shape_cast %472 : vector<2x32xf32> to vector<2x1x32xf32>
    %509 = vector.shape_cast %501 : vector<2x32xf32> to vector<2x1x32xf32>
    %510 = tpu.concatenate %502, %503, %504, %505, %506, %507, %508, %509 in 1 : vector<2x1x32xf32>, vector<2x1x32xf32>, vector<2x1x32xf32>, vector<2x1x32xf32>, vector<2x1x32xf32>, vector<2x1x32xf32>, vector<2x1x32xf32>, vector<2x1x32xf32> -> vector<2x8x32xf32>
    %511 = vector.shape_cast %510 : vector<2x8x32xf32> to vector<16x32xf32>
    %512 = arith.truncf %511 : vector<16x32xf32> to vector<16x32xbf16>
    %c208 = arith.constant 208 : index
    %c0_84 = arith.constant 0 : index
    %513 = vector.load %arg2[%c208, %c0_84] : memref<464x128xf32, #tpu.memory_space<vmem>>, vector<32x96xf32>
    %514 = arith.truncf %513 : vector<32x96xf32> to vector<32x96xbf16>
    %cst_85 = arith.constant dense<0.000000e+00> : vector<16x96xf32>
    %515 = tpu.matmul %512, %514, %cst_85 {dimension_numbers = #tpu.dot_dimension_numbers<[1], [0], [0], [1], [0, 0, 1, 1], [], []>} : vector<16x32xbf16>, vector<32x96xbf16>, vector<16x96xf32> -> vector<16x96xf32>
    %c424 = arith.constant 424 : index
    %c0_86 = arith.constant 0 : index
    %516 = vector.load %arg2[%c424, %c0_86] : memref<464x128xf32, #tpu.memory_space<vmem>>, vector<1x96xf32>
    %517 = vector.broadcast %516 : vector<1x96xf32> to vector<16x96xf32>
    %518 = arith.addf %515, %517 : vector<16x96xf32>
    %519 = vector.shape_cast %518 : vector<16x96xf32> to vector<2x8x96xf32>
    %520 = vector.extract_strided_slice %519 {offsets = [0, 0, 0], sizes = [2, 8, 24], strides = [1, 1, 1]} : vector<2x8x96xf32> to vector<2x8x24xf32>
    %521 = vector.extract_strided_slice %519 {offsets = [0, 0, 24], sizes = [2, 8, 24], strides = [1, 1, 1]} : vector<2x8x96xf32> to vector<2x8x24xf32>
    %522 = vector.extract_strided_slice %519 {offsets = [0, 0, 48], sizes = [2, 8, 24], strides = [1, 1, 1]} : vector<2x8x96xf32> to vector<2x8x24xf32>
    %523 = vector.extract_strided_slice %519 {offsets = [0, 0, 72], sizes = [2, 8, 24], strides = [1, 1, 1]} : vector<2x8x96xf32> to vector<2x8x24xf32>
    %524 = tpu.concatenate %520, %521, %522, %523 in 0 : vector<2x8x24xf32>, vector<2x8x24xf32>, vector<2x8x24xf32>, vector<2x8x24xf32> -> vector<8x8x24xf32>
    %525 = vector.extract_strided_slice %524 {offsets = [0, 0, 0], sizes = [8, 8, 8], strides = [1, 1, 1]} : vector<8x8x24xf32> to vector<8x8x8xf32>
    %526 = arith.truncf %525 : vector<8x8x8xf32> to vector<8x8x8xbf16>
    %527 = vector.extract_strided_slice %524 {offsets = [0, 0, 8], sizes = [8, 8, 8], strides = [1, 1, 1]} : vector<8x8x24xf32> to vector<8x8x8xf32>
    %528 = arith.truncf %527 : vector<8x8x8xf32> to vector<8x8x8xbf16>
    %529 = vector.extract_strided_slice %524 {offsets = [0, 0, 16], sizes = [8, 8, 8], strides = [1, 1, 1]} : vector<8x8x24xf32> to vector<8x8x8xf32>
    %530 = arith.truncf %529 : vector<8x8x8xf32> to vector<8x8x8xbf16>
    "tpu.trace_start"() <{level = 10 : i32, message = "nqd,nkd->nqk"}> : () -> ()
    %cst_87 = arith.constant dense<0.000000e+00> : vector<8x8x8xf32>
    %531 = tpu.matmul %526, %528, %cst_87 {dimension_numbers = #tpu.dot_dimension_numbers<[2], [2], [1], [1], [0, 0, 0, 1, 1, 1], [0], [0]>} : vector<8x8x8xbf16>, vector<8x8x8xbf16>, vector<8x8x8xf32> -> vector<8x8x8xf32>
    "tpu.trace_stop"() : () -> ()
    %cst_88 = arith.constant 0.353553385 : f32
    %532 = vector.broadcast %cst_88 : f32 to vector<8x8x8xf32>
    %533 = arith.mulf %531, %532 : vector<8x8x8xf32>
    %cst_89 = arith.constant dense<0xFF800000> : vector<8x8xf32>
    %534 = vector.multi_reduction <maximumf>, %533, %cst_89 [2] : vector<8x8x8xf32> to vector<8x8xf32>
    %535 = vector.shape_cast %534 : vector<8x8xf32> to vector<8x8x1xf32>
    %536 = vector.broadcast %535 : vector<8x8x1xf32> to vector<8x8x8xf32>
    %537 = arith.subf %533, %536 : vector<8x8x8xf32>
    %538 = math.exp %537 : vector<8x8x8xf32>
    %cst_90 = arith.constant dense<0.000000e+00> : vector<8x8xf32>
    %539 = vector.multi_reduction <add>, %538, %cst_90 [2] : vector<8x8x8xf32> to vector<8x8xf32>
    %540 = vector.shape_cast %539 : vector<8x8xf32> to vector<8x8x1xf32>
    %541 = tpu.reciprocal %540 {approx = true} : vector<8x8x1xf32> -> vector<8x8x1xf32>
    %542 = vector.broadcast %541 : vector<8x8x1xf32> to vector<8x8x8xf32>
    %543 = arith.mulf %538, %542 : vector<8x8x8xf32>
    %544 = arith.truncf %543 : vector<8x8x8xf32> to vector<8x8x8xbf16>
    "tpu.trace_start"() <{level = 10 : i32, message = "nqk,nkd->nqd"}> : () -> ()
    %cst_91 = arith.constant dense<0.000000e+00> : vector<8x8x8xf32>
    %545 = tpu.matmul %544, %530, %cst_91 {dimension_numbers = #tpu.dot_dimension_numbers<[2], [1], [1], [2], [0, 0, 0, 1, 1, 2], [0], [0]>} : vector<8x8x8xbf16>, vector<8x8x8xbf16>, vector<8x8x8xf32> -> vector<8x8x8xf32>
    "tpu.trace_stop"() : () -> ()
    %546 = vector.extract_strided_slice %543 {offsets = [0, 0, 0], sizes = [2, 8, 8], strides = [1, 1, 1]} : vector<8x8x8xf32> to vector<2x8x8xf32>
    %547 = vector.extract_strided_slice %543 {offsets = [2, 0, 0], sizes = [2, 8, 8], strides = [1, 1, 1]} : vector<8x8x8xf32> to vector<2x8x8xf32>
    %548 = arith.addf %546, %547 : vector<2x8x8xf32>
    %549 = vector.extract_strided_slice %543 {offsets = [4, 0, 0], sizes = [2, 8, 8], strides = [1, 1, 1]} : vector<8x8x8xf32> to vector<2x8x8xf32>
    %550 = arith.addf %548, %549 : vector<2x8x8xf32>
    %551 = vector.extract_strided_slice %543 {offsets = [6, 0, 0], sizes = [2, 8, 8], strides = [1, 1, 1]} : vector<8x8x8xf32> to vector<2x8x8xf32>
    %552 = arith.addf %550, %551 : vector<2x8x8xf32>
    %cst_92 = arith.constant 2.500000e-01 : f32
    %553 = vector.broadcast %cst_92 : f32 to vector<2x8x8xf32>
    %554 = arith.mulf %552, %553 : vector<2x8x8xf32>
    %555 = vector.extract_strided_slice %545 {offsets = [0, 0, 0], sizes = [2, 8, 8], strides = [1, 1, 1]} : vector<8x8x8xf32> to vector<2x8x8xf32>
    %556 = vector.extract_strided_slice %545 {offsets = [2, 0, 0], sizes = [2, 8, 8], strides = [1, 1, 1]} : vector<8x8x8xf32> to vector<2x8x8xf32>
    %557 = vector.extract_strided_slice %545 {offsets = [4, 0, 0], sizes = [2, 8, 8], strides = [1, 1, 1]} : vector<8x8x8xf32> to vector<2x8x8xf32>
    %558 = vector.extract_strided_slice %545 {offsets = [6, 0, 0], sizes = [2, 8, 8], strides = [1, 1, 1]} : vector<8x8x8xf32> to vector<2x8x8xf32>
    %559 = tpu.concatenate %555, %556, %557, %558 in 2 : vector<2x8x8xf32>, vector<2x8x8xf32>, vector<2x8x8xf32>, vector<2x8x8xf32> -> vector<2x8x32xf32>
    %560 = vector.shape_cast %559 : vector<2x8x32xf32> to vector<16x32xf32>
    %561 = arith.truncf %560 : vector<16x32xf32> to vector<16x32xbf16>
    %c240 = arith.constant 240 : index
    %c0_93 = arith.constant 0 : index
    %562 = vector.load %arg2[%c240, %c0_93] : memref<464x128xf32, #tpu.memory_space<vmem>>, vector<32x32xf32>
    %563 = arith.truncf %562 : vector<32x32xf32> to vector<32x32xbf16>
    %cst_94 = arith.constant dense<0.000000e+00> : vector<16x32xf32>
    %564 = tpu.matmul %561, %563, %cst_94 {dimension_numbers = #tpu.dot_dimension_numbers<[1], [0], [0], [1], [0, 0, 1, 1], [], []>} : vector<16x32xbf16>, vector<32x32xbf16>, vector<16x32xf32> -> vector<16x32xf32>
    %c432 = arith.constant 432 : index
    %c0_95 = arith.constant 0 : index
    %565 = vector.load %arg2[%c432, %c0_95] : memref<464x128xf32, #tpu.memory_space<vmem>>, vector<1x32xf32>
    %566 = vector.broadcast %565 : vector<1x32xf32> to vector<16x32xf32>
    %567 = arith.addf %564, %566 : vector<16x32xf32>
    %568 = arith.truncf %567 : vector<16x32xf32> to vector<16x32xbf16>
    %c272 = arith.constant 272 : index
    %c0_96 = arith.constant 0 : index
    %569 = vector.load %arg2[%c272, %c0_96] : memref<464x128xf32, #tpu.memory_space<vmem>>, vector<32x64xf32>
    %570 = arith.truncf %569 : vector<32x64xf32> to vector<32x64xbf16>
    %cst_97 = arith.constant dense<0.000000e+00> : vector<16x64xf32>
    %571 = tpu.matmul %568, %570, %cst_97 {dimension_numbers = #tpu.dot_dimension_numbers<[1], [0], [0], [1], [0, 0, 1, 1], [], []>} : vector<16x32xbf16>, vector<32x64xbf16>, vector<16x64xf32> -> vector<16x64xf32>
    %c440 = arith.constant 440 : index
    %c0_98 = arith.constant 0 : index
    %572 = vector.load %arg2[%c440, %c0_98] : memref<464x128xf32, #tpu.memory_space<vmem>>, vector<1x64xf32>
    %573 = vector.broadcast %572 : vector<1x64xf32> to vector<16x64xf32>
    %574 = arith.addf %571, %573 : vector<16x64xf32>
    %cst_99 = arith.constant 0.000000e+00 : f32
    %575 = vector.broadcast %cst_99 : f32 to vector<16x64xf32>
    %576 = arith.maximumf %574, %575 : vector<16x64xf32>
    %577 = arith.truncf %576 : vector<16x64xf32> to vector<16x64xbf16>
    %c304 = arith.constant 304 : index
    %c0_100 = arith.constant 0 : index
    %578 = vector.load %arg2[%c304, %c0_100] : memref<464x128xf32, #tpu.memory_space<vmem>>, vector<64x16xf32>
    %579 = arith.truncf %578 : vector<64x16xf32> to vector<64x16xbf16>
    %cst_101 = arith.constant dense<0.000000e+00> : vector<16x16xf32>
    %580 = tpu.matmul %577, %579, %cst_101 {dimension_numbers = #tpu.dot_dimension_numbers<[1], [0], [0], [1], [0, 0, 1, 1], [], []>} : vector<16x64xbf16>, vector<64x16xbf16>, vector<16x16xf32> -> vector<16x16xf32>
    %c448 = arith.constant 448 : index
    %c0_102 = arith.constant 0 : index
    %581 = vector.load %arg2[%c448, %c0_102] : memref<464x128xf32, #tpu.memory_space<vmem>>, vector<1x16xf32>
    %582 = vector.broadcast %581 : vector<1x16xf32> to vector<16x16xf32>
    %583 = arith.addf %580, %582 : vector<16x16xf32>
    %cst_103 = arith.constant dense<0xFF800000> : vector<16xf32>
    %584 = vector.multi_reduction <maximumf>, %583, %cst_103 [1] : vector<16x16xf32> to vector<16xf32>
    %585 = vector.shape_cast %584 : vector<16xf32> to vector<16x1xf32>
    %586 = vector.broadcast %585 : vector<16x1xf32> to vector<16x16xf32>
    %587 = arith.subf %583, %586 : vector<16x16xf32>
    %588 = math.exp %587 : vector<16x16xf32>
    %cst_104 = arith.constant dense<0.000000e+00> : vector<16xf32>
    %589 = vector.multi_reduction <add>, %588, %cst_104 [1] : vector<16x16xf32> to vector<16xf32>
    %590 = vector.shape_cast %589 : vector<16xf32> to vector<16x1xf32>
    %591 = tpu.reciprocal %590 {approx = true} : vector<16x1xf32> -> vector<16x1xf32>
    %592 = vector.broadcast %591 : vector<16x1xf32> to vector<16x16xf32>
    %593 = arith.mulf %588, %592 : vector<16x16xf32>
    %594 = arith.truncf %567 : vector<16x32xf32> to vector<16x32xbf16>
    %c368 = arith.constant 368 : index
    %c0_105 = arith.constant 0 : index
    %595 = vector.load %arg2[%c368, %c0_105] : memref<464x128xf32, #tpu.memory_space<vmem>>, vector<32x4xf32>
    %596 = arith.truncf %595 : vector<32x4xf32> to vector<32x4xbf16>
    %cst_106 = arith.constant dense<0.000000e+00> : vector<16x4xf32>
    %597 = tpu.matmul %594, %596, %cst_106 {dimension_numbers = #tpu.dot_dimension_numbers<[1], [0], [0], [1], [0, 0, 1, 1], [], []>} : vector<16x32xbf16>, vector<32x4xbf16>, vector<16x4xf32> -> vector<16x4xf32>
    %c456 = arith.constant 456 : index
    %c0_107 = arith.constant 0 : index
    %598 = vector.load %arg2[%c456, %c0_107] : memref<464x128xf32, #tpu.memory_space<vmem>>, vector<1x4xf32>
    %599 = vector.broadcast %598 : vector<1x4xf32> to vector<16x4xf32>
    %600 = arith.addf %597, %599 : vector<16x4xf32>
    %cst_108 = arith.constant 0.000000e+00 : f32
    %601 = vector.broadcast %cst_108 : f32 to vector<16x100xf32>
    %602 = vector.shape_cast %554 : vector<2x8x8xf32> to vector<16x8xf32>
    %603 = tpu.concatenate %593, %600, %602, %601 in 1 : vector<16x16xf32>, vector<16x4xf32>, vector<16x8xf32>, vector<16x100xf32> -> vector<16x128xf32>
    %c0_109 = arith.constant 0 : index
    %c0_110 = arith.constant 0 : index
    %604 = vector.load %arg3[%c0_109, %c0_110] : memref<16x128xf32, #tpu.memory_space<vmem>>, vector<16x128xf32>
    tpu.vector_store %arg3[%c0_109, %c0_110], %603 {strides = array<i32>} : memref<16x128xf32, #tpu.memory_space<vmem>>, vector<16x128xf32>,
    %c0_111 = arith.constant 0 : index
    %c0_112 = arith.constant 0 : index
    %c0_113 = arith.constant 0 : index
    %605 = vector.load %arg4[%c0_111, %c0_112, %c0_113] : memref<2x2x32xf32, #tpu.memory_space<vmem>>, vector<1x2x32xf32>
    %606 = vector.shape_cast %605 : vector<1x2x32xf32> to vector<2x32xf32>
    %607 = vector.shape_cast %259 : vector<2x32xf32> to vector<1x2x32xf32>
    tpu.vector_store %arg4[%c0_111, %c0_112, %c0_113], %607 {strides = array<i32>} : memref<2x2x32xf32, #tpu.memory_space<vmem>>, vector<1x2x32xf32>,
    %c1 = arith.constant 1 : index
    %c0_114 = arith.constant 0 : index
    %c0_115 = arith.constant 0 : index
    %608 = vector.load %arg4[%c1, %c0_114, %c0_115] : memref<2x2x32xf32, #tpu.memory_space<vmem>>, vector<1x2x32xf32>
    %609 = vector.shape_cast %608 : vector<1x2x32xf32> to vector<2x32xf32>
    %610 = vector.shape_cast %501 : vector<2x32xf32> to vector<1x2x32xf32>
    tpu.vector_store %arg4[%c1, %c0_114, %c0_115], %610 {strides = array<i32>} : memref<2x2x32xf32, #tpu.memory_space<vmem>>, vector<1x2x32xf32>,
    return
  }
}

</mosaic_0001>

<llo_original>
// kernel: adaptive_path_forward.1
$region0: #{adaptive_path_forward.1}
  #allocation0 [shape = 'u32[]', space=smem, size = 0x4, offset = 0x4, fixed_abs, tag = 'smem constant byte address 0x4 - core index']
  #allocation1 [shape = 'u32[144,128]{1,0:T(1,128)}', space=vmem, size = 0x12000, scoped, tag = 'internal scratch']
  %s0 = inlined_call_operand.vmem [shape: f32[2,32], index: 0, kind: input, shape index: {}]
  %s1 = inlined_call_operand.vmem [shape: f32[16,16], index: 1, kind: input, shape index: {}]
  %s2 = inlined_call_operand.hbm [shape: f32[464,128], index: 2, kind: input, shape index: {}]
  %s3 = inlined_call_operand.vmem [shape: f32[16,128], index: 3, kind: output, shape index: {0}]
  %s4 = inlined_call_operand.hbm [shape: f32[2,2,32], index: 4, kind: output, shape index: {1}]
  %5 = xla_tuple %s3, %s4
  %s6 = sld [smem:[#allocation0]]
  $region34: #{adaptive_path_forward.1} parent=0
    _
  %s8 = ssub.s32 1, %s6
  %s9 = scalar_select 0, %s8, %s6
  $region1: #{adaptive_path_forward.1} parent=0
    #allocation2 [shape = 'u8[237568]{0}', space=vmem, size = 0x3a000, scoped, tag = 'input window, operand 2, single buffered']
    #allocation3 [shape = 's32[1]{0}', space=sflag, size = 0x4, scoped, tag = 'scoped memory for adaptive_path_forward.1']
    #allocation4 [shape = 's32[1]{0}', space=sflag, size = 0x4, scoped, tag = 'scoped memory for adaptive_path_forward.1']
    #allocation5 [shape = 'u8[2048]{0}', space=vmem, size = 0x800, scoped, tag = 'output window, operand 1, single buffered']
    %10 = vsyncpa [#allocation3], 0
    %11 = vsyncpa [#allocation4], 0
    // Predicated region
    $region2: #{adaptive_path_forward.1} parent=1 // pred_check
      _
    $region3: #{adaptive_path_forward.1} parent=1 // pred_check_branch
      %13 = sbr.rel (0) target = $region5
    $region4: #{adaptive_path_forward.1} parent=1 // pred_region
      _
    $region5: #{adaptive_path_forward.1} parent=1 // pred_fallthru
      _
    // Predicated region
    $region6: #{adaptive_path_forward.1} parent=1 // pred_check
      _
    $region7: #{adaptive_path_forward.1} parent=1 // pred_check_branch
      %15 = sbr.rel (0) target = $region9
    $region8: #{adaptive_path_forward.1} parent=1 // pred_region
      _
    $region9: #{adaptive_path_forward.1} parent=1 // pred_fallthru
      _
    // Predicated region
    $region10: #{adaptive_path_forward.1} parent=1 // pred_check
      _
    $region11: #{adaptive_path_forward.1} parent=1 // pred_check_branch
      %17 = sbr.rel (0) target = $region13
    $region12: #{adaptive_path_forward.1} parent=1 // pred_region
      %s19 = ssub.s32 7424, 7424
      %20 = vsyncadd [#allocation3], %s19
      %s21 = sshll.u32 [#allocation2], 4
      %s22 = int_to_ptr.vmem [resolvable:$true] %s21
      %27 = dma.hbm_to_vmem [thread:$0]  %s2, 7424, %s22, [#allocation3], 128, 128, 8
    $region13: #{adaptive_path_forward.1} parent=1 // pred_fallthru
      _
    // Predicated region
    $region14: #{adaptive_path_forward.1} parent=1 // pred_check
      _
    $region15: #{adaptive_path_forward.1} parent=1 // pred_check_branch
      %29 = sbr.rel (0) target = $region17
    $region16: #{adaptive_path_forward.1} parent=1 // pred_region
      %30 = dma.done [#allocation3], 7424
    $region17: #{adaptive_path_forward.1} parent=1 // pred_fallthru
      _
    %v32 = vld [vmem:[%s0] sm:$0x3]
    %v33 = vpack.c.bf16 %v32, %v32
    %v34 = vld [vmem:[#allocation2 + $0xb0] sm:$0xff]
    %v35 = vld [vmem:[#allocation2 + $0xb8] sm:$0xff]
    %v36 = vld [vmem:[#allocation2 + $0xc0] sm:$0xff]
    %v37 = vld [vmem:[#allocation2 + $0xc8] sm:$0xff]
    %v38 = vpack.c.bf16 %v35, %v34
    %v39 = vpack.c.bf16 %v37, %v36
    %v40 = vld [vmem:[#allocation2 + $0x1a0] sm:$0x1]
    %v41 = vlaneseq
    %v42 = vshrl.u32 %v41, 7
    %v43 = vsub.s32 0, %v42
    %v44 = vrot.slane %v40, %v43
    %vm45 = vcmask 261120
    %v47 = vsel %vm45, %v33, 0
    %49 = vmatprep.subr.bf16.mxu0 0
    %50 = vmatpush1.bf16.msra.mxu0 %v38
    %51 = vmatprep.subr.bf16.mxu0 0
    %52 = vmatpush1.bf16.msra.mxu0 %v39
    %53 = vmatprep.subr.bf16.mxu0 0
    %54 = vmatpush1.bf16.msra.mxu0 0
    %55 = vmatprep.subr.bf16.mxu0 0
    %56 = vmatpush1.bf16.msra.mxu0 0
    %57 = vmatprep.subr.bf16.mxu0 0
    %58 = vmatpush1.bf16.msra.mxu0 0
    %59 = vmatprep.subr.bf16.mxu0 0
    %60 = vmatpush1.bf16.msra.mxu0 0
    %61 = vmatprep.subr.bf16.mxu0 0
    %62 = vmatpush1.bf16.msra.mxu0 0
    %63 = vmatprep.subr.bf16.mxu0 0
    %64 = vmatpush1.bf16.msra.mxu0 0
    %65 = vmatprep.subr.bf16.mxu0 0
    %66 = vmatpush1.bf16.msra.mxu0 0
    %67 = vmatprep.subr.bf16.mxu0 0
    %68 = vmatpush1.bf16.msra.mxu0 0
    %69 = vmatprep.subr.bf16.mxu0 0
    %70 = vmatpush1.bf16.msra.mxu0 0
    %71 = vmatprep.subr.bf16.mxu0 0
    %72 = vmatpush1.bf16.msra.mxu0 0
    %73 = vmatprep.subr.bf16.mxu0 0
    %74 = vmatpush1.bf16.msra.mxu0 0
    %75 = vmatprep.subr.bf16.mxu0 0
    %76 = vmatpush1.bf16.msra.mxu0 0
    %77 = vmatprep.subr.bf16.mxu0 0
    %78 = vmatpush1.bf16.msra.mxu0 0
    %79 = vmatprep.subr.bf16.mxu0 0
    %80 = vmatpush1.bf16.msra.mxu0 0
    %81 = vmatprep.mubr.bf16.mxu0 0
    %82 = vmatmul.mubr.bf16.gmra.mrb[0].mxu0 %v47
    %v83 = vpop.f32.mrb[0].mxu0
    %v84 = vadd.f32 %v44, %v83
    %v85 = vpop.f32.mrb[0].mxu0
    %v86 = vpop.f32.mrb[0].mxu0
    %v87 = vpop.f32.mrb[0].mxu0
    %88 = vdwg.mxu0
    %v89 = vpack.c.bf16 %v84, %v84
    %v90 = vld [vmem:[#allocation2] sm:$0xff]
    %v91 = vld [vmem:[#allocation2 + $0x8] sm:$0xff]
    %v92 = vld [vmem:[#allocation2 + $0x10] sm:$0xff]
    %v93 = vld [vmem:[#allocation2 + $0x18] sm:$0xff]
    %v94 = vld [vmem:[#allocation2 + $0x20] sm:$0xff]
    %v95 = vld [vmem:[#allocation2 + $0x28] sm:$0xff]
    %v96 = vld [vmem:[#allocation2 + $0x30] sm:$0xff]
    %v97 = vld [vmem:[#allocation2 + $0x38] sm:$0xff]
    %v98 = vpack.c.bf16 %v91, %v90
    %v99 = vpack.c.bf16 %v93, %v92
    %v100 = vpack.c.bf16 %v95, %v94
    %v101 = vpack.c.bf16 %v97, %v96
    %v102 = vld [vmem:[#allocation2 + $0x190] sm:$0x1]
    %v103 = vlaneseq
    %v104 = vshrl.u32 %v103, 7
    %v105 = vsub.s32 0, %v104
    %v106 = vrot.slane %v102, %v105
    %vm107 = vcmask 523264
    %v109 = vsel %vm107, %v89, 0
    %111 = vmatprep.subr.bf16.mxu0 0
    %112 = vmatpush1.bf16.msra.mxu0 %v98
    %113 = vmatprep.subr.bf16.mxu0 0
    %114 = vmatpush1.bf16.msra.mxu0 %v99
    %115 = vmatprep.subr.bf16.mxu0 0
    %116 = vmatpush1.bf16.msra.mxu0 %v100
    %117 = vmatprep.subr.bf16.mxu0 0
    %118 = vmatpush1.bf16.msra.mxu0 %v101
    %119 = vmatprep.subr.bf16.mxu0 0
    %120 = vmatpush1.bf16.msra.mxu0 0
    %121 = vmatprep.subr.bf16.mxu0 0
    %122 = vmatpush1.bf16.msra.mxu0 0
    %123 = vmatprep.subr.bf16.mxu0 0
    %124 = vmatpush1.bf16.msra.mxu0 0
    %125 = vmatprep.subr.bf16.mxu0 0
    %126 = vmatpush1.bf16.msra.mxu0 0
    %127 = vmatprep.subr.bf16.mxu0 0
    %128 = vmatpush1.bf16.msra.mxu0 0
    %129 = vmatprep.subr.bf16.mxu0 0
    %130 = vmatpush1.bf16.msra.mxu0 0
    %131 = vmatprep.subr.bf16.mxu0 0
    %132 = vmatpush1.bf16.msra.mxu0 0
    %133 = vmatprep.subr.bf16.mxu0 0
    %134 = vmatpush1.bf16.msra.mxu0 0
    %135 = vmatprep.subr.bf16.mxu0 0
    %136 = vmatpush1.bf16.msra.mxu0 0
    %137 = vmatprep.subr.bf16.mxu0 0
    %138 = vmatpush1.bf16.msra.mxu0 0
    %139 = vmatprep.subr.bf16.mxu0 0
    %140 = vmatpush1.bf16.msra.mxu0 0
    %141 = vmatprep.subr.bf16.mxu0 0
    %142 = vmatpush1.bf16.msra.mxu0 0
    %143 = vmatprep.mubr.bf16.mxu0 0
    %144 = vmatmul.mubr.bf16.gmra.mrb[0].mxu0 %v109
    %v145 = vpop.f32.mrb[0].mxu0
    %v146 = vadd.f32 %v106, %v145
    %v147 = vpop.f32.mrb[0].mxu0
    %v148 = vpop.f32.mrb[0].mxu0
    %v149 = vpop.f32.mrb[0].mxu0
    %150 = vdwg.mxu0
    %v151 = vld [vmem:[%s1] sm:$0xff]
    %v152 = vld [vmem:[%s1 + $0x8] sm:$0xff]
    %v153 = vpack.c.bf16 %v152, %v151
    %v154 = vld [vmem:[#allocation2 + $0x40] sm:$0xff]
    %v155 = vld [vmem:[#allocation2 + $0x48] sm:$0xff]
    %v156 = vpack.c.bf16 %v155, %v154
    %v158 = vrot.slane %v146, 6
    %v160 = vrot.slane %v146, 4
    %v162 = vrot.slane %v146, 2
    %vm164 = vcmask 1041408
    %v165 = vsel %vm164, %v146, %v158
    %vm166 = vcmask 1043456
    %v167 = vsel %vm166, %v165, %v160
    %vm168 = vcmask 1045504
    %v169 = vsel %vm168, %v167, %v162
    %vm170 = vcmask 130048
    %v172 = vsel %vm170, %v153, 0
    %174 = vmatprep.subr.bf16.mxu0 0
    %175 = vmatpush1.bf16.msra.mxu0 %v156
    %176 = vmatprep.subr.bf16.mxu0 0
    %177 = vmatpush1.bf16.msra.mxu0 0
    %178 = vmatprep.subr.bf16.mxu0 0
    %179 = vmatpush1.bf16.msra.mxu0 0
    %180 = vmatprep.subr.bf16.mxu0 0
    %181 = vmatpush1.bf16.msra.mxu0 0
    %182 = vmatprep.subr.bf16.mxu0 0
    %183 = vmatpush1.bf16.msra.mxu0 0
    %184 = vmatprep.subr.bf16.mxu0 0
    %185 = vmatpush1.bf16.msra.mxu0 0
    %186 = vmatprep.subr.bf16.mxu0 0
    %187 = vmatpush1.bf16.msra.mxu0 0
    %188 = vmatprep.subr.bf16.mxu0 0
    %189 = vmatpush1.bf16.msra.mxu0 0
    %190 = vmatprep.subr.bf16.mxu0 0
    %191 = vmatpush1.bf16.msra.mxu0 0
    %192 = vmatprep.subr.bf16.mxu0 0
    %193 = vmatpush1.bf16.msra.mxu0 0
    %194 = vmatprep.subr.bf16.mxu0 0
    %195 = vmatpush1.bf16.msra.mxu0 0
    %196 = vmatprep.subr.bf16.mxu0 0
    %197 = vmatpush1.bf16.msra.mxu0 0
    %198 = vmatprep.subr.bf16.mxu0 0
    %199 = vmatpush1.bf16.msra.mxu0 0
    %200 = vmatprep.subr.bf16.mxu0 0
    %201 = vmatpush1.bf16.msra.mxu0 0
    %202 = vmatprep.subr.bf16.mxu0 0
    %203 = vmatpush1.bf16.msra.mxu0 0
    %204 = vmatprep.subr.bf16.mxu0 0
    %205 = vmatpush1.bf16.msra.mxu0 0
    %206 = vmatprep.mubr.bf16.mxu0 0
    %207 = vmatmul.mubr.bf16.gmra.mrb[0].mxu0 %v172
    %v208 = vpop.f32.mrb[0].mxu0
    %v209 = vadd.f32 %v169, %v208
    %v210 = vpop.f32.mrb[0].mxu0
    %v211 = vpop.f32.mrb[0].mxu0
    %v212 = vadd.f32 %v169, %v211
    %v213 = vpop.f32.mrb[0].mxu0
    %214 = vdwg.mxu0
    %v215 = vld [vmem:[#allocation2 + $0x50] sm:$0xff]
    %v216 = vld [vmem:[#allocation2 + $0x58] sm:$0xff]
    %v217 = vld [vmem:[#allocation2 + $0x60] sm:$0xff]
    %v218 = vld [vmem:[#allocation2 + $0x68] sm:$0xff]
    %v219 = vpack.c.bf16 %v216, %v215
    %v220 = vpack.c.bf16 %v218, %v217
    %v221 = vld [vmem:[#allocation2 + $0x90] sm:$0xff]
    %v222 = vld [vmem:[#allocation2 + $0x98] sm:$0xff]
    %v223 = vld [vmem:[#allocation2 + $0xa0] sm:$0xff]
    %v224 = vld [vmem:[#allocation2 + $0xa8] sm:$0xff]
    %v225 = vpack.c.bf16 %v222, %v221
    %v226 = vpack.c.bf16 %v224, %v223
    %v228 = vsel %vm45, 0, 0
    %230 = vmatprep.subr.bf16.mxu0 0
    %231 = vmatpush1.bf16.msra.mxu0 %v219
    %232 = vmatprep.subr.bf16.mxu0 0
    %233 = vmatpush1.bf16.msra.mxu0 %v220
    %234 = vmatprep.subr.bf16.mxu0 0
    %235 = vmatpush1.bf16.msra.mxu0 0
    %236 = vmatprep.subr.bf16.mxu0 0
    %237 = vmatpush1.bf16.msra.mxu0 0
    %238 = vmatprep.subr.bf16.mxu0 0
    %239 = vmatpush1.bf16.msra.mxu0 0
    %240 = vmatprep.subr.bf16.mxu0 0
    %241 = vmatpush1.bf16.msra.mxu0 0
    %242 = vmatprep.subr.bf16.mxu0 0
    %243 = vmatpush1.bf16.msra.mxu0 0
    %244 = vmatprep.subr.bf16.mxu0 0
    %245 = vmatpush1.bf16.msra.mxu0 0
    %246 = vmatprep.subr.bf16.mxu0 0
    %247 = vmatpush1.bf16.msra.mxu0 0
    %248 = vmatprep.subr.bf16.mxu0 0
    %249 = vmatpush1.bf16.msra.mxu0 0
    %250 = vmatprep.subr.bf16.mxu0 0
    %251 = vmatpush1.bf16.msra.mxu0 0
    %252 = vmatprep.subr.bf16.mxu0 0
    %253 = vmatpush1.bf16.msra.mxu0 0
    %254 = vmatprep.subr.bf16.mxu0 0
    %255 = vmatpush1.bf16.msra.mxu0 0
    %256 = vmatprep.subr.bf16.mxu0 0
    %257 = vmatpush1.bf16.msra.mxu0 0
    %258 = vmatprep.subr.bf16.mxu0 0
    %259 = vmatpush1.bf16.msra.mxu0 0
    %260 = vmatprep.subr.bf16.mxu0 0
    %261 = vmatpush1.bf16.msra.mxu0 0
    %262 = vmatprep.mubr.bf16.mxu0 0
    %263 = vmatmul.mubr.bf16.gmra.mrb[0].mxu0 %v228
    %v264 = vpop.f32.mrb[0].mxu0
    %v265 = vadd.f32 0.0, %v264
    %v266 = vpop.f32.mrb[0].mxu0
    %v267 = vpop.f32.mrb[0].mxu0
    %v268 = vpop.f32.mrb[0].mxu0
    %269 = vdwg.mxu0
    %v270 = vadd.f32 %v209, %v265
    %v271 = vxor.u32 %v270, 2147483648
    %v272 = vmul.f32 %v271, 1.442695
    %v273 = vpow.pop %v272
    %v274 = vadd.f32 %v273, 1.0
    %v275 = vrcp.pop %v274
    %v276 = vmul.f32 1.0, %v275
    %v277 = vtanh.pop %v270
    %v278 = vmul.f32 %v276, 0.0
    %280 = vrot.lane.b32.xlu0 %v277, 64
    %v281 = vpop.permute.xlu0 %280
    %v283 = vmul.f32 %v276, %v281
    %285 = vrot.lane.b32.xlu0 %v283, 32
    %v286 = vpop.permute.xlu0 %285
    %v288 = vadd.f32 %v278, %v286
    %v289 = vtanh.pop %v288
    %291 = vrot.lane.b32.xlu0 %v289, 64
    %v292 = vpop.permute.xlu0 %291
    %v294 = vmul.f32 %v276, %v292
    %v295 = vpack.c.bf16 %v294, %v294
    %297 = vrot.lane.b32.xlu0 %v295, 32
    %v298 = vpop.permute.xlu0 %297
    %v300 = vsel %vm45, %v298, 0
    %302 = vmatprep.subr.bf16.mxu0 0
    %303 = vmatpush1.bf16.msra.mxu0 %v219
    %304 = vmatprep.subr.bf16.mxu0 0
    %305 = vmatpush1.bf16.msra.mxu0 %v220
    %306 = vmatprep.subr.bf16.mxu0 0
    %307 = vmatpush1.bf16.msra.mxu0 0
    %308 = vmatprep.subr.bf16.mxu0 0
    %309 = vmatpush1.bf16.msra.mxu0 0
    %310 = vmatprep.subr.bf16.mxu0 0
    %311 = vmatpush1.bf16.msra.mxu0 0
    %312 = vmatprep.subr.bf16.mxu0 0
    %313 = vmatpush1.bf16.msra.mxu0 0
    %314 = vmatprep.subr.bf16.mxu0 0
    %315 = vmatpush1.bf16.msra.mxu0 0
    %316 = vmatprep.subr.bf16.mxu0 0
    %317 = vmatpush1.bf16.msra.mxu0 0
    %318 = vmatprep.subr.bf16.mxu0 0
    %319 = vmatpush1.bf16.msra.mxu0 0
    %320 = vmatprep.subr.bf16.mxu0 0
    %321 = vmatpush1.bf16.msra.mxu0 0
    %322 = vmatprep.subr.bf16.mxu0 0
    %323 = vmatpush1.bf16.msra.mxu0 0
    %324 = vmatprep.subr.bf16.mxu0 0
    %325 = vmatpush1.bf16.msra.mxu0 0
    %326 = vmatprep.subr.bf16.mxu0 0
    %327 = vmatpush1.bf16.msra.mxu0 0
    %328 = vmatprep.subr.bf16.mxu0 0
    %329 = vmatpush1.bf16.msra.mxu0 0
    %330 = vmatprep.subr.bf16.mxu0 0
    %331 = vmatpush1.bf16.msra.mxu0 0
    %332 = vmatprep.subr.bf16.mxu0 0
    %333 = vmatpush1.bf16.msra.mxu0 0
    %334 = vmatprep.mubr.bf16.mxu0 0
    %335 = vmatmul.mubr.bf16.gmra.mrb[0].mxu0 %v300
    %v336 = vpop.f32.mrb[0].mxu0
    %v337 = vadd.f32 0.0, %v336
    %v338 = vpop.f32.mrb[0].mxu0
    %v339 = vpop.f32.mrb[0].mxu0
    %v340 = vpop.f32.mrb[0].mxu0
    %341 = vdwg.mxu0
    %v343 = vrot.slane %v337, 6
    %v345 = vadd.f32 %v209, %v343
    %v346 = vxor.u32 %v345, 2147483648
    %v347 = vmul.f32 %v346, 1.442695
    %v348 = vpow.pop %v347
    %v349 = vadd.f32 %v348, 1.0
    %v350 = vrcp.pop %v349
    %v351 = vmul.f32 1.0, %v350
    %v352 = vtanh.pop %v345
    %v354 = vrot.slane %v288, 6
    %v356 = vmul.f32 %v351, %v354
    %358 = vrot.lane.b32.xlu0 %v352, 64
    %v359 = vpop.permute.xlu0 %358
    %v361 = vmul.f32 %v351, %v359
    %363 = vrot.lane.b32.xlu0 %v361, 32
    %v364 = vpop.permute.xlu0 %363
    %v366 = vadd.f32 %v356, %v364
    %v367 = vtanh.pop %v366
    %369 = vrot.lane.b32.xlu0 %v367, 64
    %v370 = vpop.permute.xlu0 %369
    %v372 = vmul.f32 %v351, %v370
    %v373 = vpack.c.bf16 %v372, %v372
    %v375 = vrot.slane %v373, 1
    %376 = vrot.lane.b32.xlu0 %v375, 32
    %v377 = vpop.permute.xlu0 %376
    %v379 = vsel %vm45, %v377, 0
    %381 = vmatprep.subr.bf16.mxu0 0
    %382 = vmatpush1.bf16.msra.mxu0 %v219
    %383 = vmatprep.subr.bf16.mxu0 0
    %384 = vmatpush1.bf16.msra.mxu0 %v220
    %385 = vmatprep.subr.bf16.mxu0 0
    %386 = vmatpush1.bf16.msra.mxu0 0
    %387 = vmatprep.subr.bf16.mxu0 0
    %388 = vmatpush1.bf16.msra.mxu0 0
    %389 = vmatprep.subr.bf16.mxu0 0
    %390 = vmatpush1.bf16.msra.mxu0 0
    %391 = vmatprep.subr.bf16.mxu0 0
    %392 = vmatpush1.bf16.msra.mxu0 0
    %393 = vmatprep.subr.bf16.mxu0 0
    %394 = vmatpush1.bf16.msra.mxu0 0
    %395 = vmatprep.subr.bf16.mxu0 0
    %396 = vmatpush1.bf16.msra.mxu0 0
    %397 = vmatprep.subr.bf16.mxu0 0
    %398 = vmatpush1.bf16.msra.mxu0 0
    %399 = vmatprep.subr.bf16.mxu0 0
    %400 = vmatpush1.bf16.msra.mxu0 0
    %401 = vmatprep.subr.bf16.mxu0 0
    %402 = vmatpush1.bf16.msra.mxu0 0
    %403 = vmatprep.subr.bf16.mxu0 0
    %404 = vmatpush1.bf16.msra.mxu0 0
    %405 = vmatprep.subr.bf16.mxu0 0
    %406 = vmatpush1.bf16.msra.mxu0 0
    %407 = vmatprep.subr.bf16.mxu0 0
    %408 = vmatpush1.bf16.msra.mxu0 0
    %409 = vmatprep.subr.bf16.mxu0 0
    %410 = vmatpush1.bf16.msra.mxu0 0
    %411 = vmatprep.subr.bf16.mxu0 0
    %412 = vmatpush1.bf16.msra.mxu0 0
    %413 = vmatprep.mubr.bf16.mxu0 0
    %414 = vmatmul.mubr.bf16.gmra.mrb[0].mxu0 %v379
    %v415 = vpop.f32.mrb[0].mxu0
    %v416 = vadd.f32 0.0, %v415
    %v417 = vpop.f32.mrb[0].mxu0
    %v418 = vpop.f32.mrb[0].mxu0
    %v419 = vpop.f32.mrb[0].mxu0
    %420 = vdwg.mxu0
    %v422 = vrot.slane %v416, 4
    %v424 = vadd.f32 %v209, %v422
    %v425 = vxor.u32 %v424, 2147483648
    %v426 = vmul.f32 %v425, 1.442695
    %v427 = vpow.pop %v426
    %v428 = vadd.f32 %v427, 1.0
    %v429 = vrcp.pop %v428
    %v430 = vmul.f32 1.0, %v429
    %v431 = vtanh.pop %v424
    %v433 = vrot.slane %v366, 6
    %v435 = vmul.f32 %v430, %v433
    %437 = vrot.lane.b32.xlu0 %v431, 64
    %v438 = vpop.permute.xlu0 %437
    %v440 = vmul.f32 %v430, %v438
    %442 = vrot.lane.b32.xlu0 %v440, 32
    %v443 = vpop.permute.xlu0 %442
    %v445 = vadd.f32 %v435, %v443
    %v446 = vtanh.pop %v445
    %448 = vrot.lane.b32.xlu0 %v446, 64
    %v449 = vpop.permute.xlu0 %448
    %v451 = vmul.f32 %v430, %v449
    %v452 = vpack.c.bf16 %v451, %v451
    %v454 = vrot.slane %v452, 2
    %455 = vrot.lane.b32.xlu0 %v454, 32
    %v456 = vpop.permute.xlu0 %455
    %v458 = vsel %vm45, %v456, 0
    %460 = vmatprep.subr.bf16.mxu0 0
    %461 = vmatpush1.bf16.msra.mxu0 %v219
    %462 = vmatprep.subr.bf16.mxu0 0
    %463 = vmatpush1.bf16.msra.mxu0 %v220
    %464 = vmatprep.subr.bf16.mxu0 0
    %465 = vmatpush1.bf16.msra.mxu0 0
    %466 = vmatprep.subr.bf16.mxu0 0
    %467 = vmatpush1.bf16.msra.mxu0 0
    %468 = vmatprep.subr.bf16.mxu0 0
    %469 = vmatpush1.bf16.msra.mxu0 0
    %470 = vmatprep.subr.bf16.mxu0 0
    %471 = vmatpush1.bf16.msra.mxu0 0
    %472 = vmatprep.subr.bf16.mxu0 0
    %473 = vmatpush1.bf16.msra.mxu0 0
    %474 = vmatprep.subr.bf16.mxu0 0
    %475 = vmatpush1.bf16.msra.mxu0 0
    %476 = vmatprep.subr.bf16.mxu0 0
    %477 = vmatpush1.bf16.msra.mxu0 0
    %478 = vmatprep.subr.bf16.mxu0 0
    %479 = vmatpush1.bf16.msra.mxu0 0
    %480 = vmatprep.subr.bf16.mxu0 0
    %481 = vmatpush1.bf16.msra.mxu0 0
    %482 = vmatprep.subr.bf16.mxu0 0
    %483 = vmatpush1.bf16.msra.mxu0 0
    %484 = vmatprep.subr.bf16.mxu0 0
    %485 = vmatpush1.bf16.msra.mxu0 0
    %486 = vmatprep.subr.bf16.mxu0 0
    %487 = vmatpush1.bf16.msra.mxu0 0
    %488 = vmatprep.subr.bf16.mxu0 0
    %489 = vmatpush1.bf16.msra.mxu0 0
    %490 = vmatprep.subr.bf16.mxu0 0
    %491 = vmatpush1.bf16.msra.mxu0 0
    %492 = vmatprep.mubr.bf16.mxu0 0
    %493 = vmatmul.mubr.bf16.gmra.mrb[0].mxu0 %v458
    %v494 = vpop.f32.mrb[0].mxu0
    %v495 = vadd.f32 0.0, %v494
    %v496 = vpop.f32.mrb[0].mxu0
    %v497 = vpop.f32.mrb[0].mxu0
    %v498 = vpop.f32.mrb[0].mxu0
    %499 = vdwg.mxu0
    %v501 = vrot.slane %v495, 2
    %v503 = vadd.f32 %v209, %v501
    %v504 = vxor.u32 %v503, 2147483648
    %v505 = vmul.f32 %v504, 1.442695
    %v506 = vpow.pop %v505
    %v507 = vadd.f32 %v506, 1.0
    %v508 = vrcp.pop %v507
    %v509 = vmul.f32 1.0, %v508
    %v510 = vtanh.pop %v503
    %v512 = vrot.slane %v445, 6
    %v514 = vmul.f32 %v509, %v512
    %516 = vrot.lane.b32.xlu0 %v510, 64
    %v517 = vpop.permute.xlu0 %516
    %v519 = vmul.f32 %v509, %v517
    %521 = vrot.lane.b32.xlu0 %v519, 32
    %v522 = vpop.permute.xlu0 %521
    %v524 = vadd.f32 %v514, %v522
    %v525 = vtanh.pop %v524
    %527 = vrot.lane.b32.xlu0 %v525, 64
    %v528 = vpop.permute.xlu0 %527
    %v530 = vmul.f32 %v509, %v528
    %v531 = vpack.c.bf16 %v530, %v530
    %v533 = vrot.slane %v531, 3
    %534 = vrot.lane.b32.xlu0 %v533, 32
    %v535 = vpop.permute.xlu0 %534
    %v537 = vsel %vm45, %v535, 0
    %539 = vmatprep.subr.bf16.mxu0 0
    %540 = vmatpush1.bf16.msra.mxu0 %v219
    %541 = vmatprep.subr.bf16.mxu0 0
    %542 = vmatpush1.bf16.msra.mxu0 %v220
    %543 = vmatprep.subr.bf16.mxu0 0
    %544 = vmatpush1.bf16.msra.mxu0 0
    %545 = vmatprep.subr.bf16.mxu0 0
    %546 = vmatpush1.bf16.msra.mxu0 0
    %547 = vmatprep.subr.bf16.mxu0 0
    %548 = vmatpush1.bf16.msra.mxu0 0
    %549 = vmatprep.subr.bf16.mxu0 0
    %550 = vmatpush1.bf16.msra.mxu0 0
    %551 = vmatprep.subr.bf16.mxu0 0
    %552 = vmatpush1.bf16.msra.mxu0 0
    %553 = vmatprep.subr.bf16.mxu0 0
    %554 = vmatpush1.bf16.msra.mxu0 0
    %555 = vmatprep.subr.bf16.mxu0 0
    %556 = vmatpush1.bf16.msra.mxu0 0
    %557 = vmatprep.subr.bf16.mxu0 0
    %558 = vmatpush1.bf16.msra.mxu0 0
    %559 = vmatprep.subr.bf16.mxu0 0
    %560 = vmatpush1.bf16.msra.mxu0 0
    %561 = vmatprep.subr.bf16.mxu0 0
    %562 = vmatpush1.bf16.msra.mxu0 0
    %563 = vmatprep.subr.bf16.mxu0 0
    %564 = vmatpush1.bf16.msra.mxu0 0
    %565 = vmatprep.subr.bf16.mxu0 0
    %566 = vmatpush1.bf16.msra.mxu0 0
    %567 = vmatprep.subr.bf16.mxu0 0
    %568 = vmatpush1.bf16.msra.mxu0 0
    %569 = vmatprep.subr.bf16.mxu0 0
    %570 = vmatpush1.bf16.msra.mxu0 0
    %571 = vmatprep.mubr.bf16.mxu0 0
    %572 = vmatmul.mubr.bf16.gmra.mrb[0].mxu0 %v537
    %v573 = vpop.f32.mrb[0].mxu0
    %v574 = vadd.f32 0.0, %v573
    %v575 = vpop.f32.mrb[0].mxu0
    %v576 = vpop.f32.mrb[0].mxu0
    %v577 = vpop.f32.mrb[0].mxu0
    %578 = vdwg.mxu0
    %v579 = vadd.f32 %v212, %v574
    %v580 = vxor.u32 %v579, 2147483648
    %v581 = vmul.f32 %v580, 1.442695
    %v582 = vpow.pop %v581
    %v583 = vadd.f32 %v582, 1.0
    %v584 = vrcp.pop %v583
    %v585 = vmul.f32 1.0, %v584
    %v586 = vtanh.pop %v579
    %v588 = vrot.slane %v524, 6
    %v590 = vmul.f32 %v585, %v588
    %592 = vrot.lane.b32.xlu0 %v586, 64
    %v593 = vpop.permute.xlu0 %592
    %v595 = vmul.f32 %v585, %v593
    %597 = vrot.lane.b32.xlu0 %v595, 32
    %v598 = vpop.permute.xlu0 %597
    %v600 = vadd.f32 %v590, %v598
    %v601 = vtanh.pop %v600
    %603 = vrot.lane.b32.xlu0 %v601, 64
    %v604 = vpop.permute.xlu0 %603
    %v606 = vmul.f32 %v585, %v604
    %v607 = vpack.c.bf16 %v606, %v606
    %609 = vrot.lane.b32.xlu0 %v607, 32
    %v610 = vpop.permute.xlu0 %609
    %v612 = vsel %vm45, %v610, 0
    %614 = vmatprep.subr.bf16.mxu0 0
    %615 = vmatpush1.bf16.msra.mxu0 %v219
    %616 = vmatprep.subr.bf16.mxu0 0
    %617 = vmatpush1.bf16.msra.mxu0 %v220
    %618 = vmatprep.subr.bf16.mxu0 0
    %619 = vmatpush1.bf16.msra.mxu0 0
    %620 = vmatprep.subr.bf16.mxu0 0
    %621 = vmatpush1.bf16.msra.mxu0 0
    %622 = vmatprep.subr.bf16.mxu0 0
    %623 = vmatpush1.bf16.msra.mxu0 0
    %624 = vmatprep.subr.bf16.mxu0 0
    %625 = vmatpush1.bf16.msra.mxu0 0
    %626 = vmatprep.subr.bf16.mxu0 0
    %627 = vmatpush1.bf16.msra.mxu0 0
    %628 = vmatprep.subr.bf16.mxu0 0
    %629 = vmatpush1.bf16.msra.mxu0 0
    %630 = vmatprep.subr.bf16.mxu0 0
    %631 = vmatpush1.bf16.msra.mxu0 0
    %632 = vmatprep.subr.bf16.mxu0 0
    %633 = vmatpush1.bf16.msra.mxu0 0
    %634 = vmatprep.subr.bf16.mxu0 0
    %635 = vmatpush1.bf16.msra.mxu0 0
    %636 = vmatprep.subr.bf16.mxu0 0
    %637 = vmatpush1.bf16.msra.mxu0 0
    %638 = vmatprep.subr.bf16.mxu0 0
    %639 = vmatpush1.bf16.msra.mxu0 0
    %640 = vmatprep.subr.bf16.mxu0 0
    %641 = vmatpush1.bf16.msra.mxu0 0
    %642 = vmatprep.subr.bf16.mxu0 0
    %643 = vmatpush1.bf16.msra.mxu0 0
    %644 = vmatprep.subr.bf16.mxu0 0
    %645 = vmatpush1.bf16.msra.mxu0 0
    %646 = vmatprep.mubr.bf16.mxu0 0
    %647 = vmatmul.mubr.bf16.gmra.mrb[0].mxu0 %v612
    %v648 = vpop.f32.mrb[0].mxu0
    %v649 = vadd.f32 0.0, %v648
    %v650 = vpop.f32.mrb[0].mxu0
    %v651 = vpop.f32.mrb[0].mxu0
    %v652 = vpop.f32.mrb[0].mxu0
    %653 = vdwg.mxu0
    %v655 = vrot.slane %v649, 6
    %v657 = vadd.f32 %v212, %v655
    %v658 = vxor.u32 %v657, 2147483648
    %v659 = vmul.f32 %v658, 1.442695
    %v660 = vpow.pop %v659
    %v661 = vadd.f32 %v660, 1.0
    %v662 = vrcp.pop %v661
    %v663 = vmul.f32 1.0, %v662
    %v664 = vtanh.pop %v657
    %v666 = vrot.slane %v600, 6
    %v668 = vmul.f32 %v663, %v666
    %670 = vrot.lane.b32.xlu0 %v664, 64
    %v671 = vpop.permute.xlu0 %670
    %v673 = vmul.f32 %v663, %v671
    %675 = vrot.lane.b32.xlu0 %v673, 32
    %v676 = vpop.permute.xlu0 %675
    %v678 = vadd.f32 %v668, %v676
    %v679 = vtanh.pop %v678
    %681 = vrot.lane.b32.xlu0 %v679, 64
    %v682 = vpop.permute.xlu0 %681
    %v684 = vmul.f32 %v663, %v682
    %v685 = vpack.c.bf16 %v684, %v684
    %v687 = vrot.slane %v685, 1
    %688 = vrot.lane.b32.xlu0 %v687, 32
    %v689 = vpop.permute.xlu0 %688
    %v691 = vsel %vm45, %v689, 0
    %693 = vmatprep.subr.bf16.mxu0 0
    %694 = vmatpush1.bf16.msra.mxu0 %v219
    %695 = vmatprep.subr.bf16.mxu0 0
    %696 = vmatpush1.bf16.msra.mxu0 %v220
    %697 = vmatprep.subr.bf16.mxu0 0
    %698 = vmatpush1.bf16.msra.mxu0 0
    %699 = vmatprep.subr.bf16.mxu0 0
    %700 = vmatpush1.bf16.msra.mxu0 0
    %701 = vmatprep.subr.bf16.mxu0 0
    %702 = vmatpush1.bf16.msra.mxu0 0
    %703 = vmatprep.subr.bf16.mxu0 0
    %704 = vmatpush1.bf16.msra.mxu0 0
    %705 = vmatprep.subr.bf16.mxu0 0
    %706 = vmatpush1.bf16.msra.mxu0 0
    %707 = vmatprep.subr.bf16.mxu0 0
    %708 = vmatpush1.bf16.msra.mxu0 0
    %709 = vmatprep.subr.bf16.mxu0 0
    %710 = vmatpush1.bf16.msra.mxu0 0
    %711 = vmatprep.subr.bf16.mxu0 0
    %712 = vmatpush1.bf16.msra.mxu0 0
    %713 = vmatprep.subr.bf16.mxu0 0
    %714 = vmatpush1.bf16.msra.mxu0 0
    %715 = vmatprep.subr.bf16.mxu0 0
    %716 = vmatpush1.bf16.msra.mxu0 0
    %717 = vmatprep.subr.bf16.mxu0 0
    %718 = vmatpush1.bf16.msra.mxu0 0
    %719 = vmatprep.subr.bf16.mxu0 0
    %720 = vmatpush1.bf16.msra.mxu0 0
    %721 = vmatprep.subr.bf16.mxu0 0
    %722 = vmatpush1.bf16.msra.mxu0 0
    %723 = vmatprep.subr.bf16.mxu0 0
    %724 = vmatpush1.bf16.msra.mxu0 0
    %725 = vmatprep.mubr.bf16.mxu0 0
    %726 = vmatmul.mubr.bf16.gmra.mrb[0].mxu0 %v691
    %v727 = vpop.f32.mrb[0].mxu0
    %v728 = vadd.f32 0.0, %v727
    %v729 = vpop.f32.mrb[0].mxu0
    %v730 = vpop.f32.mrb[0].mxu0
    %v731 = vpop.f32.mrb[0].mxu0
    %732 = vdwg.mxu0
    %v734 = vrot.slane %v728, 4
    %v736 = vadd.f32 %v212, %v734
    %v737 = vxor.u32 %v736, 2147483648
    %v738 = vmul.f32 %v737, 1.442695
    %v739 = vpow.pop %v738
    %v740 = vadd.f32 %v739, 1.0
    %v741 = vrcp.pop %v740
    %v742 = vmul.f32 1.0, %v741
    %v743 = vtanh.pop %v736
    %v745 = vrot.slane %v678, 6
    %v747 = vmul.f32 %v742, %v745
    %749 = vrot.lane.b32.xlu0 %v743, 64
    %v750 = vpop.permute.xlu0 %749
    %v752 = vmul.f32 %v742, %v750
    %754 = vrot.lane.b32.xlu0 %v752, 32
    %v755 = vpop.permute.xlu0 %754
    %v757 = vadd.f32 %v747, %v755
    %v758 = vtanh.pop %v757
    %760 = vrot.lane.b32.xlu0 %v758, 64
    %v761 = vpop.permute.xlu0 %760
    %v763 = vmul.f32 %v742, %v761
    %v764 = vpack.c.bf16 %v763, %v763
    %v766 = vrot.slane %v764, 2
    %767 = vrot.lane.b32.xlu0 %v766, 32
    %v768 = vpop.permute.xlu0 %767
    %v770 = vsel %vm45, %v768, 0
    %772 = vmatprep.subr.bf16.mxu0 0
    %773 = vmatpush1.bf16.msra.mxu0 %v219
    %774 = vmatprep.subr.bf16.mxu0 0
    %775 = vmatpush1.bf16.msra.mxu0 %v220
    %776 = vmatprep.subr.bf16.mxu0 0
    %777 = vmatpush1.bf16.msra.mxu0 0
    %778 = vmatprep.subr.bf16.mxu0 0
    %779 = vmatpush1.bf16.msra.mxu0 0
    %780 = vmatprep.subr.bf16.mxu0 0
    %781 = vmatpush1.bf16.msra.mxu0 0
    %782 = vmatprep.subr.bf16.mxu0 0
    %783 = vmatpush1.bf16.msra.mxu0 0
    %784 = vmatprep.subr.bf16.mxu0 0
    %785 = vmatpush1.bf16.msra.mxu0 0
    %786 = vmatprep.subr.bf16.mxu0 0
    %787 = vmatpush1.bf16.msra.mxu0 0
    %788 = vmatprep.subr.bf16.mxu0 0
    %789 = vmatpush1.bf16.msra.mxu0 0
    %790 = vmatprep.subr.bf16.mxu0 0
    %791 = vmatpush1.bf16.msra.mxu0 0
    %792 = vmatprep.subr.bf16.mxu0 0
    %793 = vmatpush1.bf16.msra.mxu0 0
    %794 = vmatprep.subr.bf16.mxu0 0
    %795 = vmatpush1.bf16.msra.mxu0 0
    %796 = vmatprep.subr.bf16.mxu0 0
    %797 = vmatpush1.bf16.msra.mxu0 0
    %798 = vmatprep.subr.bf16.mxu0 0
    %799 = vmatpush1.bf16.msra.mxu0 0
    %800 = vmatprep.subr.bf16.mxu0 0
    %801 = vmatpush1.bf16.msra.mxu0 0
    %802 = vmatprep.subr.bf16.mxu0 0
    %803 = vmatpush1.bf16.msra.mxu0 0
    %804 = vmatprep.mubr.bf16.mxu0 0
    %805 = vmatmul.mubr.bf16.gmra.mrb[0].mxu0 %v770
    %v806 = vpop.f32.mrb[0].mxu0
    %v807 = vadd.f32 0.0, %v806
    %v808 = vpop.f32.mrb[0].mxu0
    %v809 = vpop.f32.mrb[0].mxu0
    %v810 = vpop.f32.mrb[0].mxu0
    %811 = vdwg.mxu0
    %v813 = vrot.slane %v807, 2
    %v815 = vadd.f32 %v212, %v813
    %v816 = vxor.u32 %v815, 2147483648
    %v817 = vmul.f32 %v816, 1.442695
    %v818 = vpow.pop %v817
    %v819 = vadd.f32 %v818, 1.0
    %v820 = vrcp.pop %v819
    %v821 = vmul.f32 1.0, %v820
    %v822 = vtanh.pop %v815
    %v824 = vrot.slane %v757, 6
    %v826 = vmul.f32 %v821, %v824
    %828 = vrot.lane.b32.xlu0 %v822, 64
    %v829 = vpop.permute.xlu0 %828
    %v831 = vmul.f32 %v821, %v829
    %833 = vrot.lane.b32.xlu0 %v831, 32
    %v834 = vpop.permute.xlu0 %833
    %v836 = vadd.f32 %v826, %v834
    %v837 = vtanh.pop %v836
    %839 = vrot.lane.b32.xlu0 %v837, 64
    %v840 = vpop.permute.xlu0 %839
    %v842 = vmul.f32 %v821, %v840
    %v843 = vsel %vm164, %v294, %v372
    %v844 = vsel %vm166, %v843, %v451
    %v845 = vsel %vm168, %v844, %v530
    %v846 = vsel %vm164, %v606, %v684
    %v847 = vsel %vm166, %v846, %v763
    %v848 = vsel %vm168, %v847, %v842
    %v849 = vpack.c.bf16 %v848, %v845
    %v850 = vld [vmem:[#allocation2 + $0x70] sm:$0xff]
    %v851 = vld [vmem:[#allocation2 + $0x78] sm:$0xff]
    %v852 = vld [vmem:[#allocation2 + $0x80] sm:$0xff]
    %v853 = vld [vmem:[#allocation2 + $0x88] sm:$0xff]
    %v854 = vpack.c.bf16 %v851, %v850
    %v855 = vpack.c.bf16 %v853, %v852
    %v856 = vld [vmem:[#allocation2 + $0x198] sm:$0x1]
    %v857 = vlaneseq
    %v858 = vshrl.u32 %v857, 7
    %v859 = vsub.s32 0, %v858
    %v860 = vrot.slane %v856, %v859
    %862 = vrot.lane.b32.xlu0 %v849, 32
    %v863 = vpop.permute.xlu0 %862
    %v865 = vsel %vm45, %v863, 0
    %867 = vmatprep.subr.bf16.mxu0 0
    %868 = vmatpush1.bf16.msra.mxu0 %v854
    %869 = vmatprep.subr.bf16.mxu0 0
    %870 = vmatpush1.bf16.msra.mxu0 %v855
    %871 = vmatprep.subr.bf16.mxu0 0
    %872 = vmatpush1.bf16.msra.mxu0 0
    %873 = vmatprep.subr.bf16.mxu0 0
    %874 = vmatpush1.bf16.msra.mxu0 0
    %875 = vmatprep.subr.bf16.mxu0 0
    %876 = vmatpush1.bf16.msra.mxu0 0
    %877 = vmatprep.subr.bf16.mxu0 0
    %878 = vmatpush1.bf16.msra.mxu0 0
    %879 = vmatprep.subr.bf16.mxu0 0
    %880 = vmatpush1.bf16.msra.mxu0 0
    %881 = vmatprep.subr.bf16.mxu0 0
    %882 = vmatpush1.bf16.msra.mxu0 0
    %883 = vmatprep.subr.bf16.mxu0 0
    %884 = vmatpush1.bf16.msra.mxu0 0
    %885 = vmatprep.subr.bf16.mxu0 0
    %886 = vmatpush1.bf16.msra.mxu0 0
    %887 = vmatprep.subr.bf16.mxu0 0
    %888 = vmatpush1.bf16.msra.mxu0 0
    %889 = vmatprep.subr.bf16.mxu0 0
    %890 = vmatpush1.bf16.msra.mxu0 0
    %891 = vmatprep.subr.bf16.mxu0 0
    %892 = vmatpush1.bf16.msra.mxu0 0
    %893 = vmatprep.subr.bf16.mxu0 0
    %894 = vmatpush1.bf16.msra.mxu0 0
    %895 = vmatprep.subr.bf16.mxu0 0
    %896 = vmatpush1.bf16.msra.mxu0 0
    %897 = vmatprep.subr.bf16.mxu0 0
    %898 = vmatpush1.bf16.msra.mxu0 0
    %899 = vmatprep.mubr.bf16.mxu0 0
    %900 = vmatmul.mubr.bf16.gmra.mrb[0].mxu0 %v865
    %v901 = vpop.f32.mrb[0].mxu0
    %v902 = vadd.f32 %v860, %v901
    %v903 = vpop.f32.mrb[0].mxu0
    %v904 = vpop.f32.mrb[0].mxu0
    %v905 = vadd.f32 %v860, %v904
    %v906 = vpop.f32.mrb[0].mxu0
    %907 = vdwg.mxu0
    %908 = vmatprep.subr.bf16.mxu0 0
    %909 = vmatpush1.bf16.msra.mxu0 %v225
    %910 = vmatprep.subr.bf16.mxu0 0
    %911 = vmatpush1.bf16.msra.mxu0 %v226
    %912 = vmatprep.subr.bf16.mxu0 0
    %913 = vmatpush1.bf16.msra.mxu0 0
    %914 = vmatprep.subr.bf16.mxu0 0
    %915 = vmatpush1.bf16.msra.mxu0 0
    %916 = vmatprep.subr.bf16.mxu0 0
    %917 = vmatpush1.bf16.msra.mxu0 0
    %918 = vmatprep.subr.bf16.mxu0 0
    %919 = vmatpush1.bf16.msra.mxu0 0
    %920 = vmatprep.subr.bf16.mxu0 0
    %921 = vmatpush1.bf16.msra.mxu0 0
    %922 = vmatprep.subr.bf16.mxu0 0
    %923 = vmatpush1.bf16.msra.mxu0 0
    %924 = vmatprep.subr.bf16.mxu0 0
    %925 = vmatpush1.bf16.msra.mxu0 0
    %926 = vmatprep.subr.bf16.mxu0 0
    %927 = vmatpush1.bf16.msra.mxu0 0
    %928 = vmatprep.subr.bf16.mxu0 0
    %929 = vmatpush1.bf16.msra.mxu0 0
    %930 = vmatprep.subr.bf16.mxu0 0
    %931 = vmatpush1.bf16.msra.mxu0 0
    %932 = vmatprep.subr.bf16.mxu0 0
    %933 = vmatpush1.bf16.msra.mxu0 0
    %934 = vmatprep.subr.bf16.mxu0 0
    %935 = vmatpush1.bf16.msra.mxu0 0
    %936 = vmatprep.subr.bf16.mxu0 0
    %937 = vmatpush1.bf16.msra.mxu0 0
    %938 = vmatprep.subr.bf16.mxu0 0
    %939 = vmatpush1.bf16.msra.mxu0 0
    %940 = vmatprep.mubr.bf16.mxu0 0
    %941 = vmatmul.mubr.bf16.gmra.mrb[0].mxu0 %v228
    %v942 = vpop.f32.mrb[0].mxu0
    %v943 = vadd.f32 0.0, %v942
    %v944 = vpop.f32.mrb[0].mxu0
    %v945 = vpop.f32.mrb[0].mxu0
    %v946 = vpop.f32.mrb[0].mxu0
    %947 = vdwg.mxu0
    %v948 = vadd.f32 %v902, %v943
    %v949 = vxor.u32 %v948, 2147483648
    %v950 = vmul.f32 %v949, 1.442695
    %v951 = vpow.pop %v950
    %v952 = vadd.f32 %v951, 1.0
    %v953 = vrcp.pop %v952
    %v954 = vmul.f32 1.0, %v953
    %v955 = vtanh.pop %v948
    %v956 = vmul.f32 %v954, 0.0
    %958 = vrot.lane.b32.xlu0 %v955, 64
    %v959 = vpop.permute.xlu0 %958
    %v961 = vmul.f32 %v954, %v959
    %963 = vrot.lane.b32.xlu0 %v961, 32
    %v964 = vpop.permute.xlu0 %963
    %v966 = vadd.f32 %v956, %v964
    %v967 = vtanh.pop %v966
    %969 = vrot.lane.b32.xlu0 %v967, 64
    %v970 = vpop.permute.xlu0 %969
    %v972 = vmul.f32 %v954, %v970
    %v973 = vpack.c.bf16 %v972, %v972
    %975 = vrot.lane.b32.xlu0 %v973, 32
    %v976 = vpop.permute.xlu0 %975
    %v978 = vsel %vm45, %v976, 0
    %980 = vmatprep.subr.bf16.mxu0 0
    %981 = vmatpush1.bf16.msra.mxu0 %v225
    %982 = vmatprep.subr.bf16.mxu0 0
    %983 = vmatpush1.bf16.msra.mxu0 %v226
    %984 = vmatprep.subr.bf16.mxu0 0
    %985 = vmatpush1.bf16.msra.mxu0 0
    %986 = vmatprep.subr.bf16.mxu0 0
    %987 = vmatpush1.bf16.msra.mxu0 0
    %988 = vmatprep.subr.bf16.mxu0 0
    %989 = vmatpush1.bf16.msra.mxu0 0
    %990 = vmatprep.subr.bf16.mxu0 0
    %991 = vmatpush1.bf16.msra.mxu0 0
    %992 = vmatprep.subr.bf16.mxu0 0
    %993 = vmatpush1.bf16.msra.mxu0 0
    %994 = vmatprep.subr.bf16.mxu0 0
    %995 = vmatpush1.bf16.msra.mxu0 0
    %996 = vmatprep.subr.bf16.mxu0 0
    %997 = vmatpush1.bf16.msra.mxu0 0
    %998 = vmatprep.subr.bf16.mxu0 0
    %999 = vmatpush1.bf16.msra.mxu0 0
    %1000 = vmatprep.subr.bf16.mxu0 0
    %1001 = vmatpush1.bf16.msra.mxu0 0
    %1002 = vmatprep.subr.bf16.mxu0 0
    %1003 = vmatpush1.bf16.msra.mxu0 0
    %1004 = vmatprep.subr.bf16.mxu0 0
    %1005 = vmatpush1.bf16.msra.mxu0 0
    %1006 = vmatprep.subr.bf16.mxu0 0
    %1007 = vmatpush1.bf16.msra.mxu0 0
    %1008 = vmatprep.subr.bf16.mxu0 0
    %1009 = vmatpush1.bf16.msra.mxu0 0
    %1010 = vmatprep.subr.bf16.mxu0 0
    %1011 = vmatpush1.bf16.msra.mxu0 0
    %1012 = vmatprep.mubr.bf16.mxu0 0
    %1013 = vmatmul.mubr.bf16.gmra.mrb[0].mxu0 %v978
    %v1014 = vpop.f32.mrb[0].mxu0
    %v1015 = vadd.f32 0.0, %v1014
    %v1016 = vpop.f32.mrb[0].mxu0
    %v1017 = vpop.f32.mrb[0].mxu0
    %v1018 = vpop.f32.mrb[0].mxu0
    %1019 = vdwg.mxu0
    %v1021 = vrot.slane %v1015, 6
    %v1023 = vadd.f32 %v902, %v1021
    %v1024 = vxor.u32 %v1023, 2147483648
    %v1025 = vmul.f32 %v1024, 1.442695
    %v1026 = vpow.pop %v1025
    %v1027 = vadd.f32 %v1026, 1.0
    %v1028 = vrcp.pop %v1027
    %v1029 = vmul.f32 1.0, %v1028
    %v1030 = vtanh.pop %v1023
    %v1032 = vrot.slane %v966, 6
    %v1034 = vmul.f32 %v1029, %v1032
    %1036 = vrot.lane.b32.xlu0 %v1030, 64
    %v1037 = vpop.permute.xlu0 %1036
    %v1039 = vmul.f32 %v1029, %v1037
    %1041 = vrot.lane.b32.xlu0 %v1039, 32
    %v1042 = vpop.permute.xlu0 %1041
    %v1044 = vadd.f32 %v1034, %v1042
    %v1045 = vtanh.pop %v1044
    %1047 = vrot.lane.b32.xlu0 %v1045, 64
    %v1048 = vpop.permute.xlu0 %1047
    %v1050 = vmul.f32 %v1029, %v1048
    %v1051 = vpack.c.bf16 %v1050, %v1050
    %v1053 = vrot.slane %v1051, 1
    %1054 = vrot.lane.b32.xlu0 %v1053, 32
    %v1055 = vpop.permute.xlu0 %1054
    %v1057 = vsel %vm45, %v1055, 0
    %1059 = vmatprep.subr.bf16.mxu0 0
    %1060 = vmatpush1.bf16.msra.mxu0 %v225
    %1061 = vmatprep.subr.bf16.mxu0 0
    %1062 = vmatpush1.bf16.msra.mxu0 %v226
    %1063 = vmatprep.subr.bf16.mxu0 0
    %1064 = vmatpush1.bf16.msra.mxu0 0
    %1065 = vmatprep.subr.bf16.mxu0 0
    %1066 = vmatpush1.bf16.msra.mxu0 0
    %1067 = vmatprep.subr.bf16.mxu0 0
    %1068 = vmatpush1.bf16.msra.mxu0 0
    %1069 = vmatprep.subr.bf16.mxu0 0
    %1070 = vmatpush1.bf16.msra.mxu0 0
    %1071 = vmatprep.subr.bf16.mxu0 0
    %1072 = vmatpush1.bf16.msra.mxu0 0
    %1073 = vmatprep.subr.bf16.mxu0 0
    %1074 = vmatpush1.bf16.msra.mxu0 0
    %1075 = vmatprep.subr.bf16.mxu0 0
    %1076 = vmatpush1.bf16.msra.mxu0 0
    %1077 = vmatprep.subr.bf16.mxu0 0
    %1078 = vmatpush1.bf16.msra.mxu0 0
    %1079 = vmatprep.subr.bf16.mxu0 0
    %1080 = vmatpush1.bf16.msra.mxu0 0
    %1081 = vmatprep.subr.bf16.mxu0 0
    %1082 = vmatpush1.bf16.msra.mxu0 0
    %1083 = vmatprep.subr.bf16.mxu0 0
    %1084 = vmatpush1.bf16.msra.mxu0 0
    %1085 = vmatprep.subr.bf16.mxu0 0
    %1086 = vmatpush1.bf16.msra.mxu0 0
    %1087 = vmatprep.subr.bf16.mxu0 0
    %1088 = vmatpush1.bf16.msra.mxu0 0
    %1089 = vmatprep.subr.bf16.mxu0 0
    %1090 = vmatpush1.bf16.msra.mxu0 0
    %1091 = vmatprep.mubr.bf16.mxu0 0
    %1092 = vmatmul.mubr.bf16.gmra.mrb[0].mxu0 %v1057
    %v1093 = vpop.f32.mrb[0].mxu0
    %v1094 = vadd.f32 0.0, %v1093
    %v1095 = vpop.f32.mrb[0].mxu0
    %v1096 = vpop.f32.mrb[0].mxu0
    %v1097 = vpop.f32.mrb[0].mxu0
    %1098 = vdwg.mxu0
    %v1100 = vrot.slane %v1094, 4
    %v1102 = vadd.f32 %v902, %v1100
    %v1103 = vxor.u32 %v1102, 2147483648
    %v1104 = vmul.f32 %v1103, 1.442695
    %v1105 = vpow.pop %v1104
    %v1106 = vadd.f32 %v1105, 1.0
    %v1107 = vrcp.pop %v1106
    %v1108 = vmul.f32 1.0, %v1107
    %v1109 = vtanh.pop %v1102
    %v1111 = vrot.slane %v1044, 6
    %v1113 = vmul.f32 %v1108, %v1111
    %1115 = vrot.lane.b32.xlu0 %v1109, 64
    %v1116 = vpop.permute.xlu0 %1115
    %v1118 = vmul.f32 %v1108, %v1116
    %1120 = vrot.lane.b32.xlu0 %v1118, 32
    %v1121 = vpop.permute.xlu0 %1120
    %v1123 = vadd.f32 %v1113, %v1121
    %v1124 = vtanh.pop %v1123
    %1126 = vrot.lane.b32.xlu0 %v1124, 64
    %v1127 = vpop.permute.xlu0 %1126
    %v1129 = vmul.f32 %v1108, %v1127
    %v1130 = vpack.c.bf16 %v1129, %v1129
    %v1132 = vrot.slane %v1130, 2
    %1133 = vrot.lane.b32.xlu0 %v1132, 32
    %v1134 = vpop.permute.xlu0 %1133
    %v1136 = vsel %vm45, %v1134, 0
    %1138 = vmatprep.subr.bf16.mxu0 0
    %1139 = vmatpush1.bf16.msra.mxu0 %v225
    %1140 = vmatprep.subr.bf16.mxu0 0
    %1141 = vmatpush1.bf16.msra.mxu0 %v226
    %1142 = vmatprep.subr.bf16.mxu0 0
    %1143 = vmatpush1.bf16.msra.mxu0 0
    %1144 = vmatprep.subr.bf16.mxu0 0
    %1145 = vmatpush1.bf16.msra.mxu0 0
    %1146 = vmatprep.subr.bf16.mxu0 0
    %1147 = vmatpush1.bf16.msra.mxu0 0
    %1148 = vmatprep.subr.bf16.mxu0 0
    %1149 = vmatpush1.bf16.msra.mxu0 0
    %1150 = vmatprep.subr.bf16.mxu0 0
    %1151 = vmatpush1.bf16.msra.mxu0 0
    %1152 = vmatprep.subr.bf16.mxu0 0
    %1153 = vmatpush1.bf16.msra.mxu0 0
    %1154 = vmatprep.subr.bf16.mxu0 0
    %1155 = vmatpush1.bf16.msra.mxu0 0
    %1156 = vmatprep.subr.bf16.mxu0 0
    %1157 = vmatpush1.bf16.msra.mxu0 0
    %1158 = vmatprep.subr.bf16.mxu0 0
    %1159 = vmatpush1.bf16.msra.mxu0 0
    %1160 = vmatprep.subr.bf16.mxu0 0
    %1161 = vmatpush1.bf16.msra.mxu0 0
    %1162 = vmatprep.subr.bf16.mxu0 0
    %1163 = vmatpush1.bf16.msra.mxu0 0
    %1164 = vmatprep.subr.bf16.mxu0 0
    %1165 = vmatpush1.bf16.msra.mxu0 0
    %1166 = vmatprep.subr.bf16.mxu0 0
    %1167 = vmatpush1.bf16.msra.mxu0 0
    %1168 = vmatprep.subr.bf16.mxu0 0
    %1169 = vmatpush1.bf16.msra.mxu0 0
    %1170 = vmatprep.mubr.bf16.mxu0 0
    %1171 = vmatmul.mubr.bf16.gmra.mrb[0].mxu0 %v1136
    %v1172 = vpop.f32.mrb[0].mxu0
    %v1173 = vadd.f32 0.0, %v1172
    %v1174 = vpop.f32.mrb[0].mxu0
    %v1175 = vpop.f32.mrb[0].mxu0
    %v1176 = vpop.f32.mrb[0].mxu0
    %1177 = vdwg.mxu0
    %v1179 = vrot.slane %v1173, 2
    %v1181 = vadd.f32 %v902, %v1179
    %v1182 = vxor.u32 %v1181, 2147483648
    %v1183 = vmul.f32 %v1182, 1.442695
    %v1184 = vpow.pop %v1183
    %v1185 = vadd.f32 %v1184, 1.0
    %v1186 = vrcp.pop %v1185
    %v1187 = vmul.f32 1.0, %v1186
    %v1188 = vtanh.pop %v1181
    %v1190 = vrot.slane %v1123, 6
    %v1192 = vmul.f32 %v1187, %v1190
    %1194 = vrot.lane.b32.xlu0 %v1188, 64
    %v1195 = vpop.permute.xlu0 %1194
    %v1197 = vmul.f32 %v1187, %v1195
    %1199 = vrot.lane.b32.xlu0 %v1197, 32
    %v1200 = vpop.permute.xlu0 %1199
    %v1202 = vadd.f32 %v1192, %v1200
    %v1203 = vtanh.pop %v1202
    %1205 = vrot.lane.b32.xlu0 %v1203, 64
    %v1206 = vpop.permute.xlu0 %1205
    %v1208 = vmul.f32 %v1187, %v1206
    %v1209 = vpack.c.bf16 %v1208, %v1208
    %v1211 = vrot.slane %v1209, 3
    %1212 = vrot.lane.b32.xlu0 %v1211, 32
    %v1213 = vpop.permute.xlu0 %1212
    %v1215 = vsel %vm45, %v1213, 0
    %1217 = vmatprep.subr.bf16.mxu0 0
    %1218 = vmatpush1.bf16.msra.mxu0 %v225
    %1219 = vmatprep.subr.bf16.mxu0 0
    %1220 = vmatpush1.bf16.msra.mxu0 %v226
    %1221 = vmatprep.subr.bf16.mxu0 0
    %1222 = vmatpush1.bf16.msra.mxu0 0
    %1223 = vmatprep.subr.bf16.mxu0 0
    %1224 = vmatpush1.bf16.msra.mxu0 0
    %1225 = vmatprep.subr.bf16.mxu0 0
    %1226 = vmatpush1.bf16.msra.mxu0 0
    %1227 = vmatprep.subr.bf16.mxu0 0
    %1228 = vmatpush1.bf16.msra.mxu0 0
    %1229 = vmatprep.subr.bf16.mxu0 0
    %1230 = vmatpush1.bf16.msra.mxu0 0
    %1231 = vmatprep.subr.bf16.mxu0 0
    %1232 = vmatpush1.bf16.msra.mxu0 0
    %1233 = vmatprep.subr.bf16.mxu0 0
    %1234 = vmatpush1.bf16.msra.mxu0 0
    %1235 = vmatprep.subr.bf16.mxu0 0
    %1236 = vmatpush1.bf16.msra.mxu0 0
    %1237 = vmatprep.subr.bf16.mxu0 0
    %1238 = vmatpush1.bf16.msra.mxu0 0
    %1239 = vmatprep.subr.bf16.mxu0 0
    %1240 = vmatpush1.bf16.msra.mxu0 0
    %1241 = vmatprep.subr.bf16.mxu0 0
    %1242 = vmatpush1.bf16.msra.mxu0 0
    %1243 = vmatprep.subr.bf16.mxu0 0
    %1244 = vmatpush1.bf16.msra.mxu0 0
    %1245 = vmatprep.subr.bf16.mxu0 0
    %1246 = vmatpush1.bf16.msra.mxu0 0
    %1247 = vmatprep.subr.bf16.mxu0 0
    %1248 = vmatpush1.bf16.msra.mxu0 0
    %1249 = vmatprep.mubr.bf16.mxu0 0
    %1250 = vmatmul.mubr.bf16.gmra.mrb[0].mxu0 %v1215
    %v1251 = vpop.f32.mrb[0].mxu0
    %v1252 = vadd.f32 0.0, %v1251
    %v1253 = vpop.f32.mrb[0].mxu0
    %v1254 = vpop.f32.mrb[0].mxu0
    %v1255 = vpop.f32.mrb[0].mxu0
    %1256 = vdwg.mxu0
    %v1257 = vadd.f32 %v905, %v1252
    %v1258 = vxor.u32 %v1257, 2147483648
    %v1259 = vmul.f32 %v1258, 1.442695
    %v1260 = vpow.pop %v1259
    %v1261 = vadd.f32 %v1260, 1.0
    %v1262 = vrcp.pop %v1261
    %v1263 = vmul.f32 1.0, %v1262
    %v1264 = vtanh.pop %v1257
    %v1266 = vrot.slane %v1202, 6
    %v1268 = vmul.f32 %v1263, %v1266
    %1270 = vrot.lane.b32.xlu0 %v1264, 64
    %v1271 = vpop.permute.xlu0 %1270
    %v1273 = vmul.f32 %v1263, %v1271
    %1275 = vrot.lane.b32.xlu0 %v1273, 32
    %v1276 = vpop.permute.xlu0 %1275
    %v1278 = vadd.f32 %v1268, %v1276
    %v1279 = vtanh.pop %v1278
    %1281 = vrot.lane.b32.xlu0 %v1279, 64
    %v1282 = vpop.permute.xlu0 %1281
    %v1284 = vmul.f32 %v1263, %v1282
    %v1285 = vpack.c.bf16 %v1284, %v1284
    %1287 = vrot.lane.b32.xlu0 %v1285, 32
    %v1288 = vpop.permute.xlu0 %1287
    %v1290 = vsel %vm45, %v1288, 0
    %1292 = vmatprep.subr.bf16.mxu0 0
    %1293 = vmatpush1.bf16.msra.mxu0 %v225
    %1294 = vmatprep.subr.bf16.mxu0 0
    %1295 = vmatpush1.bf16.msra.mxu0 %v226
    %1296 = vmatprep.subr.bf16.mxu0 0
    %1297 = vmatpush1.bf16.msra.mxu0 0
    %1298 = vmatprep.subr.bf16.mxu0 0
    %1299 = vmatpush1.bf16.msra.mxu0 0
    %1300 = vmatprep.subr.bf16.mxu0 0
    %1301 = vmatpush1.bf16.msra.mxu0 0
    %1302 = vmatprep.subr.bf16.mxu0 0
    %1303 = vmatpush1.bf16.msra.mxu0 0
    %1304 = vmatprep.subr.bf16.mxu0 0
    %1305 = vmatpush1.bf16.msra.mxu0 0
    %1306 = vmatprep.subr.bf16.mxu0 0
    %1307 = vmatpush1.bf16.msra.mxu0 0
    %1308 = vmatprep.subr.bf16.mxu0 0
    %1309 = vmatpush1.bf16.msra.mxu0 0
    %1310 = vmatprep.subr.bf16.mxu0 0
    %1311 = vmatpush1.bf16.msra.mxu0 0
    %1312 = vmatprep.subr.bf16.mxu0 0
    %1313 = vmatpush1.bf16.msra.mxu0 0
    %1314 = vmatprep.subr.bf16.mxu0 0
    %1315 = vmatpush1.bf16.msra.mxu0 0
    %1316 = vmatprep.subr.bf16.mxu0 0
    %1317 = vmatpush1.bf16.msra.mxu0 0
    %1318 = vmatprep.subr.bf16.mxu0 0
    %1319 = vmatpush1.bf16.msra.mxu0 0
    %1320 = vmatprep.subr.bf16.mxu0 0
    %1321 = vmatpush1.bf16.msra.mxu0 0
    %1322 = vmatprep.subr.bf16.mxu0 0
    %1323 = vmatpush1.bf16.msra.mxu0 0
    %1324 = vmatprep.mubr.bf16.mxu0 0
    %1325 = vmatmul.mubr.bf16.gmra.mrb[0].mxu0 %v1290
    %v1326 = vpop.f32.mrb[0].mxu0
    %v1327 = vadd.f32 0.0, %v1326
    %v1328 = vpop.f32.mrb[0].mxu0
    %v1329 = vpop.f32.mrb[0].mxu0
    %v1330 = vpop.f32.mrb[0].mxu0
    %1331 = vdwg.mxu0
    %v1333 = vrot.slane %v1327, 6
    %v1335 = vadd.f32 %v905, %v1333
    %v1336 = vxor.u32 %v1335, 2147483648
    %v1337 = vmul.f32 %v1336, 1.442695
    %v1338 = vpow.pop %v1337
    %v1339 = vadd.f32 %v1338, 1.0
    %v1340 = vrcp.pop %v1339
    %v1341 = vmul.f32 1.0, %v1340
    %v1342 = vtanh.pop %v1335
    %v1344 = vrot.slane %v1278, 6
    %v1346 = vmul.f32 %v1341, %v1344
    %1348 = vrot.lane.b32.xlu0 %v1342, 64
    %v1349 = vpop.permute.xlu0 %1348
    %v1351 = vmul.f32 %v1341, %v1349
    %1353 = vrot.lane.b32.xlu0 %v1351, 32
    %v1354 = vpop.permute.xlu0 %1353
    %v1356 = vadd.f32 %v1346, %v1354
    %v1357 = vtanh.pop %v1356
    %1359 = vrot.lane.b32.xlu0 %v1357, 64
    %v1360 = vpop.permute.xlu0 %1359
    %v1362 = vmul.f32 %v1341, %v1360
    %v1363 = vpack.c.bf16 %v1362, %v1362
    %v1365 = vrot.slane %v1363, 1
    %1366 = vrot.lane.b32.xlu0 %v1365, 32
    %v1367 = vpop.permute.xlu0 %1366
    %v1369 = vsel %vm45, %v1367, 0
    %1371 = vmatprep.subr.bf16.mxu0 0
    %1372 = vmatpush1.bf16.msra.mxu0 %v225
    %1373 = vmatprep.subr.bf16.mxu0 0
    %1374 = vmatpush1.bf16.msra.mxu0 %v226
    %1375 = vmatprep.subr.bf16.mxu0 0
    %1376 = vmatpush1.bf16.msra.mxu0 0
    %1377 = vmatprep.subr.bf16.mxu0 0
    %1378 = vmatpush1.bf16.msra.mxu0 0
    %1379 = vmatprep.subr.bf16.mxu0 0
    %1380 = vmatpush1.bf16.msra.mxu0 0
    %1381 = vmatprep.subr.bf16.mxu0 0
    %1382 = vmatpush1.bf16.msra.mxu0 0
    %1383 = vmatprep.subr.bf16.mxu0 0
    %1384 = vmatpush1.bf16.msra.mxu0 0
    %1385 = vmatprep.subr.bf16.mxu0 0
    %1386 = vmatpush1.bf16.msra.mxu0 0
    %1387 = vmatprep.subr.bf16.mxu0 0
    %1388 = vmatpush1.bf16.msra.mxu0 0
    %1389 = vmatprep.subr.bf16.mxu0 0
    %1390 = vmatpush1.bf16.msra.mxu0 0
    %1391 = vmatprep.subr.bf16.mxu0 0
    %1392 = vmatpush1.bf16.msra.mxu0 0
    %1393 = vmatprep.subr.bf16.mxu0 0
    %1394 = vmatpush1.bf16.msra.mxu0 0
    %1395 = vmatprep.subr.bf16.mxu0 0
    %1396 = vmatpush1.bf16.msra.mxu0 0
    %1397 = vmatprep.subr.bf16.mxu0 0
    %1398 = vmatpush1.bf16.msra.mxu0 0
    %1399 = vmatprep.subr.bf16.mxu0 0
    %1400 = vmatpush1.bf16.msra.mxu0 0
    %1401 = vmatprep.subr.bf16.mxu0 0
    %1402 = vmatpush1.bf16.msra.mxu0 0
    %1403 = vmatprep.mubr.bf16.mxu0 0
    %1404 = vmatmul.mubr.bf16.gmra.mrb[0].mxu0 %v1369
    %v1405 = vpop.f32.mrb[0].mxu0
    %v1406 = vadd.f32 0.0, %v1405
    %v1407 = vpop.f32.mrb[0].mxu0
    %v1408 = vpop.f32.mrb[0].mxu0
    %v1409 = vpop.f32.mrb[0].mxu0
    %1410 = vdwg.mxu0
    %v1412 = vrot.slane %v1406, 4
    %v1414 = vadd.f32 %v905, %v1412
    %v1415 = vxor.u32 %v1414, 2147483648
    %v1416 = vmul.f32 %v1415, 1.442695
    %v1417 = vpow.pop %v1416
    %v1418 = vadd.f32 %v1417, 1.0
    %v1419 = vrcp.pop %v1418
    %v1420 = vmul.f32 1.0, %v1419
    %v1421 = vtanh.pop %v1414
    %v1423 = vrot.slane %v1356, 6
    %v1425 = vmul.f32 %v1420, %v1423
    %1427 = vrot.lane.b32.xlu0 %v1421, 64
    %v1428 = vpop.permute.xlu0 %1427
    %v1430 = vmul.f32 %v1420, %v1428
    %1432 = vrot.lane.b32.xlu0 %v1430, 32
    %v1433 = vpop.permute.xlu0 %1432
    %v1435 = vadd.f32 %v1425, %v1433
    %v1436 = vtanh.pop %v1435
    %1438 = vrot.lane.b32.xlu0 %v1436, 64
    %v1439 = vpop.permute.xlu0 %1438
    %v1441 = vmul.f32 %v1420, %v1439
    %v1442 = vpack.c.bf16 %v1441, %v1441
    %v1444 = vrot.slane %v1442, 2
    %1445 = vrot.lane.b32.xlu0 %v1444, 32
    %v1446 = vpop.permute.xlu0 %1445
    %v1448 = vsel %vm45, %v1446, 0
    %1450 = vmatprep.subr.bf16.mxu0 0
    %1451 = vmatpush1.bf16.msra.mxu0 %v225
    %1452 = vmatprep.subr.bf16.mxu0 0
    %1453 = vmatpush1.bf16.msra.mxu0 %v226
    %1454 = vmatprep.subr.bf16.mxu0 0
    %1455 = vmatpush1.bf16.msra.mxu0 0
    %1456 = vmatprep.subr.bf16.mxu0 0
    %1457 = vmatpush1.bf16.msra.mxu0 0
    %1458 = vmatprep.subr.bf16.mxu0 0
    %1459 = vmatpush1.bf16.msra.mxu0 0
    %1460 = vmatprep.subr.bf16.mxu0 0
    %1461 = vmatpush1.bf16.msra.mxu0 0
    %1462 = vmatprep.subr.bf16.mxu0 0
    %1463 = vmatpush1.bf16.msra.mxu0 0
    %1464 = vmatprep.subr.bf16.mxu0 0
    %1465 = vmatpush1.bf16.msra.mxu0 0
    %1466 = vmatprep.subr.bf16.mxu0 0
    %1467 = vmatpush1.bf16.msra.mxu0 0
    %1468 = vmatprep.subr.bf16.mxu0 0
    %1469 = vmatpush1.bf16.msra.mxu0 0
    %1470 = vmatprep.subr.bf16.mxu0 0
    %1471 = vmatpush1.bf16.msra.mxu0 0
    %1472 = vmatprep.subr.bf16.mxu0 0
    %1473 = vmatpush1.bf16.msra.mxu0 0
    %1474 = vmatprep.subr.bf16.mxu0 0
    %1475 = vmatpush1.bf16.msra.mxu0 0
    %1476 = vmatprep.subr.bf16.mxu0 0
    %1477 = vmatpush1.bf16.msra.mxu0 0
    %1478 = vmatprep.subr.bf16.mxu0 0
    %1479 = vmatpush1.bf16.msra.mxu0 0
    %1480 = vmatprep.subr.bf16.mxu0 0
    %1481 = vmatpush1.bf16.msra.mxu0 0
    %1482 = vmatprep.mubr.bf16.mxu0 0
    %1483 = vmatmul.mubr.bf16.gmra.mrb[0].mxu0 %v1448
    %v1484 = vpop.f32.mrb[0].mxu0
    %v1485 = vadd.f32 0.0, %v1484
    %v1486 = vpop.f32.mrb[0].mxu0
    %v1487 = vpop.f32.mrb[0].mxu0
    %v1488 = vpop.f32.mrb[0].mxu0
    %1489 = vdwg.mxu0
    %v1491 = vrot.slane %v1485, 2
    %v1493 = vadd.f32 %v905, %v1491
    %v1494 = vxor.u32 %v1493, 2147483648
    %v1495 = vmul.f32 %v1494, 1.442695
    %v1496 = vpow.pop %v1495
    %v1497 = vadd.f32 %v1496, 1.0
    %v1498 = vrcp.pop %v1497
    %v1499 = vmul.f32 1.0, %v1498
    %v1500 = vtanh.pop %v1493
    %v1502 = vrot.slane %v1435, 6
    %v1504 = vmul.f32 %v1499, %v1502
    %1506 = vrot.lane.b32.xlu0 %v1500, 64
    %v1507 = vpop.permute.xlu0 %1506
    %v1509 = vmul.f32 %v1499, %v1507
    %1511 = vrot.lane.b32.xlu0 %v1509, 32
    %v1512 = vpop.permute.xlu0 %1511
    %v1514 = vadd.f32 %v1504, %v1512
    %v1515 = vtanh.pop %v1514
    %1517 = vrot.lane.b32.xlu0 %v1515, 64
    %v1518 = vpop.permute.xlu0 %1517
    %v1520 = vmul.f32 %v1499, %v1518
    %v1523 = vunpack.c.l.s4 1966171168
    %v1524 = vunpack.c.0.s8 %v1523
    %v1525 = vlaneseq
    %v1526 = vshrl.u32 %v1525, 7
    %v1527 = vsub.s32 %v1524, %v1526
    %v1528 = vrot.slane %v972, %v1527
    %v1529 = vcombine.high %v1528, %v1528
    %v1531 = vunpack.c.l.s4 1966171168
    %v1532 = vunpack.c.0.s8 %v1531
    %v1533 = vlaneseq
    %v1534 = vshrl.u32 %v1533, 7
    %v1535 = vsub.s32 %v1532, %v1534
    %v1536 = vrot.slane %v1528, %v1535
    %v1538 = vunpack.c.l.s4 1966171168
    %v1539 = vunpack.c.0.s8 %v1538
    %v1540 = vlaneseq
    %v1541 = vshrl.u32 %v1540, 7
    %v1542 = vsub.s32 %v1539, %v1541
    %v1543 = vrot.slane %v1529, %v1542
    %v1548 = vunpack.c.l.s4 1966171168
    %v1549 = vunpack.c.0.s8 %v1548
    %v1550 = vlaneseq
    %v1551 = vshrl.u32 %v1550, 7
    %v1552 = vsub.s32 %v1549, %v1551
    %v1553 = vrot.slane %v1050, %v1552
    %v1554 = vcombine.high %v1553, %v1553
    %v1556 = vunpack.c.l.s4 1966171168
    %v1557 = vunpack.c.0.s8 %v1556
    %v1558 = vlaneseq
    %v1559 = vshrl.u32 %v1558, 7
    %v1560 = vsub.s32 %v1557, %v1559
    %v1561 = vrot.slane %v1553, %v1560
    %v1563 = vunpack.c.l.s4 1966171168
    %v1564 = vunpack.c.0.s8 %v1563
    %v1565 = vlaneseq
    %v1566 = vshrl.u32 %v1565, 7
    %v1567 = vsub.s32 %v1564, %v1566
    %v1568 = vrot.slane %v1554, %v1567
    %v1569 = vcombine.high %v1561, %v1561
    %v1570 = vcombine.high %v1568, %v1568
    %v1572 = vcombine.high %v1129, %v1129
    %v1574 = vunpack.c.l.s4 1966171168
    %v1575 = vunpack.c.0.s8 %v1574
    %v1576 = vlaneseq
    %v1577 = vshrl.u32 %v1576, 7
    %v1578 = vsub.s32 %v1575, %v1577
    %v1579 = vrot.slane %v1572, %v1578
    %v1580 = vcombine.high %v1579, %v1579
    %v1582 = vunpack.c.l.s4 1966171168
    %v1583 = vunpack.c.0.s8 %v1582
    %v1584 = vlaneseq
    %v1585 = vshrl.u32 %v1584, 7
    %v1586 = vsub.s32 %v1583, %v1585
    %v1587 = vrot.slane %v1579, %v1586
    %v1589 = vunpack.c.l.s4 1966171168
    %v1590 = vunpack.c.0.s8 %v1589
    %v1591 = vlaneseq
    %v1592 = vshrl.u32 %v1591, 7
    %v1593 = vsub.s32 %v1590, %v1592
    %v1594 = vrot.slane %v1580, %v1593
    %v1596 = vcombine.high %v1208, %v1208
    %v1598 = vunpack.c.l.s4 1966171168
    %v1599 = vunpack.c.0.s8 %v1598
    %v1600 = vlaneseq
    %v1601 = vshrl.u32 %v1600, 7
    %v1602 = vsub.s32 %v1599, %v1601
    %v1603 = vrot.slane %v1596, %v1602
    %v1604 = vcombine.high %v1603, %v1603
    %v1606 = vunpack.c.l.s4 1966171168
    %v1607 = vunpack.c.0.s8 %v1606
    %v1608 = vlaneseq
    %v1609 = vshrl.u32 %v1608, 7
    %v1610 = vsub.s32 %v1607, %v1609
    %v1611 = vrot.slane %v1603, %v1610
    %v1613 = vunpack.c.l.s4 1966171168
    %v1614 = vunpack.c.0.s8 %v1613
    %v1615 = vlaneseq
    %v1616 = vshrl.u32 %v1615, 7
    %v1617 = vsub.s32 %v1614, %v1616
    %v1618 = vrot.slane %v1604, %v1617
    %v1619 = vcombine.high %v1611, %v1611
    %v1620 = vcombine.high %v1618, %v1618
    %v1623 = vunpack.c.l.s4 1966171168
    %v1624 = vunpack.c.0.s8 %v1623
    %v1625 = vlaneseq
    %v1626 = vshrl.u32 %v1625, 7
    %v1627 = vsub.s32 %v1624, %v1626
    %v1628 = vrot.slane %v1284, %v1627
    %v1629 = vcombine.high %v1628, %v1628
    %v1631 = vunpack.c.l.s4 1966171168
    %v1632 = vunpack.c.0.s8 %v1631
    %v1633 = vlaneseq
    %v1634 = vshrl.u32 %v1633, 7
    %v1635 = vsub.s32 %v1632, %v1634
    %v1636 = vrot.slane %v1628, %v1635
    %v1638 = vunpack.c.l.s4 1966171168
    %v1639 = vunpack.c.0.s8 %v1638
    %v1640 = vlaneseq
    %v1641 = vshrl.u32 %v1640, 7
    %v1642 = vsub.s32 %v1639, %v1641
    %v1643 = vrot.slane %v1629, %v1642
    %v1646 = vunpack.c.l.s4 1966171168
    %v1647 = vunpack.c.0.s8 %v1646
    %v1648 = vlaneseq
    %v1649 = vshrl.u32 %v1648, 7
    %v1650 = vsub.s32 %v1647, %v1649
    %v1651 = vrot.slane %v1362, %v1650
    %v1652 = vcombine.high %v1651, %v1651
    %v1654 = vunpack.c.l.s4 1966171168
    %v1655 = vunpack.c.0.s8 %v1654
    %v1656 = vlaneseq
    %v1657 = vshrl.u32 %v1656, 7
    %v1658 = vsub.s32 %v1655, %v1657
    %v1659 = vrot.slane %v1651, %v1658
    %v1661 = vunpack.c.l.s4 1966171168
    %v1662 = vunpack.c.0.s8 %v1661
    %v1663 = vlaneseq
    %v1664 = vshrl.u32 %v1663, 7
    %v1665 = vsub.s32 %v1662, %v1664
    %v1666 = vrot.slane %v1652, %v1665
    %v1667 = vcombine.high %v1659, %v1659
    %v1668 = vcombine.high %v1666, %v1666
    %v1670 = vcombine.high %v1441, %v1441
    %v1672 = vunpack.c.l.s4 1966171168
    %v1673 = vunpack.c.0.s8 %v1672
    %v1674 = vlaneseq
    %v1675 = vshrl.u32 %v1674, 7
    %v1676 = vsub.s32 %v1673, %v1675
    %v1677 = vrot.slane %v1670, %v1676
    %v1678 = vcombine.high %v1677, %v1677
    %v1680 = vunpack.c.l.s4 1966171168
    %v1681 = vunpack.c.0.s8 %v1680
    %v1682 = vlaneseq
    %v1683 = vshrl.u32 %v1682, 7
    %v1684 = vsub.s32 %v1681, %v1683
    %v1685 = vrot.slane %v1677, %v1684
    %v1687 = vunpack.c.l.s4 1966171168
    %v1688 = vunpack.c.0.s8 %v1687
    %v1689 = vlaneseq
    %v1690 = vshrl.u32 %v1689, 7
    %v1691 = vsub.s32 %v1688, %v1690
    %v1692 = vrot.slane %v1678, %v1691
    %v1694 = vcombine.high %v1520, %v1520
    %v1696 = vunpack.c.l.s4 1966171168
    %v1697 = vunpack.c.0.s8 %v1696
    %v1698 = vlaneseq
    %v1699 = vshrl.u32 %v1698, 7
    %v1700 = vsub.s32 %v1697, %v1699
    %v1701 = vrot.slane %v1694, %v1700
    %v1702 = vcombine.high %v1701, %v1701
    %v1704 = vunpack.c.l.s4 1966171168
    %v1705 = vunpack.c.0.s8 %v1704
    %v1706 = vlaneseq
    %v1707 = vshrl.u32 %v1706, 7
    %v1708 = vsub.s32 %v1705, %v1707
    %v1709 = vrot.slane %v1701, %v1708
    %v1711 = vunpack.c.l.s4 1966171168
    %v1712 = vunpack.c.0.s8 %v1711
    %v1713 = vlaneseq
    %v1714 = vshrl.u32 %v1713, 7
    %v1715 = vsub.s32 %v1712, %v1714
    %v1716 = vrot.slane %v1702, %v1715
    %v1717 = vcombine.high %v1709, %v1709
    %v1718 = vcombine.high %v1716, %v1716
    %v1719 = vlaneseq
    %v1720 = vshrl.u32 %v1719, 7
    %v1721 = vsub.s32 0, %v1720
    %v1722 = vrot.slane %v1569, %v1721
    %v1723 = vlaneseq
    %v1724 = vshrl.u32 %v1723, 7
    %v1725 = vsub.s32 0, %v1724
    %v1726 = vrot.slane %v1570, %v1725
    %v1729 = vlaneseq
    %v1730 = vshrl.u32 %v1729, 7
    %v1731 = vsub.s32 0, %v1730
    %v1732 = vrot.slane %v1587, %v1731
    %v1733 = vlaneseq
    %v1734 = vshrl.u32 %v1733, 7
    %v1735 = vsub.s32 0, %v1734
    %v1736 = vrot.slane %v1594, %v1735
    %v1739 = vlaneseq
    %v1740 = vshrl.u32 %v1739, 7
    %v1741 = vsub.s32 0, %v1740
    %v1742 = vrot.slane %v1619, %v1741
    %v1743 = vlaneseq
    %v1744 = vshrl.u32 %v1743, 7
    %v1745 = vsub.s32 0, %v1744
    %v1746 = vrot.slane %v1620, %v1745
    %v1749 = vlaneseq
    %v1750 = vshrl.u32 %v1749, 7
    %v1751 = vsub.s32 0, %v1750
    %v1752 = vrot.slane %v1636, %v1751
    %v1753 = vlaneseq
    %v1754 = vshrl.u32 %v1753, 7
    %v1755 = vsub.s32 0, %v1754
    %v1756 = vrot.slane %v1643, %v1755
    %v1759 = vlaneseq
    %v1760 = vshrl.u32 %v1759, 7
    %v1761 = vsub.s32 0, %v1760
    %v1762 = vrot.slane %v1667, %v1761
    %v1763 = vlaneseq
    %v1764 = vshrl.u32 %v1763, 7
    %v1765 = vsub.s32 0, %v1764
    %v1766 = vrot.slane %v1668, %v1765
    %v1769 = vlaneseq
    %v1770 = vshrl.u32 %v1769, 7
    %v1771 = vsub.s32 0, %v1770
    %v1772 = vrot.slane %v1685, %v1771
    %v1773 = vlaneseq
    %v1774 = vshrl.u32 %v1773, 7
    %v1775 = vsub.s32 0, %v1774
    %v1776 = vrot.slane %v1692, %v1775
    %v1779 = vlaneseq
    %v1780 = vshrl.u32 %v1779, 7
    %v1781 = vsub.s32 0, %v1780
    %v1782 = vrot.slane %v1717, %v1781
    %v1783 = vlaneseq
    %v1784 = vshrl.u32 %v1783, 7
    %v1785 = vsub.s32 0, %v1784
    %v1786 = vrot.slane %v1718, %v1785
    %vm1789 = vcmask 1040384
    %v1790 = vsel %vm1789, %v1536, %v1722
    %v1791 = vsel %vm1789, %v1543, %v1726
    %v1792 = vsel %vm164, %v1790, %v1732
    %v1793 = vsel %vm164, %v1791, %v1736
    %vm1794 = vcmask 1042432
    %v1795 = vsel %vm1794, %v1792, %v1742
    %v1796 = vsel %vm1794, %v1793, %v1746
    %v1797 = vsel %vm166, %v1795, %v1752
    %v1798 = vsel %vm166, %v1796, %v1756
    %vm1799 = vcmask 1044480
    %v1800 = vsel %vm1799, %v1797, %v1762
    %v1801 = vsel %vm1799, %v1798, %v1766
    %v1802 = vsel %vm168, %v1800, %v1772
    %v1803 = vsel %vm168, %v1801, %v1776
    %vm1804 = vcmask 1046528
    %v1805 = vsel %vm1804, %v1802, %v1782
    %v1806 = vsel %vm1804, %v1803, %v1786
    %v1807 = vpack.c.bf16 %v1806, %v1805
    %v1808 = vld [vmem:[#allocation2 + $0xd0] sm:$0xff]
    %v1809 = vld [vmem:[#allocation2 + $0xd8] sm:$0xff]
    %v1810 = vld [vmem:[#allocation2 + $0xe0] sm:$0xff]
    %v1811 = vld [vmem:[#allocation2 + $0xe8] sm:$0xff]
    %v1812 = vpack.c.bf16 %v1809, %v1808
    %v1813 = vpack.c.bf16 %v1811, %v1810
    %v1814 = vld [vmem:[#allocation2 + $0x1a8] sm:$0x1]
    %v1815 = vlaneseq
    %v1816 = vshrl.u32 %v1815, 7
    %v1817 = vsub.s32 0, %v1816
    %v1818 = vrot.slane %v1814, %v1817
    %1820 = vrot.lane.b32.xlu0 %v1807, 32
    %v1821 = vpop.permute.xlu0 %1820
    %v1823 = vsel %vm45, %v1821, 0
    %1825 = vmatprep.subr.bf16.mxu0 0
    %1826 = vmatpush1.bf16.msra.mxu0 %v1812
    %1827 = vmatprep.subr.bf16.mxu0 0
    %1828 = vmatpush1.bf16.msra.mxu0 %v1813
    %1829 = vmatprep.subr.bf16.mxu0 0
    %1830 = vmatpush1.bf16.msra.mxu0 0
    %1831 = vmatprep.subr.bf16.mxu0 0
    %1832 = vmatpush1.bf16.msra.mxu0 0
    %1833 = vmatprep.subr.bf16.mxu0 0
    %1834 = vmatpush1.bf16.msra.mxu0 0
    %1835 = vmatprep.subr.bf16.mxu0 0
    %1836 = vmatpush1.bf16.msra.mxu0 0
    %1837 = vmatprep.subr.bf16.mxu0 0
    %1838 = vmatpush1.bf16.msra.mxu0 0
    %1839 = vmatprep.subr.bf16.mxu0 0
    %1840 = vmatpush1.bf16.msra.mxu0 0
    %1841 = vmatprep.subr.bf16.mxu0 0
    %1842 = vmatpush1.bf16.msra.mxu0 0
    %1843 = vmatprep.subr.bf16.mxu0 0
    %1844 = vmatpush1.bf16.msra.mxu0 0
    %1845 = vmatprep.subr.bf16.mxu0 0
    %1846 = vmatpush1.bf16.msra.mxu0 0
    %1847 = vmatprep.subr.bf16.mxu0 0
    %1848 = vmatpush1.bf16.msra.mxu0 0
    %1849 = vmatprep.subr.bf16.mxu0 0
    %1850 = vmatpush1.bf16.msra.mxu0 0
    %1851 = vmatprep.subr.bf16.mxu0 0
    %1852 = vmatpush1.bf16.msra.mxu0 0
    %1853 = vmatprep.subr.bf16.mxu0 0
    %1854 = vmatpush1.bf16.msra.mxu0 0
    %1855 = vmatprep.subr.bf16.mxu0 0
    %1856 = vmatpush1.bf16.msra.mxu0 0
    %1857 = vmatprep.mubr.bf16.mxu0 0
    %1858 = vmatmul.mubr.bf16.gmra.mrb[0].mxu0 %v1823
    %v1859 = vpop.f32.mrb[0].mxu0
    %v1860 = vadd.f32 %v1818, %v1859
    %v1861 = vpop.f32.mrb[0].mxu0
    %v1862 = vpop.f32.mrb[0].mxu0
    %v1863 = vadd.f32 %v1818, %v1862
    %v1864 = vpop.f32.mrb[0].mxu0
    %1865 = vdwg.mxu0
    %1868 = vrot.lane.b32.xlu0 %v1860, 104
    %v1869 = vpop.permute.xlu0 %1868
    %1870 = vrot.lane.b32.xlu0 %v1863, 104
    %v1871 = vpop.permute.xlu0 %1870
    %1874 = vrot.lane.b32.xlu0 %v1860, 80
    %v1875 = vpop.permute.xlu0 %1874
    %1876 = vrot.lane.b32.xlu0 %v1863, 80
    %v1877 = vpop.permute.xlu0 %1876
    %1880 = vrot.lane.b32.xlu0 %v1860, 56
    %v1881 = vpop.permute.xlu0 %1880
    %1882 = vrot.lane.b32.xlu0 %v1863, 56
    %v1883 = vpop.permute.xlu0 %1882
    %v1886 = vpack.c.bf16 %v1860, %v1860
    %v1887 = vpack.c.bf16 %v1863, %v1863
    %v1888 = vpack.c.bf16 %v1869, %v1869
    %v1889 = vpack.c.bf16 %v1871, %v1871
    %v1890 = vpack.c.bf16 %v1875, %v1875
    %v1891 = vpack.c.bf16 %v1877, %v1877
    %v1892 = vpack.c.bf16 %v1881, %v1881
    %v1893 = vpack.c.bf16 %v1883, %v1883
    %1895 = vrot.lane.b32.xlu0 %v1886, 120
    %v1896 = vpop.permute.xlu0 %1895
    %vm1897 = vcmask 64512
    %v1899 = vsel %vm1897, %v1886, 0
    %v1902 = vsel %vm1897, %v1896, 0
    %1904 = vmatprep.subr.bf16.mxu0 0
    %1905 = vmatpush1.bf16.xpose.msra.mxu0 %v1902
    %1906 = vmatprep.subr.bf16.mxu0 0
    %1907 = vmatpush1.bf16.xpose.msra.mxu0 0
    %1908 = vmatprep.subr.bf16.mxu0 0
    %1909 = vmatpush1.bf16.xpose.msra.mxu0 0
    %1910 = vmatprep.subr.bf16.mxu0 0
    %1911 = vmatpush1.bf16.xpose.msra.mxu0 0
    %1912 = vmatprep.subr.bf16.mxu0 0
    %1913 = vmatpush1.bf16.xpose.msra.mxu0 0
    %1914 = vmatprep.subr.bf16.mxu0 0
    %1915 = vmatpush1.bf16.xpose.msra.mxu0 0
    %1916 = vmatprep.subr.bf16.mxu0 0
    %1917 = vmatpush1.bf16.xpose.msra.mxu0 0
    %1918 = vmatprep.subr.bf16.mxu0 0
    %1919 = vmatpush1.bf16.xpose.msra.mxu0 0
    %1920 = vmatprep.subr.bf16.mxu0 0
    %1921 = vmatpush1.bf16.xpose.msra.mxu0 0
    %1922 = vmatprep.subr.bf16.mxu0 0
    %1923 = vmatpush1.bf16.xpose.msra.mxu0 0
    %1924 = vmatprep.subr.bf16.mxu0 0
    %1925 = vmatpush1.bf16.xpose.msra.mxu0 0
    %1926 = vmatprep.subr.bf16.mxu0 0
    %1927 = vmatpush1.bf16.xpose.msra.mxu0 0
    %1928 = vmatprep.subr.bf16.mxu0 0
    %1929 = vmatpush1.bf16.xpose.msra.mxu0 0
    %1930 = vmatprep.subr.bf16.mxu0 0
    %1931 = vmatpush1.bf16.xpose.msra.mxu0 0
    %1932 = vmatprep.subr.bf16.mxu0 0
    %1933 = vmatpush1.bf16.xpose.msra.mxu0 0
    %1934 = vmatprep.subr.bf16.mxu0 0
    %1935 = vmatpush1.bf16.xpose.msra.mxu0 0
    %1936 = vmatprep.mubr.bf16.mxu0 0
    %1937 = vmatmul.mubr.bf16.gmra.mrb[0].mxu0 %v1899
    %v1938 = vpop.f32.mrb[0].mxu0
    %v1939 = vadd.f32 0.0, %v1938
    %v1940 = vpop.f32.mrb[0].mxu0
    %v1941 = vpop.f32.mrb[0].mxu0
    %v1942 = vpop.f32.mrb[0].mxu0
    %1943 = vdwg.mxu0
    %1945 = vrot.lane.b32.xlu0 %v1887, 120
    %v1946 = vpop.permute.xlu0 %1945
    %v1948 = vsel %vm1897, %v1887, 0
    %v1951 = vsel %vm1897, %v1946, 0
    %1953 = vmatprep.subr.bf16.mxu0 0
    %1954 = vmatpush1.bf16.xpose.msra.mxu0 %v1951
    %1955 = vmatprep.subr.bf16.mxu0 0
    %1956 = vmatpush1.bf16.xpose.msra.mxu0 0
    %1957 = vmatprep.subr.bf16.mxu0 0
    %1958 = vmatpush1.bf16.xpose.msra.mxu0 0
    %1959 = vmatprep.subr.bf16.mxu0 0
    %1960 = vmatpush1.bf16.xpose.msra.mxu0 0
    %1961 = vmatprep.subr.bf16.mxu0 0
    %1962 = vmatpush1.bf16.xpose.msra.mxu0 0
    %1963 = vmatprep.subr.bf16.mxu0 0
    %1964 = vmatpush1.bf16.xpose.msra.mxu0 0
    %1965 = vmatprep.subr.bf16.mxu0 0
    %1966 = vmatpush1.bf16.xpose.msra.mxu0 0
    %1967 = vmatprep.subr.bf16.mxu0 0
    %1968 = vmatpush1.bf16.xpose.msra.mxu0 0
    %1969 = vmatprep.subr.bf16.mxu0 0
    %1970 = vmatpush1.bf16.xpose.msra.mxu0 0
    %1971 = vmatprep.subr.bf16.mxu0 0
    %1972 = vmatpush1.bf16.xpose.msra.mxu0 0
    %1973 = vmatprep.subr.bf16.mxu0 0
    %1974 = vmatpush1.bf16.xpose.msra.mxu0 0
    %1975 = vmatprep.subr.bf16.mxu0 0
    %1976 = vmatpush1.bf16.xpose.msra.mxu0 0
    %1977 = vmatprep.subr.bf16.mxu0 0
    %1978 = vmatpush1.bf16.xpose.msra.mxu0 0
    %1979 = vmatprep.subr.bf16.mxu0 0
    %1980 = vmatpush1.bf16.xpose.msra.mxu0 0
    %1981 = vmatprep.subr.bf16.mxu0 0
    %1982 = vmatpush1.bf16.xpose.msra.mxu0 0
    %1983 = vmatprep.subr.bf16.mxu0 0
    %1984 = vmatpush1.bf16.xpose.msra.mxu0 0
    %1985 = vmatprep.mubr.bf16.mxu0 0
    %1986 = vmatmul.mubr.bf16.gmra.mrb[0].mxu0 %v1948
    %v1987 = vpop.f32.mrb[0].mxu0
    %v1988 = vadd.f32 0.0, %v1987
    %v1989 = vpop.f32.mrb[0].mxu0
    %v1990 = vpop.f32.mrb[0].mxu0
    %v1991 = vpop.f32.mrb[0].mxu0
    %1992 = vdwg.mxu0
    %1994 = vrot.lane.b32.xlu0 %v1888, 120
    %v1995 = vpop.permute.xlu0 %1994
    %v1997 = vsel %vm1897, %v1888, 0
    %v2000 = vsel %vm1897, %v1995, 0
    %2002 = vmatprep.subr.bf16.mxu0 0
    %2003 = vmatpush1.bf16.xpose.msra.mxu0 %v2000
    %2004 = vmatprep.subr.bf16.mxu0 0
    %2005 = vmatpush1.bf16.xpose.msra.mxu0 0
    %2006 = vmatprep.subr.bf16.mxu0 0
    %2007 = vmatpush1.bf16.xpose.msra.mxu0 0
    %2008 = vmatprep.subr.bf16.mxu0 0
    %2009 = vmatpush1.bf16.xpose.msra.mxu0 0
    %2010 = vmatprep.subr.bf16.mxu0 0
    %2011 = vmatpush1.bf16.xpose.msra.mxu0 0
    %2012 = vmatprep.subr.bf16.mxu0 0
    %2013 = vmatpush1.bf16.xpose.msra.mxu0 0
    %2014 = vmatprep.subr.bf16.mxu0 0
    %2015 = vmatpush1.bf16.xpose.msra.mxu0 0
    %2016 = vmatprep.subr.bf16.mxu0 0
    %2017 = vmatpush1.bf16.xpose.msra.mxu0 0
    %2018 = vmatprep.subr.bf16.mxu0 0
    %2019 = vmatpush1.bf16.xpose.msra.mxu0 0
    %2020 = vmatprep.subr.bf16.mxu0 0
    %2021 = vmatpush1.bf16.xpose.msra.mxu0 0
    %2022 = vmatprep.subr.bf16.mxu0 0
    %2023 = vmatpush1.bf16.xpose.msra.mxu0 0
    %2024 = vmatprep.subr.bf16.mxu0 0
    %2025 = vmatpush1.bf16.xpose.msra.mxu0 0
    %2026 = vmatprep.subr.bf16.mxu0 0
    %2027 = vmatpush1.bf16.xpose.msra.mxu0 0
    %2028 = vmatprep.subr.bf16.mxu0 0
    %2029 = vmatpush1.bf16.xpose.msra.mxu0 0
    %2030 = vmatprep.subr.bf16.mxu0 0
    %2031 = vmatpush1.bf16.xpose.msra.mxu0 0
    %2032 = vmatprep.subr.bf16.mxu0 0
    %2033 = vmatpush1.bf16.xpose.msra.mxu0 0
    %2034 = vmatprep.mubr.bf16.mxu0 0
    %2035 = vmatmul.mubr.bf16.gmra.mrb[0].mxu0 %v1997
    %v2036 = vpop.f32.mrb[0].mxu0
    %v2037 = vadd.f32 0.0, %v2036
    %v2038 = vpop.f32.mrb[0].mxu0
    %v2039 = vpop.f32.mrb[0].mxu0
    %v2040 = vpop.f32.mrb[0].mxu0
    %2041 = vdwg.mxu0
    %2043 = vrot.lane.b32.xlu0 %v1889, 120
    %v2044 = vpop.permute.xlu0 %2043
    %v2046 = vsel %vm1897, %v1889, 0
    %v2049 = vsel %vm1897, %v2044, 0
    %2051 = vmatprep.subr.bf16.mxu0 0
    %2052 = vmatpush1.bf16.xpose.msra.mxu0 %v2049
    %2053 = vmatprep.subr.bf16.mxu0 0
    %2054 = vmatpush1.bf16.xpose.msra.mxu0 0
    %2055 = vmatprep.subr.bf16.mxu0 0
    %2056 = vmatpush1.bf16.xpose.msra.mxu0 0
    %2057 = vmatprep.subr.bf16.mxu0 0
    %2058 = vmatpush1.bf16.xpose.msra.mxu0 0
    %2059 = vmatprep.subr.bf16.mxu0 0
    %2060 = vmatpush1.bf16.xpose.msra.mxu0 0
    %2061 = vmatprep.subr.bf16.mxu0 0
    %2062 = vmatpush1.bf16.xpose.msra.mxu0 0
    %2063 = vmatprep.subr.bf16.mxu0 0
    %2064 = vmatpush1.bf16.xpose.msra.mxu0 0
    %2065 = vmatprep.subr.bf16.mxu0 0
    %2066 = vmatpush1.bf16.xpose.msra.mxu0 0
    %2067 = vmatprep.subr.bf16.mxu0 0
    %2068 = vmatpush1.bf16.xpose.msra.mxu0 0
    %2069 = vmatprep.subr.bf16.mxu0 0
    %2070 = vmatpush1.bf16.xpose.msra.mxu0 0
    %2071 = vmatprep.subr.bf16.mxu0 0
    %2072 = vmatpush1.bf16.xpose.msra.mxu0 0
    %2073 = vmatprep.subr.bf16.mxu0 0
    %2074 = vmatpush1.bf16.xpose.msra.mxu0 0
    %2075 = vmatprep.subr.bf16.mxu0 0
    %2076 = vmatpush1.bf16.xpose.msra.mxu0 0
    %2077 = vmatprep.subr.bf16.mxu0 0
    %2078 = vmatpush1.bf16.xpose.msra.mxu0 0
    %2079 = vmatprep.subr.bf16.mxu0 0
    %2080 = vmatpush1.bf16.xpose.msra.mxu0 0
    %2081 = vmatprep.subr.bf16.mxu0 0
    %2082 = vmatpush1.bf16.xpose.msra.mxu0 0
    %2083 = vmatprep.mubr.bf16.mxu0 0
    %2084 = vmatmul.mubr.bf16.gmra.mrb[0].mxu0 %v2046
    %v2085 = vpop.f32.mrb[0].mxu0
    %v2086 = vadd.f32 0.0, %v2085
    %v2087 = vpop.f32.mrb[0].mxu0
    %v2088 = vpop.f32.mrb[0].mxu0
    %v2089 = vpop.f32.mrb[0].mxu0
    %2090 = vdwg.mxu0
    %2092 = vrot.lane.b32.xlu0 %v1890, 120
    %v2093 = vpop.permute.xlu0 %2092
    %v2095 = vsel %vm1897, %v1890, 0
    %v2098 = vsel %vm1897, %v2093, 0
    %2100 = vmatprep.subr.bf16.mxu0 0
    %2101 = vmatpush1.bf16.xpose.msra.mxu0 %v2098
    %2102 = vmatprep.subr.bf16.mxu0 0
    %2103 = vmatpush1.bf16.xpose.msra.mxu0 0
    %2104 = vmatprep.subr.bf16.mxu0 0
    %2105 = vmatpush1.bf16.xpose.msra.mxu0 0
    %2106 = vmatprep.subr.bf16.mxu0 0
    %2107 = vmatpush1.bf16.xpose.msra.mxu0 0
    %2108 = vmatprep.subr.bf16.mxu0 0
    %2109 = vmatpush1.bf16.xpose.msra.mxu0 0
    %2110 = vmatprep.subr.bf16.mxu0 0
    %2111 = vmatpush1.bf16.xpose.msra.mxu0 0
    %2112 = vmatprep.subr.bf16.mxu0 0
    %2113 = vmatpush1.bf16.xpose.msra.mxu0 0
    %2114 = vmatprep.subr.bf16.mxu0 0
    %2115 = vmatpush1.bf16.xpose.msra.mxu0 0
    %2116 = vmatprep.subr.bf16.mxu0 0
    %2117 = vmatpush1.bf16.xpose.msra.mxu0 0
    %2118 = vmatprep.subr.bf16.mxu0 0
    %2119 = vmatpush1.bf16.xpose.msra.mxu0 0
    %2120 = vmatprep.subr.bf16.mxu0 0
    %2121 = vmatpush1.bf16.xpose.msra.mxu0 0
    %2122 = vmatprep.subr.bf16.mxu0 0
    %2123 = vmatpush1.bf16.xpose.msra.mxu0 0
    %2124 = vmatprep.subr.bf16.mxu0 0
    %2125 = vmatpush1.bf16.xpose.msra.mxu0 0
    %2126 = vmatprep.subr.bf16.mxu0 0
    %2127 = vmatpush1.bf16.xpose.msra.mxu0 0
    %2128 = vmatprep.subr.bf16.mxu0 0
    %2129 = vmatpush1.bf16.xpose.msra.mxu0 0
    %2130 = vmatprep.subr.bf16.mxu0 0
    %2131 = vmatpush1.bf16.xpose.msra.mxu0 0
    %2132 = vmatprep.mubr.bf16.mxu0 0
    %2133 = vmatmul.mubr.bf16.gmra.mrb[0].mxu0 %v2095
    %v2134 = vpop.f32.mrb[0].mxu0
    %v2135 = vadd.f32 0.0, %v2134
    %v2136 = vpop.f32.mrb[0].mxu0
    %v2137 = vpop.f32.mrb[0].mxu0
    %v2138 = vpop.f32.mrb[0].mxu0
    %2139 = vdwg.mxu0
    %2141 = vrot.lane.b32.xlu0 %v1891, 120
    %v2142 = vpop.permute.xlu0 %2141
    %v2144 = vsel %vm1897, %v1891, 0
    %v2147 = vsel %vm1897, %v2142, 0
    %2149 = vmatprep.subr.bf16.mxu0 0
    %2150 = vmatpush1.bf16.xpose.msra.mxu0 %v2147
    %2151 = vmatprep.subr.bf16.mxu0 0
    %2152 = vmatpush1.bf16.xpose.msra.mxu0 0
    %2153 = vmatprep.subr.bf16.mxu0 0
    %2154 = vmatpush1.bf16.xpose.msra.mxu0 0
    %2155 = vmatprep.subr.bf16.mxu0 0
    %2156 = vmatpush1.bf16.xpose.msra.mxu0 0
    %2157 = vmatprep.subr.bf16.mxu0 0
    %2158 = vmatpush1.bf16.xpose.msra.mxu0 0
    %2159 = vmatprep.subr.bf16.mxu0 0
    %2160 = vmatpush1.bf16.xpose.msra.mxu0 0
    %2161 = vmatprep.subr.bf16.mxu0 0
    %2162 = vmatpush1.bf16.xpose.msra.mxu0 0
    %2163 = vmatprep.subr.bf16.mxu0 0
    %2164 = vmatpush1.bf16.xpose.msra.mxu0 0
    %2165 = vmatprep.subr.bf16.mxu0 0
    %2166 = vmatpush1.bf16.xpose.msra.mxu0 0
    %2167 = vmatprep.subr.bf16.mxu0 0
    %2168 = vmatpush1.bf16.xpose.msra.mxu0 0
    %2169 = vmatprep.subr.bf16.mxu0 0
    %2170 = vmatpush1.bf16.xpose.msra.mxu0 0
    %2171 = vmatprep.subr.bf16.mxu0 0
    %2172 = vmatpush1.bf16.xpose.msra.mxu0 0
    %2173 = vmatprep.subr.bf16.mxu0 0
    %2174 = vmatpush1.bf16.xpose.msra.mxu0 0
    %2175 = vmatprep.subr.bf16.mxu0 0
    %2176 = vmatpush1.bf16.xpose.msra.mxu0 0
    %2177 = vmatprep.subr.bf16.mxu0 0
    %2178 = vmatpush1.bf16.xpose.msra.mxu0 0
    %2179 = vmatprep.subr.bf16.mxu0 0
    %2180 = vmatpush1.bf16.xpose.msra.mxu0 0
    %2181 = vmatprep.mubr.bf16.mxu0 0
    %2182 = vmatmul.mubr.bf16.gmra.mrb[0].mxu0 %v2144
    %v2183 = vpop.f32.mrb[0].mxu0
    %v2184 = vadd.f32 0.0, %v2183
    %v2185 = vpop.f32.mrb[0].mxu0
    %v2186 = vpop.f32.mrb[0].mxu0
    %v2187 = vpop.f32.mrb[0].mxu0
    %2188 = vdwg.mxu0
    %2190 = vrot.lane.b32.xlu0 %v1892, 120
    %v2191 = vpop.permute.xlu0 %2190
    %v2193 = vsel %vm1897, %v1892, 0
    %v2196 = vsel %vm1897, %v2191, 0
    %2198 = vmatprep.subr.bf16.mxu0 0
    %2199 = vmatpush1.bf16.xpose.msra.mxu0 %v2196
    %2200 = vmatprep.subr.bf16.mxu0 0
    %2201 = vmatpush1.bf16.xpose.msra.mxu0 0
    %2202 = vmatprep.subr.bf16.mxu0 0
    %2203 = vmatpush1.bf16.xpose.msra.mxu0 0
    %2204 = vmatprep.subr.bf16.mxu0 0
    %2205 = vmatpush1.bf16.xpose.msra.mxu0 0
    %2206 = vmatprep.subr.bf16.mxu0 0
    %2207 = vmatpush1.bf16.xpose.msra.mxu0 0
    %2208 = vmatprep.subr.bf16.mxu0 0
    %2209 = vmatpush1.bf16.xpose.msra.mxu0 0
    %2210 = vmatprep.subr.bf16.mxu0 0
    %2211 = vmatpush1.bf16.xpose.msra.mxu0 0
    %2212 = vmatprep.subr.bf16.mxu0 0
    %2213 = vmatpush1.bf16.xpose.msra.mxu0 0
    %2214 = vmatprep.subr.bf16.mxu0 0
    %2215 = vmatpush1.bf16.xpose.msra.mxu0 0
    %2216 = vmatprep.subr.bf16.mxu0 0
    %2217 = vmatpush1.bf16.xpose.msra.mxu0 0
    %2218 = vmatprep.subr.bf16.mxu0 0
    %2219 = vmatpush1.bf16.xpose.msra.mxu0 0
    %2220 = vmatprep.subr.bf16.mxu0 0
    %2221 = vmatpush1.bf16.xpose.msra.mxu0 0
    %2222 = vmatprep.subr.bf16.mxu0 0
    %2223 = vmatpush1.bf16.xpose.msra.mxu0 0
    %2224 = vmatprep.subr.bf16.mxu0 0
    %2225 = vmatpush1.bf16.xpose.msra.mxu0 0
    %2226 = vmatprep.subr.bf16.mxu0 0
    %2227 = vmatpush1.bf16.xpose.msra.mxu0 0
    %2228 = vmatprep.subr.bf16.mxu0 0
    %2229 = vmatpush1.bf16.xpose.msra.mxu0 0
    %2230 = vmatprep.mubr.bf16.mxu0 0
    %2231 = vmatmul.mubr.bf16.gmra.mrb[0].mxu0 %v2193
    %v2232 = vpop.f32.mrb[0].mxu0
    %v2233 = vadd.f32 0.0, %v2232
    %v2234 = vpop.f32.mrb[0].mxu0
    %v2235 = vpop.f32.mrb[0].mxu0
    %v2236 = vpop.f32.mrb[0].mxu0
    %2237 = vdwg.mxu0
    %2239 = vrot.lane.b32.xlu0 %v1893, 120
    %v2240 = vpop.permute.xlu0 %2239
    %v2242 = vsel %vm1897, %v1893, 0
    %v2245 = vsel %vm1897, %v2240, 0
    %2247 = vmatprep.subr.bf16.mxu0 0
    %2248 = vmatpush1.bf16.xpose.msra.mxu0 %v2245
    %2249 = vmatprep.subr.bf16.mxu0 0
    %2250 = vmatpush1.bf16.xpose.msra.mxu0 0
    %2251 = vmatprep.subr.bf16.mxu0 0
    %2252 = vmatpush1.bf16.xpose.msra.mxu0 0
    %2253 = vmatprep.subr.bf16.mxu0 0
    %2254 = vmatpush1.bf16.xpose.msra.mxu0 0
    %2255 = vmatprep.subr.bf16.mxu0 0
    %2256 = vmatpush1.bf16.xpose.msra.mxu0 0
    %2257 = vmatprep.subr.bf16.mxu0 0
    %2258 = vmatpush1.bf16.xpose.msra.mxu0 0
    %2259 = vmatprep.subr.bf16.mxu0 0
    %2260 = vmatpush1.bf16.xpose.msra.mxu0 0
    %2261 = vmatprep.subr.bf16.mxu0 0
    %2262 = vmatpush1.bf16.xpose.msra.mxu0 0
    %2263 = vmatprep.subr.bf16.mxu0 0
    %2264 = vmatpush1.bf16.xpose.msra.mxu0 0
    %2265 = vmatprep.subr.bf16.mxu0 0
    %2266 = vmatpush1.bf16.xpose.msra.mxu0 0
    %2267 = vmatprep.subr.bf16.mxu0 0
    %2268 = vmatpush1.bf16.xpose.msra.mxu0 0
    %2269 = vmatprep.subr.bf16.mxu0 0
    %2270 = vmatpush1.bf16.xpose.msra.mxu0 0
    %2271 = vmatprep.subr.bf16.mxu0 0
    %2272 = vmatpush1.bf16.xpose.msra.mxu0 0
    %2273 = vmatprep.subr.bf16.mxu0 0
    %2274 = vmatpush1.bf16.xpose.msra.mxu0 0
    %2275 = vmatprep.subr.bf16.mxu0 0
    %2276 = vmatpush1.bf16.xpose.msra.mxu0 0
    %2277 = vmatprep.subr.bf16.mxu0 0
    %2278 = vmatpush1.bf16.xpose.msra.mxu0 0
    %2279 = vmatprep.mubr.bf16.mxu0 0
    %2280 = vmatmul.mubr.bf16.gmra.mrb[0].mxu0 %v2242
    %v2281 = vpop.f32.mrb[0].mxu0
    %v2282 = vadd.f32 0.0, %v2281
    %v2283 = vpop.f32.mrb[0].mxu0
    %v2284 = vpop.f32.mrb[0].mxu0
    %v2285 = vpop.f32.mrb[0].mxu0
    %2286 = vdwg.mxu0
    %v2287 = vmul.f32 %v1939, 0.35355338
    %v2288 = vmul.f32 %v1988, 0.35355338
    %v2289 = vmul.f32 %v2037, 0.35355338
    %v2290 = vmul.f32 %v2086, 0.35355338
    %v2291 = vmul.f32 %v2135, 0.35355338
    %v2292 = vmul.f32 %v2184, 0.35355338
    %v2293 = vmul.f32 %v2233, 0.35355338
    %v2294 = vmul.f32 %v2282, 0.35355338
    %v2295 = vsel %vm1897, %v2287, -inf
    %2296 = vmax.xlane.f32.xlu0 %v2295
    %v2297 = vpop.xlane.xlu0 %2296
    %v2298 = vsel %vm1897, %v2288, -inf
    %2299 = vmax.xlane.f32.xlu0 %v2298
    %v2300 = vpop.xlane.xlu0 %2299
    %v2301 = vsel %vm1897, %v2289, -inf
    %2302 = vmax.xlane.f32.xlu0 %v2301
    %v2303 = vpop.xlane.xlu0 %2302
    %v2304 = vsel %vm1897, %v2290, -inf
    %2305 = vmax.xlane.f32.xlu0 %v2304
    %v2306 = vpop.xlane.xlu0 %2305
    %v2307 = vsel %vm1897, %v2291, -inf
    %2308 = vmax.xlane.f32.xlu0 %v2307
    %v2309 = vpop.xlane.xlu0 %2308
    %v2310 = vsel %vm1897, %v2292, -inf
    %2311 = vmax.xlane.f32.xlu0 %v2310
    %v2312 = vpop.xlane.xlu0 %2311
    %v2313 = vsel %vm1897, %v2293, -inf
    %2314 = vmax.xlane.f32.xlu0 %v2313
    %v2315 = vpop.xlane.xlu0 %2314
    %v2316 = vsel %vm1897, %v2294, -inf
    %2317 = vmax.xlane.f32.xlu0 %v2316
    %v2318 = vpop.xlane.xlu0 %2317
    %v2319 = vsub.f32 %v2287, %v2297
    %v2320 = vsub.f32 %v2288, %v2300
    %v2321 = vsub.f32 %v2289, %v2303
    %v2322 = vsub.f32 %v2290, %v2306
    %v2323 = vsub.f32 %v2291, %v2309
    %v2324 = vsub.f32 %v2292, %v2312
    %v2325 = vsub.f32 %v2293, %v2315
    %v2326 = vsub.f32 %v2294, %v2318
    %v2327 = vmul.f32 %v2319, 1.442695
    %v2328 = vpow.pop %v2327
    %v2329 = vmul.f32 %v2320, 1.442695
    %v2330 = vpow.pop %v2329
    %v2331 = vmul.f32 %v2321, 1.442695
    %v2332 = vpow.pop %v2331
    %v2333 = vmul.f32 %v2322, 1.442695
    %v2334 = vpow.pop %v2333
    %v2335 = vmul.f32 %v2323, 1.442695
    %v2336 = vpow.pop %v2335
    %v2337 = vmul.f32 %v2324, 1.442695
    %v2338 = vpow.pop %v2337
    %v2339 = vmul.f32 %v2325, 1.442695
    %v2340 = vpow.pop %v2339
    %v2341 = vmul.f32 %v2326, 1.442695
    %v2342 = vpow.pop %v2341
    %v2343 = vsel %vm1897, %v2328, 0.0
    %2344 = vadd.xlane.f32.xlu0 %v2343
    %v2345 = vpop.xlane.xlu0 %2344
    %v2346 = vsel %vm1897, %v2330, 0.0
    %2347 = vadd.xlane.f32.xlu0 %v2346
    %v2348 = vpop.xlane.xlu0 %2347
    %v2349 = vsel %vm1897, %v2332, 0.0
    %2350 = vadd.xlane.f32.xlu0 %v2349
    %v2351 = vpop.xlane.xlu0 %2350
    %v2352 = vsel %vm1897, %v2334, 0.0
    %2353 = vadd.xlane.f32.xlu0 %v2352
    %v2354 = vpop.xlane.xlu0 %2353
    %v2355 = vsel %vm1897, %v2336, 0.0
    %2356 = vadd.xlane.f32.xlu0 %v2355
    %v2357 = vpop.xlane.xlu0 %2356
    %v2358 = vsel %vm1897, %v2338, 0.0
    %2359 = vadd.xlane.f32.xlu0 %v2358
    %v2360 = vpop.xlane.xlu0 %2359
    %v2361 = vsel %vm1897, %v2340, 0.0
    %2362 = vadd.xlane.f32.xlu0 %v2361
    %v2363 = vpop.xlane.xlu0 %2362
    %v2364 = vsel %vm1897, %v2342, 0.0
    %2365 = vadd.xlane.f32.xlu0 %v2364
    %v2366 = vpop.xlane.xlu0 %2365
    %v2367 = vrcp.pop %v2345
    %v2368 = vrcp.pop %v2348
    %v2369 = vrcp.pop %v2351
    %v2370 = vrcp.pop %v2354
    %v2371 = vrcp.pop %v2357
    %v2372 = vrcp.pop %v2360
    %v2373 = vrcp.pop %v2363
    %v2374 = vrcp.pop %v2366
    %v2375 = vmul.f32 %v2328, %v2367
    %v2376 = vmul.f32 %v2330, %v2368
    %v2377 = vmul.f32 %v2332, %v2369
    %v2378 = vmul.f32 %v2334, %v2370
    %v2379 = vmul.f32 %v2336, %v2371
    %v2380 = vmul.f32 %v2338, %v2372
    %v2381 = vmul.f32 %v2340, %v2373
    %v2382 = vmul.f32 %v2342, %v2374
    %v2383 = vpack.c.bf16 %v2375, %v2375
    %v2384 = vpack.c.bf16 %v2376, %v2376
    %v2385 = vpack.c.bf16 %v2377, %v2377
    %v2386 = vpack.c.bf16 %v2378, %v2378
    %v2387 = vpack.c.bf16 %v2379, %v2379
    %v2388 = vpack.c.bf16 %v2380, %v2380
    %v2389 = vpack.c.bf16 %v2381, %v2381
    %v2390 = vpack.c.bf16 %v2382, %v2382
    %2391 = vrot.lane.b32.xlu0 %v1886, 112
    %v2392 = vpop.permute.xlu0 %2391
    %v2394 = vsel %vm1897, %v2383, 0
    %v2397 = vsel %vm166, %v2392, 0
    %2399 = vmatprep.subr.bf16.mxu0 0
    %2400 = vmatpush1.bf16.msra.mxu0 %v2397
    %2401 = vmatprep.subr.bf16.mxu0 0
    %2402 = vmatpush1.bf16.msra.mxu0 0
    %2403 = vmatprep.subr.bf16.mxu0 0
    %2404 = vmatpush1.bf16.msra.mxu0 0
    %2405 = vmatprep.subr.bf16.mxu0 0
    %2406 = vmatpush1.bf16.msra.mxu0 0
    %2407 = vmatprep.subr.bf16.mxu0 0
    %2408 = vmatpush1.bf16.msra.mxu0 0
    %2409 = vmatprep.subr.bf16.mxu0 0
    %2410 = vmatpush1.bf16.msra.mxu0 0
    %2411 = vmatprep.subr.bf16.mxu0 0
    %2412 = vmatpush1.bf16.msra.mxu0 0
    %2413 = vmatprep.subr.bf16.mxu0 0
    %2414 = vmatpush1.bf16.msra.mxu0 0
    %2415 = vmatprep.subr.bf16.mxu0 0
    %2416 = vmatpush1.bf16.msra.mxu0 0
    %2417 = vmatprep.subr.bf16.mxu0 0
    %2418 = vmatpush1.bf16.msra.mxu0 0
    %2419 = vmatprep.subr.bf16.mxu0 0
    %2420 = vmatpush1.bf16.msra.mxu0 0
    %2421 = vmatprep.subr.bf16.mxu0 0
    %2422 = vmatpush1.bf16.msra.mxu0 0
    %2423 = vmatprep.subr.bf16.mxu0 0
    %2424 = vmatpush1.bf16.msra.mxu0 0
    %2425 = vmatprep.subr.bf16.mxu0 0
    %2426 = vmatpush1.bf16.msra.mxu0 0
    %2427 = vmatprep.subr.bf16.mxu0 0
    %2428 = vmatpush1.bf16.msra.mxu0 0
    %2429 = vmatprep.subr.bf16.mxu0 0
    %2430 = vmatpush1.bf16.msra.mxu0 0
    %2431 = vmatprep.mubr.bf16.mxu0 0
    %2432 = vmatmul.mubr.bf16.gmra.mrb[0].mxu0 %v2394
    %v2433 = vpop.f32.mrb[0].mxu0
    %v2434 = vadd.f32 0.0, %v2433
    %v2435 = vpop.f32.mrb[0].mxu0
    %v2436 = vpop.f32.mrb[0].mxu0
    %v2437 = vpop.f32.mrb[0].mxu0
    %2438 = vdwg.mxu0
    %2439 = vrot.lane.b32.xlu0 %v1887, 112
    %v2440 = vpop.permute.xlu0 %2439
    %v2442 = vsel %vm1897, %v2384, 0
    %v2445 = vsel %vm166, %v2440, 0
    %2447 = vmatprep.subr.bf16.mxu0 0
    %2448 = vmatpush1.bf16.msra.mxu0 %v2445
    %2449 = vmatprep.subr.bf16.mxu0 0
    %2450 = vmatpush1.bf16.msra.mxu0 0
    %2451 = vmatprep.subr.bf16.mxu0 0
    %2452 = vmatpush1.bf16.msra.mxu0 0
    %2453 = vmatprep.subr.bf16.mxu0 0
    %2454 = vmatpush1.bf16.msra.mxu0 0
    %2455 = vmatprep.subr.bf16.mxu0 0
    %2456 = vmatpush1.bf16.msra.mxu0 0
    %2457 = vmatprep.subr.bf16.mxu0 0
    %2458 = vmatpush1.bf16.msra.mxu0 0
    %2459 = vmatprep.subr.bf16.mxu0 0
    %2460 = vmatpush1.bf16.msra.mxu0 0
    %2461 = vmatprep.subr.bf16.mxu0 0
    %2462 = vmatpush1.bf16.msra.mxu0 0
    %2463 = vmatprep.subr.bf16.mxu0 0
    %2464 = vmatpush1.bf16.msra.mxu0 0
    %2465 = vmatprep.subr.bf16.mxu0 0
    %2466 = vmatpush1.bf16.msra.mxu0 0
    %2467 = vmatprep.subr.bf16.mxu0 0
    %2468 = vmatpush1.bf16.msra.mxu0 0
    %2469 = vmatprep.subr.bf16.mxu0 0
    %2470 = vmatpush1.bf16.msra.mxu0 0
    %2471 = vmatprep.subr.bf16.mxu0 0
    %2472 = vmatpush1.bf16.msra.mxu0 0
    %2473 = vmatprep.subr.bf16.mxu0 0
    %2474 = vmatpush1.bf16.msra.mxu0 0
    %2475 = vmatprep.subr.bf16.mxu0 0
    %2476 = vmatpush1.bf16.msra.mxu0 0
    %2477 = vmatprep.subr.bf16.mxu0 0
    %2478 = vmatpush1.bf16.msra.mxu0 0
    %2479 = vmatprep.mubr.bf16.mxu0 0
    %2480 = vmatmul.mubr.bf16.gmra.mrb[0].mxu0 %v2442
    %v2481 = vpop.f32.mrb[0].mxu0
    %v2482 = vadd.f32 0.0, %v2481
    %v2483 = vpop.f32.mrb[0].mxu0
    %v2484 = vpop.f32.mrb[0].mxu0
    %v2485 = vpop.f32.mrb[0].mxu0
    %2486 = vdwg.mxu0
    %2487 = vrot.lane.b32.xlu0 %v1888, 112
    %v2488 = vpop.permute.xlu0 %2487
    %v2490 = vsel %vm1897, %v2385, 0
    %v2493 = vsel %vm166, %v2488, 0
    %2495 = vmatprep.subr.bf16.mxu0 0
    %2496 = vmatpush1.bf16.msra.mxu0 %v2493
    %2497 = vmatprep.subr.bf16.mxu0 0
    %2498 = vmatpush1.bf16.msra.mxu0 0
    %2499 = vmatprep.subr.bf16.mxu0 0
    %2500 = vmatpush1.bf16.msra.mxu0 0
    %2501 = vmatprep.subr.bf16.mxu0 0
    %2502 = vmatpush1.bf16.msra.mxu0 0
    %2503 = vmatprep.subr.bf16.mxu0 0
    %2504 = vmatpush1.bf16.msra.mxu0 0
    %2505 = vmatprep.subr.bf16.mxu0 0
    %2506 = vmatpush1.bf16.msra.mxu0 0
    %2507 = vmatprep.subr.bf16.mxu0 0
    %2508 = vmatpush1.bf16.msra.mxu0 0
    %2509 = vmatprep.subr.bf16.mxu0 0
    %2510 = vmatpush1.bf16.msra.mxu0 0
    %2511 = vmatprep.subr.bf16.mxu0 0
    %2512 = vmatpush1.bf16.msra.mxu0 0
    %2513 = vmatprep.subr.bf16.mxu0 0
    %2514 = vmatpush1.bf16.msra.mxu0 0
    %2515 = vmatprep.subr.bf16.mxu0 0
    %2516 = vmatpush1.bf16.msra.mxu0 0
    %2517 = vmatprep.subr.bf16.mxu0 0
    %2518 = vmatpush1.bf16.msra.mxu0 0
    %2519 = vmatprep.subr.bf16.mxu0 0
    %2520 = vmatpush1.bf16.msra.mxu0 0
    %2521 = vmatprep.subr.bf16.mxu0 0
    %2522 = vmatpush1.bf16.msra.mxu0 0
    %2523 = vmatprep.subr.bf16.mxu0 0
    %2524 = vmatpush1.bf16.msra.mxu0 0
    %2525 = vmatprep.subr.bf16.mxu0 0
    %2526 = vmatpush1.bf16.msra.mxu0 0
    %2527 = vmatprep.mubr.bf16.mxu0 0
    %2528 = vmatmul.mubr.bf16.gmra.mrb[0].mxu0 %v2490
    %v2529 = vpop.f32.mrb[0].mxu0
    %v2530 = vadd.f32 0.0, %v2529
    %v2531 = vpop.f32.mrb[0].mxu0
    %v2532 = vpop.f32.mrb[0].mxu0
    %v2533 = vpop.f32.mrb[0].mxu0
    %2534 = vdwg.mxu0
    %2535 = vrot.lane.b32.xlu0 %v1889, 112
    %v2536 = vpop.permute.xlu0 %2535
    %v2538 = vsel %vm1897, %v2386, 0
    %v2541 = vsel %vm166, %v2536, 0
    %2543 = vmatprep.subr.bf16.mxu0 0
    %2544 = vmatpush1.bf16.msra.mxu0 %v2541
    %2545 = vmatprep.subr.bf16.mxu0 0
    %2546 = vmatpush1.bf16.msra.mxu0 0
    %2547 = vmatprep.subr.bf16.mxu0 0
    %2548 = vmatpush1.bf16.msra.mxu0 0
    %2549 = vmatprep.subr.bf16.mxu0 0
    %2550 = vmatpush1.bf16.msra.mxu0 0
    %2551 = vmatprep.subr.bf16.mxu0 0
    %2552 = vmatpush1.bf16.msra.mxu0 0
    %2553 = vmatprep.subr.bf16.mxu0 0
    %2554 = vmatpush1.bf16.msra.mxu0 0
    %2555 = vmatprep.subr.bf16.mxu0 0
    %2556 = vmatpush1.bf16.msra.mxu0 0
    %2557 = vmatprep.subr.bf16.mxu0 0
    %2558 = vmatpush1.bf16.msra.mxu0 0
    %2559 = vmatprep.subr.bf16.mxu0 0
    %2560 = vmatpush1.bf16.msra.mxu0 0
    %2561 = vmatprep.subr.bf16.mxu0 0
    %2562 = vmatpush1.bf16.msra.mxu0 0
    %2563 = vmatprep.subr.bf16.mxu0 0
    %2564 = vmatpush1.bf16.msra.mxu0 0
    %2565 = vmatprep.subr.bf16.mxu0 0
    %2566 = vmatpush1.bf16.msra.mxu0 0
    %2567 = vmatprep.subr.bf16.mxu0 0
    %2568 = vmatpush1.bf16.msra.mxu0 0
    %2569 = vmatprep.subr.bf16.mxu0 0
    %2570 = vmatpush1.bf16.msra.mxu0 0
    %2571 = vmatprep.subr.bf16.mxu0 0
    %2572 = vmatpush1.bf16.msra.mxu0 0
    %2573 = vmatprep.subr.bf16.mxu0 0
    %2574 = vmatpush1.bf16.msra.mxu0 0
    %2575 = vmatprep.mubr.bf16.mxu0 0
    %2576 = vmatmul.mubr.bf16.gmra.mrb[0].mxu0 %v2538
    %v2577 = vpop.f32.mrb[0].mxu0
    %v2578 = vadd.f32 0.0, %v2577
    %v2579 = vpop.f32.mrb[0].mxu0
    %v2580 = vpop.f32.mrb[0].mxu0
    %v2581 = vpop.f32.mrb[0].mxu0
    %2582 = vdwg.mxu0
    %2583 = vrot.lane.b32.xlu0 %v1890, 112
    %v2584 = vpop.permute.xlu0 %2583
    %v2586 = vsel %vm1897, %v2387, 0
    %v2589 = vsel %vm166, %v2584, 0
    %2591 = vmatprep.subr.bf16.mxu0 0
    %2592 = vmatpush1.bf16.msra.mxu0 %v2589
    %2593 = vmatprep.subr.bf16.mxu0 0
    %2594 = vmatpush1.bf16.msra.mxu0 0
    %2595 = vmatprep.subr.bf16.mxu0 0
    %2596 = vmatpush1.bf16.msra.mxu0 0
    %2597 = vmatprep.subr.bf16.mxu0 0
    %2598 = vmatpush1.bf16.msra.mxu0 0
    %2599 = vmatprep.subr.bf16.mxu0 0
    %2600 = vmatpush1.bf16.msra.mxu0 0
    %2601 = vmatprep.subr.bf16.mxu0 0
    %2602 = vmatpush1.bf16.msra.mxu0 0
    %2603 = vmatprep.subr.bf16.mxu0 0
    %2604 = vmatpush1.bf16.msra.mxu0 0
    %2605 = vmatprep.subr.bf16.mxu0 0
    %2606 = vmatpush1.bf16.msra.mxu0 0
    %2607 = vmatprep.subr.bf16.mxu0 0
    %2608 = vmatpush1.bf16.msra.mxu0 0
    %2609 = vmatprep.subr.bf16.mxu0 0
    %2610 = vmatpush1.bf16.msra.mxu0 0
    %2611 = vmatprep.subr.bf16.mxu0 0
    %2612 = vmatpush1.bf16.msra.mxu0 0
    %2613 = vmatprep.subr.bf16.mxu0 0
    %2614 = vmatpush1.bf16.msra.mxu0 0
    %2615 = vmatprep.subr.bf16.mxu0 0
    %2616 = vmatpush1.bf16.msra.mxu0 0
    %2617 = vmatprep.subr.bf16.mxu0 0
    %2618 = vmatpush1.bf16.msra.mxu0 0
    %2619 = vmatprep.subr.bf16.mxu0 0
    %2620 = vmatpush1.bf16.msra.mxu0 0
    %2621 = vmatprep.subr.bf16.mxu0 0
    %2622 = vmatpush1.bf16.msra.mxu0 0
    %2623 = vmatprep.mubr.bf16.mxu0 0
    %2624 = vmatmul.mubr.bf16.gmra.mrb[0].mxu0 %v2586
    %v2625 = vpop.f32.mrb[0].mxu0
    %v2626 = vadd.f32 0.0, %v2625
    %v2627 = vpop.f32.mrb[0].mxu0
    %v2628 = vpop.f32.mrb[0].mxu0
    %v2629 = vpop.f32.mrb[0].mxu0
    %2630 = vdwg.mxu0
    %2631 = vrot.lane.b32.xlu0 %v1891, 112
    %v2632 = vpop.permute.xlu0 %2631
    %v2634 = vsel %vm1897, %v2388, 0
    %v2637 = vsel %vm166, %v2632, 0
    %2639 = vmatprep.subr.bf16.mxu0 0
    %2640 = vmatpush1.bf16.msra.mxu0 %v2637
    %2641 = vmatprep.subr.bf16.mxu0 0
    %2642 = vmatpush1.bf16.msra.mxu0 0
    %2643 = vmatprep.subr.bf16.mxu0 0
    %2644 = vmatpush1.bf16.msra.mxu0 0
    %2645 = vmatprep.subr.bf16.mxu0 0
    %2646 = vmatpush1.bf16.msra.mxu0 0
    %2647 = vmatprep.subr.bf16.mxu0 0
    %2648 = vmatpush1.bf16.msra.mxu0 0
    %2649 = vmatprep.subr.bf16.mxu0 0
    %2650 = vmatpush1.bf16.msra.mxu0 0
    %2651 = vmatprep.subr.bf16.mxu0 0
    %2652 = vmatpush1.bf16.msra.mxu0 0
    %2653 = vmatprep.subr.bf16.mxu0 0
    %2654 = vmatpush1.bf16.msra.mxu0 0
    %2655 = vmatprep.subr.bf16.mxu0 0
    %2656 = vmatpush1.bf16.msra.mxu0 0
    %2657 = vmatprep.subr.bf16.mxu0 0
    %2658 = vmatpush1.bf16.msra.mxu0 0
    %2659 = vmatprep.subr.bf16.mxu0 0
    %2660 = vmatpush1.bf16.msra.mxu0 0
    %2661 = vmatprep.subr.bf16.mxu0 0
    %2662 = vmatpush1.bf16.msra.mxu0 0
    %2663 = vmatprep.subr.bf16.mxu0 0
    %2664 = vmatpush1.bf16.msra.mxu0 0
    %2665 = vmatprep.subr.bf16.mxu0 0
    %2666 = vmatpush1.bf16.msra.mxu0 0
    %2667 = vmatprep.subr.bf16.mxu0 0
    %2668 = vmatpush1.bf16.msra.mxu0 0
    %2669 = vmatprep.subr.bf16.mxu0 0
    %2670 = vmatpush1.bf16.msra.mxu0 0
    %2671 = vmatprep.mubr.bf16.mxu0 0
    %2672 = vmatmul.mubr.bf16.gmra.mrb[0].mxu0 %v2634
    %v2673 = vpop.f32.mrb[0].mxu0
    %v2674 = vadd.f32 0.0, %v2673
    %v2675 = vpop.f32.mrb[0].mxu0
    %v2676 = vpop.f32.mrb[0].mxu0
    %v2677 = vpop.f32.mrb[0].mxu0
    %2678 = vdwg.mxu0
    %2679 = vrot.lane.b32.xlu0 %v1892, 112
    %v2680 = vpop.permute.xlu0 %2679
    %v2682 = vsel %vm1897, %v2389, 0
    %v2685 = vsel %vm166, %v2680, 0
    %2687 = vmatprep.subr.bf16.mxu0 0
    %2688 = vmatpush1.bf16.msra.mxu0 %v2685
    %2689 = vmatprep.subr.bf16.mxu0 0
    %2690 = vmatpush1.bf16.msra.mxu0 0
    %2691 = vmatprep.subr.bf16.mxu0 0
    %2692 = vmatpush1.bf16.msra.mxu0 0
    %2693 = vmatprep.subr.bf16.mxu0 0
    %2694 = vmatpush1.bf16.msra.mxu0 0
    %2695 = vmatprep.subr.bf16.mxu0 0
    %2696 = vmatpush1.bf16.msra.mxu0 0
    %2697 = vmatprep.subr.bf16.mxu0 0
    %2698 = vmatpush1.bf16.msra.mxu0 0
    %2699 = vmatprep.subr.bf16.mxu0 0
    %2700 = vmatpush1.bf16.msra.mxu0 0
    %2701 = vmatprep.subr.bf16.mxu0 0
    %2702 = vmatpush1.bf16.msra.mxu0 0
    %2703 = vmatprep.subr.bf16.mxu0 0
    %2704 = vmatpush1.bf16.msra.mxu0 0
    %2705 = vmatprep.subr.bf16.mxu0 0
    %2706 = vmatpush1.bf16.msra.mxu0 0
    %2707 = vmatprep.subr.bf16.mxu0 0
    %2708 = vmatpush1.bf16.msra.mxu0 0
    %2709 = vmatprep.subr.bf16.mxu0 0
    %2710 = vmatpush1.bf16.msra.mxu0 0
    %2711 = vmatprep.subr.bf16.mxu0 0
    %2712 = vmatpush1.bf16.msra.mxu0 0
    %2713 = vmatprep.subr.bf16.mxu0 0
    %2714 = vmatpush1.bf16.msra.mxu0 0
    %2715 = vmatprep.subr.bf16.mxu0 0
    %2716 = vmatpush1.bf16.msra.mxu0 0
    %2717 = vmatprep.subr.bf16.mxu0 0
    %2718 = vmatpush1.bf16.msra.mxu0 0
    %2719 = vmatprep.mubr.bf16.mxu0 0
    %2720 = vmatmul.mubr.bf16.gmra.mrb[0].mxu0 %v2682
    %v2721 = vpop.f32.mrb[0].mxu0
    %v2722 = vadd.f32 0.0, %v2721
    %v2723 = vpop.f32.mrb[0].mxu0
    %v2724 = vpop.f32.mrb[0].mxu0
    %v2725 = vpop.f32.mrb[0].mxu0
    %2726 = vdwg.mxu0
    %2727 = vrot.lane.b32.xlu0 %v1893, 112
    %v2728 = vpop.permute.xlu0 %2727
    %v2730 = vsel %vm1897, %v2390, 0
    %v2733 = vsel %vm166, %v2728, 0
    %2735 = vmatprep.subr.bf16.mxu0 0
    %2736 = vmatpush1.bf16.msra.mxu0 %v2733
    %2737 = vmatprep.subr.bf16.mxu0 0
    %2738 = vmatpush1.bf16.msra.mxu0 0
    %2739 = vmatprep.subr.bf16.mxu0 0
    %2740 = vmatpush1.bf16.msra.mxu0 0
    %2741 = vmatprep.subr.bf16.mxu0 0
    %2742 = vmatpush1.bf16.msra.mxu0 0
    %2743 = vmatprep.subr.bf16.mxu0 0
    %2744 = vmatpush1.bf16.msra.mxu0 0
    %2745 = vmatprep.subr.bf16.mxu0 0
    %2746 = vmatpush1.bf16.msra.mxu0 0
    %2747 = vmatprep.subr.bf16.mxu0 0
    %2748 = vmatpush1.bf16.msra.mxu0 0
    %2749 = vmatprep.subr.bf16.mxu0 0
    %2750 = vmatpush1.bf16.msra.mxu0 0
    %2751 = vmatprep.subr.bf16.mxu0 0
    %2752 = vmatpush1.bf16.msra.mxu0 0
    %2753 = vmatprep.subr.bf16.mxu0 0
    %2754 = vmatpush1.bf16.msra.mxu0 0
    %2755 = vmatprep.subr.bf16.mxu0 0
    %2756 = vmatpush1.bf16.msra.mxu0 0
    %2757 = vmatprep.subr.bf16.mxu0 0
    %2758 = vmatpush1.bf16.msra.mxu0 0
    %2759 = vmatprep.subr.bf16.mxu0 0
    %2760 = vmatpush1.bf16.msra.mxu0 0
    %2761 = vmatprep.subr.bf16.mxu0 0
    %2762 = vmatpush1.bf16.msra.mxu0 0
    %2763 = vmatprep.subr.bf16.mxu0 0
    %2764 = vmatpush1.bf16.msra.mxu0 0
    %2765 = vmatprep.subr.bf16.mxu0 0
    %2766 = vmatpush1.bf16.msra.mxu0 0
    %2767 = vmatprep.mubr.bf16.mxu0 0
    %2768 = vmatmul.mubr.bf16.gmra.mrb[0].mxu0 %v2730
    %v2769 = vpop.f32.mrb[0].mxu0
    %v2770 = vadd.f32 0.0, %v2769
    %v2771 = vpop.f32.mrb[0].mxu0
    %v2772 = vpop.f32.mrb[0].mxu0
    %v2773 = vpop.f32.mrb[0].mxu0
    %2774 = vdwg.mxu0
    %v2775 = vadd.f32 %v2375, %v2377
    %v2776 = vadd.f32 %v2376, %v2378
    %v2777 = vadd.f32 %v2775, %v2379
    %v2778 = vadd.f32 %v2776, %v2380
    %v2779 = vadd.f32 %v2777, %v2381
    %v2780 = vadd.f32 %v2778, %v2382
    %v2781 = vmul.f32 %v2779, 0.25
    %v2782 = vmul.f32 %v2780, 0.25
    %2785 = vrot.lane.b32.xlu0 %v2530, 8
    %v2786 = vpop.permute.xlu0 %2785
    %2787 = vrot.lane.b32.xlu0 %v2578, 8
    %v2788 = vpop.permute.xlu0 %2787
    %2793 = vrot.lane.b32.xlu0 %v2626, 16
    %v2794 = vpop.permute.xlu0 %2793
    %2795 = vrot.lane.b32.xlu0 %v2674, 16
    %v2796 = vpop.permute.xlu0 %2795
    %2801 = vrot.lane.b32.xlu0 %v2722, 24
    %v2802 = vpop.permute.xlu0 %2801
    %2803 = vrot.lane.b32.xlu0 %v2770, 24
    %v2804 = vpop.permute.xlu0 %2803
    %v2807 = vsel %vm1897, %v2434, %v2786
    %v2808 = vsel %vm1897, %v2482, %v2788
    %v2809 = vsel %vm170, %v2807, %v2794
    %v2810 = vsel %vm170, %v2808, %v2796
    %vm2811 = vcmask 195584
    %v2812 = vsel %vm2811, %v2809, %v2802
    %v2813 = vsel %vm2811, %v2810, %v2804
    %v2814 = vpack.c.bf16 %v2813, %v2812
    %v2815 = vld [vmem:[#allocation2 + $0xf0] sm:$0xff]
    %v2816 = vld [vmem:[#allocation2 + $0xf8] sm:$0xff]
    %v2817 = vld [vmem:[#allocation2 + $0x100] sm:$0xff]
    %v2818 = vld [vmem:[#allocation2 + $0x108] sm:$0xff]
    %v2819 = vpack.c.bf16 %v2816, %v2815
    %v2820 = vpack.c.bf16 %v2818, %v2817
    %v2821 = vld [vmem:[#allocation2 + $0x1b0] sm:$0x1]
    %v2822 = vlaneseq
    %v2823 = vshrl.u32 %v2822, 7
    %v2824 = vsub.s32 0, %v2823
    %v2825 = vrot.slane %v2821, %v2824
    %v2827 = vsel %vm45, %v2814, 0
    %2829 = vmatprep.subr.bf16.mxu0 0
    %2830 = vmatpush1.bf16.msra.mxu0 %v2819
    %2831 = vmatprep.subr.bf16.mxu0 0
    %2832 = vmatpush1.bf16.msra.mxu0 %v2820
    %2833 = vmatprep.subr.bf16.mxu0 0
    %2834 = vmatpush1.bf16.msra.mxu0 0
    %2835 = vmatprep.subr.bf16.mxu0 0
    %2836 = vmatpush1.bf16.msra.mxu0 0
    %2837 = vmatprep.subr.bf16.mxu0 0
    %2838 = vmatpush1.bf16.msra.mxu0 0
    %2839 = vmatprep.subr.bf16.mxu0 0
    %2840 = vmatpush1.bf16.msra.mxu0 0
    %2841 = vmatprep.subr.bf16.mxu0 0
    %2842 = vmatpush1.bf16.msra.mxu0 0
    %2843 = vmatprep.subr.bf16.mxu0 0
    %2844 = vmatpush1.bf16.msra.mxu0 0
    %2845 = vmatprep.subr.bf16.mxu0 0
    %2846 = vmatpush1.bf16.msra.mxu0 0
    %2847 = vmatprep.subr.bf16.mxu0 0
    %2848 = vmatpush1.bf16.msra.mxu0 0
    %2849 = vmatprep.subr.bf16.mxu0 0
    %2850 = vmatpush1.bf16.msra.mxu0 0
    %2851 = vmatprep.subr.bf16.mxu0 0
    %2852 = vmatpush1.bf16.msra.mxu0 0
    %2853 = vmatprep.subr.bf16.mxu0 0
    %2854 = vmatpush1.bf16.msra.mxu0 0
    %2855 = vmatprep.subr.bf16.mxu0 0
    %2856 = vmatpush1.bf16.msra.mxu0 0
    %2857 = vmatprep.subr.bf16.mxu0 0
    %2858 = vmatpush1.bf16.msra.mxu0 0
    %2859 = vmatprep.subr.bf16.mxu0 0
    %2860 = vmatpush1.bf16.msra.mxu0 0
    %2861 = vmatprep.mubr.bf16.mxu0 0
    %2862 = vmatmul.mubr.bf16.gmra.mrb[0].mxu0 %v2827
    %v2863 = vpop.f32.mrb[0].mxu0
    %v2864 = vadd.f32 %v2825, %v2863
    %v2865 = vpop.f32.mrb[0].mxu0
    %v2866 = vpop.f32.mrb[0].mxu0
    %v2867 = vadd.f32 %v2825, %v2866
    %v2868 = vpop.f32.mrb[0].mxu0
    %2869 = vdwg.mxu0
    %v2870 = vpack.c.bf16 %v2867, %v2864
    %v2871 = vld [vmem:[#allocation2 + $0x110] sm:$0xff]
    %v2872 = vld [vmem:[#allocation2 + $0x118] sm:$0xff]
    %v2873 = vld [vmem:[#allocation2 + $0x120] sm:$0xff]
    %v2874 = vld [vmem:[#allocation2 + $0x128] sm:$0xff]
    %v2875 = vpack.c.bf16 %v2872, %v2871
    %v2876 = vpack.c.bf16 %v2874, %v2873
    %v2877 = vld [vmem:[#allocation2 + $0x1b8] sm:$0x1]
    %v2878 = vlaneseq
    %v2879 = vshrl.u32 %v2878, 7
    %v2880 = vsub.s32 0, %v2879
    %v2881 = vrot.slane %v2877, %v2880
    %v2883 = vsel %vm45, %v2870, 0
    %2885 = vmatprep.subr.bf16.mxu0 0
    %2886 = vmatpush1.bf16.msra.mxu0 %v2875
    %2887 = vmatprep.subr.bf16.mxu0 0
    %2888 = vmatpush1.bf16.msra.mxu0 %v2876
    %2889 = vmatprep.subr.bf16.mxu0 0
    %2890 = vmatpush1.bf16.msra.mxu0 0
    %2891 = vmatprep.subr.bf16.mxu0 0
    %2892 = vmatpush1.bf16.msra.mxu0 0
    %2893 = vmatprep.subr.bf16.mxu0 0
    %2894 = vmatpush1.bf16.msra.mxu0 0
    %2895 = vmatprep.subr.bf16.mxu0 0
    %2896 = vmatpush1.bf16.msra.mxu0 0
    %2897 = vmatprep.subr.bf16.mxu0 0
    %2898 = vmatpush1.bf16.msra.mxu0 0
    %2899 = vmatprep.subr.bf16.mxu0 0
    %2900 = vmatpush1.bf16.msra.mxu0 0
    %2901 = vmatprep.subr.bf16.mxu0 0
    %2902 = vmatpush1.bf16.msra.mxu0 0
    %2903 = vmatprep.subr.bf16.mxu0 0
    %2904 = vmatpush1.bf16.msra.mxu0 0
    %2905 = vmatprep.subr.bf16.mxu0 0
    %2906 = vmatpush1.bf16.msra.mxu0 0
    %2907 = vmatprep.subr.bf16.mxu0 0
    %2908 = vmatpush1.bf16.msra.mxu0 0
    %2909 = vmatprep.subr.bf16.mxu0 0
    %2910 = vmatpush1.bf16.msra.mxu0 0
    %2911 = vmatprep.subr.bf16.mxu0 0
    %2912 = vmatpush1.bf16.msra.mxu0 0
    %2913 = vmatprep.subr.bf16.mxu0 0
    %2914 = vmatpush1.bf16.msra.mxu0 0
    %2915 = vmatprep.subr.bf16.mxu0 0
    %2916 = vmatpush1.bf16.msra.mxu0 0
    %2917 = vmatprep.mubr.bf16.mxu0 0
    %2918 = vmatmul.mubr.bf16.gmra.mrb[0].mxu0 %v2883
    %v2919 = vpop.f32.mrb[0].mxu0
    %v2920 = vadd.f32 %v2881, %v2919
    %v2921 = vpop.f32.mrb[0].mxu0
    %v2922 = vpop.f32.mrb[0].mxu0
    %v2923 = vadd.f32 %v2881, %v2922
    %v2924 = vpop.f32.mrb[0].mxu0
    %2925 = vdwg.mxu0
    %v2926 = vmax.f32 %v2920, 0.0
    %v2927 = vmax.f32 %v2923, 0.0
    %v2928 = vpack.c.bf16 %v2927, %v2926
    %v2929 = vld [vmem:[#allocation2 + $0x130] sm:$0xff]
    %v2930 = vld [vmem:[#allocation2 + $0x138] sm:$0xff]
    %v2931 = vld [vmem:[#allocation2 + $0x140] sm:$0xff]
    %v2932 = vld [vmem:[#allocation2 + $0x148] sm:$0xff]
    %v2933 = vld [vmem:[#allocation2 + $0x150] sm:$0xff]
    %v2934 = vld [vmem:[#allocation2 + $0x158] sm:$0xff]
    %v2935 = vld [vmem:[#allocation2 + $0x160] sm:$0xff]
    %v2936 = vld [vmem:[#allocation2 + $0x168] sm:$0xff]
    %v2937 = vpack.c.bf16 %v2930, %v2929
    %v2938 = vpack.c.bf16 %v2932, %v2931
    %v2939 = vpack.c.bf16 %v2934, %v2933
    %v2940 = vpack.c.bf16 %v2936, %v2935
    %v2941 = vld [vmem:[#allocation2 + $0x1c0] sm:$0x1]
    %v2942 = vlaneseq
    %v2943 = vshrl.u32 %v2942, 7
    %v2944 = vsub.s32 0, %v2943
    %v2945 = vrot.slane %v2941, %v2944
    %v2947 = vsel %vm107, %v2928, 0
    %2949 = vmatprep.subr.bf16.mxu0 0
    %2950 = vmatpush1.bf16.msra.mxu0 %v2937
    %2951 = vmatprep.subr.bf16.mxu0 0
    %2952 = vmatpush1.bf16.msra.mxu0 %v2938
    %2953 = vmatprep.subr.bf16.mxu0 0
    %2954 = vmatpush1.bf16.msra.mxu0 %v2939
    %2955 = vmatprep.subr.bf16.mxu0 0
    %2956 = vmatpush1.bf16.msra.mxu0 %v2940
    %2957 = vmatprep.subr.bf16.mxu0 0
    %2958 = vmatpush1.bf16.msra.mxu0 0
    %2959 = vmatprep.subr.bf16.mxu0 0
    %2960 = vmatpush1.bf16.msra.mxu0 0
    %2961 = vmatprep.subr.bf16.mxu0 0
    %2962 = vmatpush1.bf16.msra.mxu0 0
    %2963 = vmatprep.subr.bf16.mxu0 0
    %2964 = vmatpush1.bf16.msra.mxu0 0
    %2965 = vmatprep.subr.bf16.mxu0 0
    %2966 = vmatpush1.bf16.msra.mxu0 0
    %2967 = vmatprep.subr.bf16.mxu0 0
    %2968 = vmatpush1.bf16.msra.mxu0 0
    %2969 = vmatprep.subr.bf16.mxu0 0
    %2970 = vmatpush1.bf16.msra.mxu0 0
    %2971 = vmatprep.subr.bf16.mxu0 0
    %2972 = vmatpush1.bf16.msra.mxu0 0
    %2973 = vmatprep.subr.bf16.mxu0 0
    %2974 = vmatpush1.bf16.msra.mxu0 0
    %2975 = vmatprep.subr.bf16.mxu0 0
    %2976 = vmatpush1.bf16.msra.mxu0 0
    %2977 = vmatprep.subr.bf16.mxu0 0
    %2978 = vmatpush1.bf16.msra.mxu0 0
    %2979 = vmatprep.subr.bf16.mxu0 0
    %2980 = vmatpush1.bf16.msra.mxu0 0
    %2981 = vmatprep.mubr.bf16.mxu0 0
    %2982 = vmatmul.mubr.bf16.gmra.mrb[0].mxu0 %v2947
    %v2983 = vpop.f32.mrb[0].mxu0
    %v2984 = vadd.f32 %v2945, %v2983
    %v2985 = vpop.f32.mrb[0].mxu0
    %v2986 = vpop.f32.mrb[0].mxu0
    %v2987 = vadd.f32 %v2945, %v2986
    %v2988 = vpop.f32.mrb[0].mxu0
    %2989 = vdwg.mxu0
    %v2990 = vsel %vm170, %v2984, -inf
    %2991 = vmax.xlane.f32.xlu0 %v2990
    %v2992 = vpop.xlane.xlu0 %2991
    %v2993 = vsel %vm170, %v2987, -inf
    %2994 = vmax.xlane.f32.xlu0 %v2993
    %v2995 = vpop.xlane.xlu0 %2994
    %v2996 = vsub.f32 %v2984, %v2992
    %v2997 = vsub.f32 %v2987, %v2995
    %v2998 = vmul.f32 %v2996, 1.442695
    %v2999 = vpow.pop %v2998
    %v3000 = vmul.f32 %v2997, 1.442695
    %v3001 = vpow.pop %v3000
    %v3002 = vsel %vm170, %v2999, 0.0
    %3003 = vadd.xlane.f32.xlu0 %v3002
    %v3004 = vpop.xlane.xlu0 %3003
    %v3005 = vsel %vm170, %v3001, 0.0
    %3006 = vadd.xlane.f32.xlu0 %v3005
    %v3007 = vpop.xlane.xlu0 %3006
    %v3008 = vrcp.pop %v3004
    %v3009 = vrcp.pop %v3007
    %v3010 = vmul.f32 %v2999, %v3008
    %v3011 = vmul.f32 %v3001, %v3009
    %v3012 = vld [vmem:[#allocation2 + $0x170] sm:$0xff]
    %v3013 = vld [vmem:[#allocation2 + $0x178] sm:$0xff]
    %v3014 = vld [vmem:[#allocation2 + $0x180] sm:$0xff]
    %v3015 = vld [vmem:[#allocation2 + $0x188] sm:$0xff]
    %v3016 = vpack.c.bf16 %v3013, %v3012
    %v3017 = vpack.c.bf16 %v3015, %v3014
    %v3018 = vld [vmem:[#allocation2 + $0x1c8] sm:$0x1]
    %v3019 = vlaneseq
    %v3020 = vshrl.u32 %v3019, 7
    %v3021 = vsub.s32 0, %v3020
    %v3022 = vrot.slane %v3018, %v3021
    %3023 = vmatprep.subr.bf16.mxu0 0
    %3024 = vmatpush1.bf16.msra.mxu0 %v3016
    %3025 = vmatprep.subr.bf16.mxu0 0
    %3026 = vmatpush1.bf16.msra.mxu0 %v3017
    %3027 = vmatprep.subr.bf16.mxu0 0
    %3028 = vmatpush1.bf16.msra.mxu0 0
    %3029 = vmatprep.subr.bf16.mxu0 0
    %3030 = vmatpush1.bf16.msra.mxu0 0
    %3031 = vmatprep.subr.bf16.mxu0 0
    %3032 = vmatpush1.bf16.msra.mxu0 0
    %3033 = vmatprep.subr.bf16.mxu0 0
    %3034 = vmatpush1.bf16.msra.mxu0 0
    %3035 = vmatprep.subr.bf16.mxu0 0
    %3036 = vmatpush1.bf16.msra.mxu0 0
    %3037 = vmatprep.subr.bf16.mxu0 0
    %3038 = vmatpush1.bf16.msra.mxu0 0
    %3039 = vmatprep.subr.bf16.mxu0 0
    %3040 = vmatpush1.bf16.msra.mxu0 0
    %3041 = vmatprep.subr.bf16.mxu0 0
    %3042 = vmatpush1.bf16.msra.mxu0 0
    %3043 = vmatprep.subr.bf16.mxu0 0
    %3044 = vmatpush1.bf16.msra.mxu0 0
    %3045 = vmatprep.subr.bf16.mxu0 0
    %3046 = vmatpush1.bf16.msra.mxu0 0
    %3047 = vmatprep.subr.bf16.mxu0 0
    %3048 = vmatpush1.bf16.msra.mxu0 0
    %3049 = vmatprep.subr.bf16.mxu0 0
    %3050 = vmatpush1.bf16.msra.mxu0 0
    %3051 = vmatprep.subr.bf16.mxu0 0
    %3052 = vmatpush1.bf16.msra.mxu0 0
    %3053 = vmatprep.subr.bf16.mxu0 0
    %3054 = vmatpush1.bf16.msra.mxu0 0
    %3055 = vmatprep.mubr.bf16.mxu0 0
    %3056 = vmatmul.mubr.bf16.gmra.mrb[0].mxu0 %v2883
    %v3057 = vpop.f32.mrb[0].mxu0
    %v3058 = vadd.f32 %v3022, %v3057
    %v3059 = vpop.f32.mrb[0].mxu0
    %v3060 = vpop.f32.mrb[0].mxu0
    %v3061 = vadd.f32 %v3022, %v3060
    %v3062 = vpop.f32.mrb[0].mxu0
    %3063 = vdwg.mxu0
    %3066 = vrot.lane.b32.xlu0 %v3058, 16
    %v3067 = vpop.permute.xlu0 %3066
    %3068 = vrot.lane.b32.xlu0 %v3061, 16
    %v3069 = vpop.permute.xlu0 %3068
    %3074 = vrot.lane.b32.xlu0 %v2781, 20
    %v3075 = vpop.permute.xlu0 %3074
    %3076 = vrot.lane.b32.xlu0 %v2782, 20
    %v3077 = vpop.permute.xlu0 %3076
    %v3080 = vsel %vm170, %v3010, %v3067
    %v3081 = vsel %vm170, %v3011, %v3069
    %vm3082 = vcmask 162816
    %v3083 = vsel %vm3082, %v3080, %v3075
    %v3084 = vsel %vm3082, %v3081, %v3077
    %vm3085 = vcmask 228352
    %v3086 = vsel %vm3085, %v3083, 0.0
    %v3087 = vsel %vm3085, %v3084, 0.0
    %3088 = vst [vmem:[%s3] sm:$0xff] %v3086
    %3089 = vst [vmem:[%s3 + $0x8] sm:$0xff] %v3087
    %3091 = vrot.lane.b32.xlu0 %v842, 32
    %v3092 = vpop.permute.xlu0 %3091
    %vm3094 = vcmask 261126
    %3095 = vst.msk [vmem:[#allocation5 - $0x6] sm:$0xc0] %vm3094, %v3092
    %3096 = vrot.lane.b32.xlu0 %v1520, 32
    %v3097 = vpop.permute.xlu0 %3096
    %s3099 = scalar_lea.vmem [#allocation5], 2
    %3100 = vst.msk [vmem:[%s3099 - $0x6] sm:$0xc0] %vm3094, %v3097
    // Predicated region
    $region18: #{adaptive_path_forward.1} parent=1 // pred_check
      _
    $region19: #{adaptive_path_forward.1} parent=1 // pred_check_branch
      %3102 = sbr.rel (0) target = $region21
    $region20: #{adaptive_path_forward.1} parent=1 // pred_region
      _
    $region21: #{adaptive_path_forward.1} parent=1 // pred_fallthru
      _
    // Predicated region
    $region22: #{adaptive_path_forward.1} parent=1 // pred_check
      _
    $region23: #{adaptive_path_forward.1} parent=1 // pred_check_branch
      %3104 = sbr.rel (0) target = $region25
    $region24: #{adaptive_path_forward.1} parent=1 // pred_region
      %s3106 = ssub.s32 64, 64
      %3107 = vsyncadd [#allocation4], %s3106
      %s3108 = sshll.u32 [#allocation5], 4
      %s3109 = int_to_ptr.vmem [resolvable:$true] %s3108
      %3114 = dma.vmem_to_hbm [thread:$0]  %s3109, 64, %s4, [#allocation4], 32, 32, 2
    $region25: #{adaptive_path_forward.1} parent=1 // pred_fallthru
      _
    // Predicated region
    $region26: #{adaptive_path_forward.1} parent=1 // pred_check
      _
    $region27: #{adaptive_path_forward.1} parent=1 // pred_check_branch
      %3116 = sbr.rel (0) target = $region29
    $region28: #{adaptive_path_forward.1} parent=1 // pred_region
      _
    $region29: #{adaptive_path_forward.1} parent=1 // pred_fallthru
      _
    // Predicated region
    $region30: #{adaptive_path_forward.1} parent=1 // pred_check
      _
    $region31: #{adaptive_path_forward.1} parent=1 // pred_check_branch
      %3118 = sbr.rel (0) target = $region33
    $region32: #{adaptive_path_forward.1} parent=1 // pred_region
      %3119 = dma.done [#allocation4], 64
    $region33: #{adaptive_path_forward.1} parent=1 // pred_fallthru
      _
    %3120 = vsyncpa [#allocation3], 1
    %3121 = vsyncpa [#allocation4], 1

</llo_original>
